<compile_context>
chip_gen: v6e
topology: v6e:2x2x1
jax: 0.10.0
libtpu: 0.0.40
codegen_flags: <defaults>
</compile_context>

<pallas_src>
import jax
import jax.numpy as jnp
from jax.experimental import pallas as pl
from jax.experimental.pallas import tpu as pltpu


# ----------------------------------------------------------------------------
# Fused kernel factory
# ----------------------------------------------------------------------------
def _make_kernel(Hs, Ws, Cin_eff, Cout, K1, has_proj):
    """Fused residual-block kernel body (one batch element per grid step)."""

    def kernel(*refs):
        if has_proj:
            (x_ref, w1_ref, b1_ref, w2_ref, b2_ref, ws_ref, bs_ref, o_ref,
             xp_ref, hp_ref, im1_ref, im2_ref) = refs
        else:
            (x_ref, w1_ref, b1_ref, w2_ref, b2_ref, o_ref,
             xp_ref, hp_ref, im1_ref, im2_ref) = refs

        f32 = jnp.float32
        bf16 = jnp.bfloat16

        # Zero the padded scratches: keeps the 1-pixel halos at zero.  Done
        # every step (cheap) so it is safe under megacore grid splitting.
        xp_ref[...] = jnp.zeros_like(xp_ref)
        hp_ref[...] = jnp.zeros_like(hp_ref)

        # ---- conv1 (+ folded bn1 scale) + bias + ReLU ------------------------
        x = x_ref[0].astype(f32)                       # (Hs, Ws, Cin_eff)
        xp_ref[pl.ds(1, Hs), pl.ds(1, Ws), :] = x      # interior; halo stays 0

        xpv = xp_ref[...]
        t = 0
        for ky in range(K1):                           # build im2col panel
            for kx in range(K1):
                im1_ref[:, :, pl.ds(t * Cin_eff, Cin_eff)] = (
                    xpv[ky:ky + Hs, kx:kx + Ws, :])
                t += 1
        patches1 = im1_ref[...].reshape(Hs * Ws, K1 * K1 * Cin_eff)
        acc1 = jnp.dot(patches1.astype(bf16), w1_ref[...],
                       preferred_element_type=f32)     # one MXU matmul
        h = jnp.maximum(acc1 + b1_ref[...], 0.0)

        # ---- conv2 (+ folded bn2 scale) + bias -------------------------------
        hp_ref[pl.ds(1, Hs), pl.ds(1, Ws), :] = h.reshape(Hs, Ws, Cout)
        hpv = hp_ref[...]
        t = 0
        for ky in range(3):
            for kx in range(3):
                im2_ref[:, :, pl.ds(t * Cout, Cout)] = (
                    hpv[ky:ky + Hs, kx:kx + Ws, :])
                t += 1
        patches2 = im2_ref[...].reshape(Hs * Ws, 9 * Cout)
        acc2 = jnp.dot(patches2.astype(bf16), w2_ref[...],
                       preferred_element_type=f32)
        acc2 = acc2 + b2_ref[...]

        # ---- shortcut --------------------------------------------------------
        x2d = x.reshape(Hs * Ws, Cin_eff)
        if has_proj:
            sc = jnp.dot(x2d.astype(bf16), ws_ref[...],
                         preferred_element_type=f32)
            sc = sc + bs_ref[...]
        else:
            sc = x2d                                    # identity (Cin_eff == Cout)

        out = jnp.maximum(acc2 + sc, 0.0)
        o_ref[0] = out.reshape(Hs, Ws, Cout).astype(o_ref.dtype)

    return kernel


# ----------------------------------------------------------------------------
# BN folding (inference mode):  bn(x) = x * scale + bias
# ----------------------------------------------------------------------------
def _fold_bn(gamma, beta, mean, var, eps=1e-5):
    scale = (gamma / jnp.sqrt(var + eps)).astype(jnp.float32)
    bias = beta.astype(jnp.float32) - mean.astype(jnp.float32) * scale
    return scale, bias.reshape(1, -1)


# ----------------------------------------------------------------------------
# Wrapper: parameter folding + pallas_call
# ----------------------------------------------------------------------------
def residual_block_forward(x_nchw, p, stride=1):
    """Fused Pallas forward of ResidualBlock.  x_nchw: (N, Cin, H, W) float32."""
    N, Cin, H, W = x_nchw.shape
    Cout = p["conv1_w"].shape[0]
    s = int(stride)
    assert H % s == 0 and W % s == 0, "spatial dims must be divisible by stride"
    Hs, Ws = H // s, W // s
    Cin_eff = s * s * Cin
    K1 = 3 if s == 1 else 2        # effective conv1 kernel after stride folding

    # --- input: NCHW -> NHWC (+ space-to-depth when stride > 1), bf16 --------
    xs = x_nchw.reshape(N, Cin, Hs, s, Ws, s)
    xs = jnp.transpose(xs, (0, 2, 4, 3, 5, 1)).reshape(N, Hs, Ws, Cin_eff)
    xs = xs.astype(jnp.bfloat16)

    # --- conv1 weight: fold bn1 scale + fold stride (space-to-depth) ---------
    s1, b1 = _fold_bn(p["bn1_g"], p["bn1_b"], p["bn1_m"], p["bn1_v"])
    w1 = jnp.transpose(p["conv1_w"], (2, 3, 1, 0)).astype(jnp.float32) * s1  # HWIO
    w1_eff = jnp.zeros((K1, K1, Cin_eff, Cout), jnp.float32)
    for dy in range(3):
        ky, a = (dy - 1) // s + 1, (dy - 1) % s
        for dx in range(3):
            kx, b = (dx - 1) // s + 1, (dx - 1) % s
            g = a * s + b
            w1_eff = w1_eff.at[ky, kx, g * Cin:(g + 1) * Cin, :].set(w1[dy, dx])
    w1_flat = w1_eff.reshape(K1 * K1 * Cin_eff, Cout).astype(jnp.bfloat16)

    # --- conv2 weight: fold bn2 scale -----------------------------------------
    s2, b2 = _fold_bn(p["bn2_g"], p["bn2_b"], p["bn2_m"], p["bn2_v"])
    w2 = jnp.transpose(p["conv2_w"], (2, 3, 1, 0)).astype(jnp.float32) * s2
    w2_flat = w2.reshape(9 * Cout, Cout).astype(jnp.bfloat16)

    # --- shortcut (projection only when needed; identity handled in-kernel) --
    has_proj = (s != 1) or (Cin != Cout)
    inputs = [xs, w1_flat, b1, w2_flat, b2]
    in_specs = [
        pl.BlockSpec((1, Hs, Ws, Cin_eff), lambda n: (n, 0, 0, 0)),
        pl.BlockSpec((K1 * K1 * Cin_eff, Cout), lambda n: (0, 0)),
        pl.BlockSpec((1, Cout), lambda n: (0, 0)),
        pl.BlockSpec((9 * Cout, Cout), lambda n: (0, 0)),
        pl.BlockSpec((1, Cout), lambda n: (0, 0)),
    ]
    if has_proj:
        ss, bs = _fold_bn(p["sc_bn_g"], p["sc_bn_b"], p["sc_bn_m"], p["sc_bn_v"])
        ws = jnp.transpose(p["sc_w"][:, :, 0, 0], (1, 0)).astype(jnp.float32) * ss
        ws_eff = jnp.zeros((Cin_eff, Cout), jnp.float32).at[:Cin, :].set(ws)
        inputs += [ws_eff.astype(jnp.bfloat16), bs]
        in_specs += [
            pl.BlockSpec((Cin_eff, Cout), lambda n: (0, 0)),
            pl.BlockSpec((1, Cout), lambda n: (0, 0)),
        ]

    kernel = _make_kernel(Hs, Ws, Cin_eff, Cout, K1, has_proj)
    out = pl.pallas_call(
        kernel,
        out_shape=jax.ShapeDtypeStruct((N, Hs, Ws, Cout), jnp.float32),
        grid=(N,),
        in_specs=in_specs,
        out_specs=pl.BlockSpec((1, Hs, Ws, Cout), lambda n: (n, 0, 0, 0)),
        scratch_shapes=[
            pltpu.VMEM((Hs + K1 - 1, Ws + K1 - 1, Cin_eff), jnp.float32),  # padded x
            pltpu.VMEM((Hs + 2, Ws + 2, Cout), jnp.float32),               # padded conv1 out
            pltpu.VMEM((Hs, Ws, K1 * K1 * Cin_eff), jnp.float32),          # im2col conv1
            pltpu.VMEM((Hs, Ws, 9 * Cout), jnp.float32),                   # im2col conv2
        ],
        compiler_params=pltpu.CompilerParams(dimension_semantics=("parallel",)),
    )(*inputs)

    return jnp.transpose(out, (0, 3, 1, 2))   # NHWC -> NCHW


# ----------------------------------------------------------------------------
# Pure-JAX reference (lax.conv) for correctness check
# ----------------------------------------------------------------------------
def _ref_forward(x, p, stride):
    def bn(y, g, b, m, v, eps=1e-5):
        g, b, m, v = (t[None, :, None, None] for t in (g, b, m, v))
        return g * (y - m) / jnp.sqrt(v + eps) + b

    def conv(y, w, s, pad):
        return jax.lax.conv_general_dilated(
            y, w, window_strides=(s, s), padding=pad,
            dimension_numbers=("NCHW", "OIHW", "NCHW"))

    Cin, Cout = x.shape[1], p["conv1_w"].shape[0]
    out = jax.nn.relu(bn(conv(x, p["conv1_w"], stride, ((1, 1), (1, 1))),
                         p["bn1_g"], p["bn1_b"], p["bn1_m"], p["bn1_v"]))
    out = bn(conv(out, p["conv2_w"], 1, ((1, 1), (1, 1))),
             p["bn2_g"], p["bn2_b"], p["bn2_m"], p["bn2_v"])
    if stride != 1 or Cin != Cout:
        sc = conv(x, p["sc_w"], stride, ((0, 0), (0, 0)))
        sc = bn(sc, p["sc_bn_g"], p["sc_bn_b"], p["sc_bn_m"], p["sc_bn_v"])
    else:
        sc = x
    return jax.nn.relu(out + sc)


def _make_params(key, Cin, Cout, with_proj):
    ks = jax.random.split(key, 16)

    def bn_params(k0, k1, k2, k3, c):
        return (0.5 + jax.random.uniform(k0, (c,), jnp.float32),   # gamma
                0.1 * jax.random.normal(k1, (c,), jnp.float32),    # beta
                0.1 * jax.random.normal(k2, (c,), jnp.float32),    # running mean
                0.5 + jax.random.uniform(k3, (c,), jnp.float32))   # running var

    g1, b1, m1, v1 = bn_params(ks[1], ks[2], ks[3], ks[4], Cout)
    g2, b2, m2, v2 = bn_params(ks[6], ks[7], ks[8], ks[9], Cout)
    p = {
        "conv1_w": 0.1 * jax.random.normal(ks[0], (Cout, Cin, 3, 3), jnp.float32),
        "bn1_g": g1, "bn1_b": b1, "bn1_m": m1, "bn1_v": v1,
        "conv2_w": 0.1 * jax.random.normal(ks[5], (Cout, Cout, 3, 3), jnp.float32),
        "bn2_g": g2, "bn2_b": b2, "bn2_m": m2, "bn2_v": v2,
    }
    if with_proj:
        gs, bs, ms, vs = bn_params(ks[11], ks[12], ks[13], ks[14], Cout)
        p.update({
            "sc_w": 0.1 * jax.random.normal(ks[10], (Cout, Cin, 1, 1), jnp.float32),
            "sc_bn_g": gs, "sc_bn_b": bs, "sc_bn_m": ms, "sc_bn_v": vs,
        })
    return p


if __name__ == "__main__":
    key = jax.random.PRNGKey(0)
    configs = [
        # (Cin, Cout, H, W, stride)
        (8, 16, 16, 16, 1),    # projection shortcut (channel change)
        (8, 16, 16, 16, 2),    # projection shortcut + stride folding (s2d)
        (16, 16, 16, 16, 1),   # identity shortcut
    ]
    for (Cin, Cout, H, W, stride) in configs:
        key, pkey, xkey = jax.random.split(key, 3)
        with_proj = (stride != 1) or (Cin != Cout)
        params = _make_params(pkey, Cin, Cout, with_proj)
        x = jax.random.normal(xkey, (2, Cin, H, W), jnp.float32)

        out = jax.block_until_ready(
            residual_block_forward(x, params, stride=stride))
        ref = jax.block_until_ready(_ref_forward(x, params, stride))

        assert out.shape == ref.shape == (2, Cout, H // stride, W // stride)
        err = float(jnp.max(jnp.abs(out - ref)))
        # bf16 MXU inputs with f32 accumulation -> loosened tolerance.
        assert jnp.allclose(out, ref, atol=5e-2, rtol=5e-2), (
            f"mismatch (Cin={Cin}, Cout={Cout}, stride={stride}): max err {err}")

    print("KERNEL_OK")
</pallas_src>

<mosaic_0001>
module attributes {stable_mosaic.version = 11 : i64} {
  func.func @kernel(%arg0: i32, %arg1: memref<1x16x16x8xbf16, #tpu.memory_space<vmem>>, %arg2: memref<72x16xbf16, #tpu.memory_space<vmem>>, %arg3: memref<1x16xf32, #tpu.memory_space<vmem>>, %arg4: memref<144x16xbf16, #tpu.memory_space<vmem>>, %arg5: memref<1x16xf32, #tpu.memory_space<vmem>>, %arg6: memref<8x16xbf16, #tpu.memory_space<vmem>>, %arg7: memref<1x16xf32, #tpu.memory_space<vmem>>, %arg8: memref<1x16x16x16xf32, #tpu.memory_space<vmem>>, %arg9: memref<18x18x8xf32, #tpu.memory_space<vmem>>, %arg10: memref<18x18x16xf32, #tpu.memory_space<vmem>>, %arg11: memref<16x16x72xf32, #tpu.memory_space<vmem>>, %arg12: memref<16x16x144xf32, #tpu.memory_space<vmem>>) attributes {dimension_semantics = [#tpu.dimension_semantics<parallel>], iteration_bounds = array<i64: 2>, scalar_prefetch = 0 : i64, scratch_operands = 4 : i64, tpu.core_type = #tpu.core_type<tc>, window_params = [{transform_indices = @transform_0, window_bounds = array<i64: 1, 16, 16, 8>}, {pipeline_mode = #tpu.pipeline_mode<synchronous>, transform_indices = @transform_1, window_bounds = array<i64: 72, 16>}, {pipeline_mode = #tpu.pipeline_mode<synchronous>, transform_indices = @transform_2, window_bounds = array<i64: 1, 16>}, {pipeline_mode = #tpu.pipeline_mode<synchronous>, transform_indices = @transform_3, window_bounds = array<i64: 144, 16>}, {pipeline_mode = #tpu.pipeline_mode<synchronous>, transform_indices = @transform_4, window_bounds = array<i64: 1, 16>}, {pipeline_mode = #tpu.pipeline_mode<synchronous>, transform_indices = @transform_5, window_bounds = array<i64: 8, 16>}, {pipeline_mode = #tpu.pipeline_mode<synchronous>, transform_indices = @transform_6, window_bounds = array<i64: 1, 16>}, {transform_indices = @transform_7, window_bounds = array<i64: 1, 16, 16, 16>}]} {
    %cst = arith.constant 0.000000e+00 : f32
    %0 = vector.broadcast %cst : f32 to vector<18x18x8xf32>
    %c0 = arith.constant 0 : index
    %c0_0 = arith.constant 0 : index
    %c0_1 = arith.constant 0 : index
    %1 = vector.load %arg9[%c0, %c0_0, %c0_1] : memref<18x18x8xf32, #tpu.memory_space<vmem>>, vector<18x18x8xf32>
    tpu.vector_store %arg9[%c0, %c0_0, %c0_1], %0 {strides = array<i32>} : memref<18x18x8xf32, #tpu.memory_space<vmem>>, vector<18x18x8xf32>,
    %cst_2 = arith.constant 0.000000e+00 : f32
    %2 = vector.broadcast %cst_2 : f32 to vector<18x18x16xf32>
    %c0_3 = arith.constant 0 : index
    %c0_4 = arith.constant 0 : index
    %c0_5 = arith.constant 0 : index
    %3 = vector.load %arg10[%c0_3, %c0_4, %c0_5] : memref<18x18x16xf32, #tpu.memory_space<vmem>>, vector<18x18x16xf32>
    tpu.vector_store %arg10[%c0_3, %c0_4, %c0_5], %2 {strides = array<i32>} : memref<18x18x16xf32, #tpu.memory_space<vmem>>, vector<18x18x16xf32>,
    %c0_6 = arith.constant 0 : index
    %c0_7 = arith.constant 0 : index
    %c0_8 = arith.constant 0 : index
    %c0_9 = arith.constant 0 : index
    %4 = vector.load %arg1[%c0_6, %c0_7, %c0_8, %c0_9] : memref<1x16x16x8xbf16, #tpu.memory_space<vmem>>, vector<1x16x16x8xbf16>
    %5 = vector.shape_cast %4 : vector<1x16x16x8xbf16> to vector<16x16x8xbf16>
    %6 = arith.extf %5 : vector<16x16x8xbf16> to vector<16x16x8xf32>
    %c1 = arith.constant 1 : index
    %c1_10 = arith.constant 1 : index
    %c0_11 = arith.constant 0 : index
    %7 = vector.load %arg9[%c1, %c1_10, %c0_11] : memref<18x18x8xf32, #tpu.memory_space<vmem>>, vector<16x16x8xf32>
    tpu.vector_store %arg9[%c1, %c1_10, %c0_11], %6 {strides = array<i32>} : memref<18x18x8xf32, #tpu.memory_space<vmem>>, vector<16x16x8xf32>,
    %c0_12 = arith.constant 0 : index
    %c0_13 = arith.constant 0 : index
    %c0_14 = arith.constant 0 : index
    %8 = vector.load %arg9[%c0_12, %c0_13, %c0_14] : memref<18x18x8xf32, #tpu.memory_space<vmem>>, vector<18x18x8xf32>
    %9 = vector.extract_strided_slice %8 {offsets = [0, 0, 0], sizes = [16, 16, 8], strides = [1, 1, 1]} : vector<18x18x8xf32> to vector<16x16x8xf32>
    %c0_15 = arith.constant 0 : index
    %c0_16 = arith.constant 0 : index
    %c0_17 = arith.constant 0 : index
    %10 = vector.load %arg11[%c0_15, %c0_16, %c0_17] : memref<16x16x72xf32, #tpu.memory_space<vmem>>, vector<16x16x8xf32>
    tpu.vector_store %arg11[%c0_15, %c0_16, %c0_17], %9 {strides = array<i32>} : memref<16x16x72xf32, #tpu.memory_space<vmem>>, vector<16x16x8xf32>,
    %11 = vector.extract_strided_slice %8 {offsets = [0, 1, 0], sizes = [16, 16, 8], strides = [1, 1, 1]} : vector<18x18x8xf32> to vector<16x16x8xf32>
    %c0_18 = arith.constant 0 : index
    %c0_19 = arith.constant 0 : index
    %c8 = arith.constant 8 : index
    %12 = vector.load %arg11[%c0_18, %c0_19, %c8] : memref<16x16x72xf32, #tpu.memory_space<vmem>>, vector<16x16x8xf32>
    tpu.vector_store %arg11[%c0_18, %c0_19, %c8], %11 {strides = array<i32>} : memref<16x16x72xf32, #tpu.memory_space<vmem>>, vector<16x16x8xf32>,
    %13 = vector.extract_strided_slice %8 {offsets = [0, 2, 0], sizes = [16, 16, 8], strides = [1, 1, 1]} : vector<18x18x8xf32> to vector<16x16x8xf32>
    %c0_20 = arith.constant 0 : index
    %c0_21 = arith.constant 0 : index
    %c16 = arith.constant 16 : index
    %14 = vector.load %arg11[%c0_20, %c0_21, %c16] : memref<16x16x72xf32, #tpu.memory_space<vmem>>, vector<16x16x8xf32>
    tpu.vector_store %arg11[%c0_20, %c0_21, %c16], %13 {strides = array<i32>} : memref<16x16x72xf32, #tpu.memory_space<vmem>>, vector<16x16x8xf32>,
    %15 = vector.extract_strided_slice %8 {offsets = [1, 0, 0], sizes = [16, 16, 8], strides = [1, 1, 1]} : vector<18x18x8xf32> to vector<16x16x8xf32>
    %c0_22 = arith.constant 0 : index
    %c0_23 = arith.constant 0 : index
    %c24 = arith.constant 24 : index
    %16 = vector.load %arg11[%c0_22, %c0_23, %c24] : memref<16x16x72xf32, #tpu.memory_space<vmem>>, vector<16x16x8xf32>
    tpu.vector_store %arg11[%c0_22, %c0_23, %c24], %15 {strides = array<i32>} : memref<16x16x72xf32, #tpu.memory_space<vmem>>, vector<16x16x8xf32>,
    %17 = vector.extract_strided_slice %8 {offsets = [1, 1, 0], sizes = [16, 16, 8], strides = [1, 1, 1]} : vector<18x18x8xf32> to vector<16x16x8xf32>
    %c0_24 = arith.constant 0 : index
    %c0_25 = arith.constant 0 : index
    %c32 = arith.constant 32 : index
    %18 = vector.load %arg11[%c0_24, %c0_25, %c32] : memref<16x16x72xf32, #tpu.memory_space<vmem>>, vector<16x16x8xf32>
    tpu.vector_store %arg11[%c0_24, %c0_25, %c32], %17 {strides = array<i32>} : memref<16x16x72xf32, #tpu.memory_space<vmem>>, vector<16x16x8xf32>,
    %19 = vector.extract_strided_slice %8 {offsets = [1, 2, 0], sizes = [16, 16, 8], strides = [1, 1, 1]} : vector<18x18x8xf32> to vector<16x16x8xf32>
    %c0_26 = arith.constant 0 : index
    %c0_27 = arith.constant 0 : index
    %c40 = arith.constant 40 : index
    %20 = vector.load %arg11[%c0_26, %c0_27, %c40] : memref<16x16x72xf32, #tpu.memory_space<vmem>>, vector<16x16x8xf32>
    tpu.vector_store %arg11[%c0_26, %c0_27, %c40], %19 {strides = array<i32>} : memref<16x16x72xf32, #tpu.memory_space<vmem>>, vector<16x16x8xf32>,
    %21 = vector.extract_strided_slice %8 {offsets = [2, 0, 0], sizes = [16, 16, 8], strides = [1, 1, 1]} : vector<18x18x8xf32> to vector<16x16x8xf32>
    %c0_28 = arith.constant 0 : index
    %c0_29 = arith.constant 0 : index
    %c48 = arith.constant 48 : index
    %22 = vector.load %arg11[%c0_28, %c0_29, %c48] : memref<16x16x72xf32, #tpu.memory_space<vmem>>, vector<16x16x8xf32>
    tpu.vector_store %arg11[%c0_28, %c0_29, %c48], %21 {strides = array<i32>} : memref<16x16x72xf32, #tpu.memory_space<vmem>>, vector<16x16x8xf32>,
    %23 = vector.extract_strided_slice %8 {offsets = [2, 1, 0], sizes = [16, 16, 8], strides = [1, 1, 1]} : vector<18x18x8xf32> to vector<16x16x8xf32>
    %c0_30 = arith.constant 0 : index
    %c0_31 = arith.constant 0 : index
    %c56 = arith.constant 56 : index
    %24 = vector.load %arg11[%c0_30, %c0_31, %c56] : memref<16x16x72xf32, #tpu.memory_space<vmem>>, vector<16x16x8xf32>
    tpu.vector_store %arg11[%c0_30, %c0_31, %c56], %23 {strides = array<i32>} : memref<16x16x72xf32, #tpu.memory_space<vmem>>, vector<16x16x8xf32>,
    %25 = vector.extract_strided_slice %8 {offsets = [2, 2, 0], sizes = [16, 16, 8], strides = [1, 1, 1]} : vector<18x18x8xf32> to vector<16x16x8xf32>
    %c0_32 = arith.constant 0 : index
    %c0_33 = arith.constant 0 : index
    %c64 = arith.constant 64 : index
    %26 = vector.load %arg11[%c0_32, %c0_33, %c64] : memref<16x16x72xf32, #tpu.memory_space<vmem>>, vector<16x16x8xf32>
    tpu.vector_store %arg11[%c0_32, %c0_33, %c64], %25 {strides = array<i32>} : memref<16x16x72xf32, #tpu.memory_space<vmem>>, vector<16x16x8xf32>,
    %c0_34 = arith.constant 0 : index
    %c0_35 = arith.constant 0 : index
    %c0_36 = arith.constant 0 : index
    %27 = vector.load %arg11[%c0_34, %c0_35, %c0_36] : memref<16x16x72xf32, #tpu.memory_space<vmem>>, vector<16x16x72xf32>
    %28 = vector.shape_cast %27 : vector<16x16x72xf32> to vector<256x72xf32>
    %29 = arith.truncf %28 : vector<256x72xf32> to vector<256x72xbf16>
    %c0_37 = arith.constant 0 : index
    %c0_38 = arith.constant 0 : index
    %30 = vector.load %arg2[%c0_37, %c0_38] : memref<72x16xbf16, #tpu.memory_space<vmem>>, vector<72x16xbf16>
    %cst_39 = arith.constant dense<0.000000e+00> : vector<256x16xf32>
    %31 = tpu.matmul %29, %30, %cst_39 {dimension_numbers = #tpu.dot_dimension_numbers<[1], [0], [0], [1], [0, 0, 1, 1], [], []>} : vector<256x72xbf16>, vector<72x16xbf16>, vector<256x16xf32> -> vector<256x16xf32>
    %c0_40 = arith.constant 0 : index
    %c0_41 = arith.constant 0 : index
    %32 = vector.load %arg3[%c0_40, %c0_41] : memref<1x16xf32, #tpu.memory_space<vmem>>, vector<1x16xf32>
    %33 = vector.broadcast %32 : vector<1x16xf32> to vector<256x16xf32>
    %34 = arith.addf %31, %33 : vector<256x16xf32>
    %cst_42 = arith.constant 0.000000e+00 : f32
    %35 = vector.broadcast %cst_42 : f32 to vector<256x16xf32>
    %36 = arith.maximumf %34, %35 : vector<256x16xf32>
    %37 = vector.shape_cast %36 : vector<256x16xf32> to vector<16x16x16xf32>
    %c1_43 = arith.constant 1 : index
    %c1_44 = arith.constant 1 : index
    %c0_45 = arith.constant 0 : index
    %38 = vector.load %arg10[%c1_43, %c1_44, %c0_45] : memref<18x18x16xf32, #tpu.memory_space<vmem>>, vector<16x16x16xf32>
    tpu.vector_store %arg10[%c1_43, %c1_44, %c0_45], %37 {strides = array<i32>} : memref<18x18x16xf32, #tpu.memory_space<vmem>>, vector<16x16x16xf32>,
    %c0_46 = arith.constant 0 : index
    %c0_47 = arith.constant 0 : index
    %c0_48 = arith.constant 0 : index
    %39 = vector.load %arg10[%c0_46, %c0_47, %c0_48] : memref<18x18x16xf32, #tpu.memory_space<vmem>>, vector<18x18x16xf32>
    %40 = vector.extract_strided_slice %39 {offsets = [0, 0, 0], sizes = [16, 16, 16], strides = [1, 1, 1]} : vector<18x18x16xf32> to vector<16x16x16xf32>
    %c0_49 = arith.constant 0 : index
    %c0_50 = arith.constant 0 : index
    %c0_51 = arith.constant 0 : index
    %41 = vector.load %arg12[%c0_49, %c0_50, %c0_51] : memref<16x16x144xf32, #tpu.memory_space<vmem>>, vector<16x16x16xf32>
    tpu.vector_store %arg12[%c0_49, %c0_50, %c0_51], %40 {strides = array<i32>} : memref<16x16x144xf32, #tpu.memory_space<vmem>>, vector<16x16x16xf32>,
    %42 = vector.extract_strided_slice %39 {offsets = [0, 1, 0], sizes = [16, 16, 16], strides = [1, 1, 1]} : vector<18x18x16xf32> to vector<16x16x16xf32>
    %c0_52 = arith.constant 0 : index
    %c0_53 = arith.constant 0 : index
    %c16_54 = arith.constant 16 : index
    %43 = vector.load %arg12[%c0_52, %c0_53, %c16_54] : memref<16x16x144xf32, #tpu.memory_space<vmem>>, vector<16x16x16xf32>
    tpu.vector_store %arg12[%c0_52, %c0_53, %c16_54], %42 {strides = array<i32>} : memref<16x16x144xf32, #tpu.memory_space<vmem>>, vector<16x16x16xf32>,
    %44 = vector.extract_strided_slice %39 {offsets = [0, 2, 0], sizes = [16, 16, 16], strides = [1, 1, 1]} : vector<18x18x16xf32> to vector<16x16x16xf32>
    %c0_55 = arith.constant 0 : index
    %c0_56 = arith.constant 0 : index
    %c32_57 = arith.constant 32 : index
    %45 = vector.load %arg12[%c0_55, %c0_56, %c32_57] : memref<16x16x144xf32, #tpu.memory_space<vmem>>, vector<16x16x16xf32>
    tpu.vector_store %arg12[%c0_55, %c0_56, %c32_57], %44 {strides = array<i32>} : memref<16x16x144xf32, #tpu.memory_space<vmem>>, vector<16x16x16xf32>,
    %46 = vector.extract_strided_slice %39 {offsets = [1, 0, 0], sizes = [16, 16, 16], strides = [1, 1, 1]} : vector<18x18x16xf32> to vector<16x16x16xf32>
    %c0_58 = arith.constant 0 : index
    %c0_59 = arith.constant 0 : index
    %c48_60 = arith.constant 48 : index
    %47 = vector.load %arg12[%c0_58, %c0_59, %c48_60] : memref<16x16x144xf32, #tpu.memory_space<vmem>>, vector<16x16x16xf32>
    tpu.vector_store %arg12[%c0_58, %c0_59, %c48_60], %46 {strides = array<i32>} : memref<16x16x144xf32, #tpu.memory_space<vmem>>, vector<16x16x16xf32>,
    %48 = vector.extract_strided_slice %39 {offsets = [1, 1, 0], sizes = [16, 16, 16], strides = [1, 1, 1]} : vector<18x18x16xf32> to vector<16x16x16xf32>
    %c0_61 = arith.constant 0 : index
    %c0_62 = arith.constant 0 : index
    %c64_63 = arith.constant 64 : index
    %49 = vector.load %arg12[%c0_61, %c0_62, %c64_63] : memref<16x16x144xf32, #tpu.memory_space<vmem>>, vector<16x16x16xf32>
    tpu.vector_store %arg12[%c0_61, %c0_62, %c64_63], %48 {strides = array<i32>} : memref<16x16x144xf32, #tpu.memory_space<vmem>>, vector<16x16x16xf32>,
    %50 = vector.extract_strided_slice %39 {offsets = [1, 2, 0], sizes = [16, 16, 16], strides = [1, 1, 1]} : vector<18x18x16xf32> to vector<16x16x16xf32>
    %c0_64 = arith.constant 0 : index
    %c0_65 = arith.constant 0 : index
    %c80 = arith.constant 80 : index
    %51 = vector.load %arg12[%c0_64, %c0_65, %c80] : memref<16x16x144xf32, #tpu.memory_space<vmem>>, vector<16x16x16xf32>
    tpu.vector_store %arg12[%c0_64, %c0_65, %c80], %50 {strides = array<i32>} : memref<16x16x144xf32, #tpu.memory_space<vmem>>, vector<16x16x16xf32>,
    %52 = vector.extract_strided_slice %39 {offsets = [2, 0, 0], sizes = [16, 16, 16], strides = [1, 1, 1]} : vector<18x18x16xf32> to vector<16x16x16xf32>
    %c0_66 = arith.constant 0 : index
    %c0_67 = arith.constant 0 : index
    %c96 = arith.constant 96 : index
    %53 = vector.load %arg12[%c0_66, %c0_67, %c96] : memref<16x16x144xf32, #tpu.memory_space<vmem>>, vector<16x16x16xf32>
    tpu.vector_store %arg12[%c0_66, %c0_67, %c96], %52 {strides = array<i32>} : memref<16x16x144xf32, #tpu.memory_space<vmem>>, vector<16x16x16xf32>,
    %54 = vector.extract_strided_slice %39 {offsets = [2, 1, 0], sizes = [16, 16, 16], strides = [1, 1, 1]} : vector<18x18x16xf32> to vector<16x16x16xf32>
    %c0_68 = arith.constant 0 : index
    %c0_69 = arith.constant 0 : index
    %c112 = arith.constant 112 : index
    %55 = vector.load %arg12[%c0_68, %c0_69, %c112] : memref<16x16x144xf32, #tpu.memory_space<vmem>>, vector<16x16x16xf32>
    tpu.vector_store %arg12[%c0_68, %c0_69, %c112], %54 {strides = array<i32>} : memref<16x16x144xf32, #tpu.memory_space<vmem>>, vector<16x16x16xf32>,
    %56 = vector.extract_strided_slice %39 {offsets = [2, 2, 0], sizes = [16, 16, 16], strides = [1, 1, 1]} : vector<18x18x16xf32> to vector<16x16x16xf32>
    %c0_70 = arith.constant 0 : index
    %c0_71 = arith.constant 0 : index
    %c128 = arith.constant 128 : index
    %57 = vector.load %arg12[%c0_70, %c0_71, %c128] : memref<16x16x144xf32, #tpu.memory_space<vmem>>, vector<16x16x16xf32>
    tpu.vector_store %arg12[%c0_70, %c0_71, %c128], %56 {strides = array<i32>} : memref<16x16x144xf32, #tpu.memory_space<vmem>>, vector<16x16x16xf32>,
    %c0_72 = arith.constant 0 : index
    %c0_73 = arith.constant 0 : index
    %c0_74 = arith.constant 0 : index
    %58 = vector.load %arg12[%c0_72, %c0_73, %c0_74] : memref<16x16x144xf32, #tpu.memory_space<vmem>>, vector<16x16x144xf32>
    %59 = vector.shape_cast %58 : vector<16x16x144xf32> to vector<256x144xf32>
    %60 = arith.truncf %59 : vector<256x144xf32> to vector<256x144xbf16>
    %c0_75 = arith.constant 0 : index
    %c0_76 = arith.constant 0 : index
    %61 = vector.load %arg4[%c0_75, %c0_76] : memref<144x16xbf16, #tpu.memory_space<vmem>>, vector<144x16xbf16>
    %cst_77 = arith.constant dense<0.000000e+00> : vector<256x16xf32>
    %62 = tpu.matmul %60, %61, %cst_77 {dimension_numbers = #tpu.dot_dimension_numbers<[1], [0], [0], [1], [0, 0, 1, 1], [], []>} : vector<256x144xbf16>, vector<144x16xbf16>, vector<256x16xf32> -> vector<256x16xf32>
    %c0_78 = arith.constant 0 : index
    %c0_79 = arith.constant 0 : index
    %63 = vector.load %arg5[%c0_78, %c0_79] : memref<1x16xf32, #tpu.memory_space<vmem>>, vector<1x16xf32>
    %64 = vector.broadcast %63 : vector<1x16xf32> to vector<256x16xf32>
    %65 = arith.addf %62, %64 : vector<256x16xf32>
    %66 = vector.shape_cast %6 : vector<16x16x8xf32> to vector<256x8xf32>
    %67 = arith.truncf %66 : vector<256x8xf32> to vector<256x8xbf16>
    %c0_80 = arith.constant 0 : index
    %c0_81 = arith.constant 0 : index
    %68 = vector.load %arg6[%c0_80, %c0_81] : memref<8x16xbf16, #tpu.memory_space<vmem>>, vector<8x16xbf16>
    %cst_82 = arith.constant dense<0.000000e+00> : vector<256x16xf32>
    %69 = tpu.matmul %67, %68, %cst_82 {dimension_numbers = #tpu.dot_dimension_numbers<[1], [0], [0], [1], [0, 0, 1, 1], [], []>} : vector<256x8xbf16>, vector<8x16xbf16>, vector<256x16xf32> -> vector<256x16xf32>
    %c0_83 = arith.constant 0 : index
    %c0_84 = arith.constant 0 : index
    %70 = vector.load %arg7[%c0_83, %c0_84] : memref<1x16xf32, #tpu.memory_space<vmem>>, vector<1x16xf32>
    %71 = vector.broadcast %70 : vector<1x16xf32> to vector<256x16xf32>
    %72 = arith.addf %69, %71 : vector<256x16xf32>
    %73 = arith.addf %65, %72 : vector<256x16xf32>
    %cst_85 = arith.constant 0.000000e+00 : f32
    %74 = vector.broadcast %cst_85 : f32 to vector<256x16xf32>
    %75 = arith.maximumf %73, %74 : vector<256x16xf32>
    %76 = vector.shape_cast %75 : vector<256x16xf32> to vector<16x16x16xf32>
    %c0_86 = arith.constant 0 : index
    %c0_87 = arith.constant 0 : index
    %c0_88 = arith.constant 0 : index
    %c0_89 = arith.constant 0 : index
    %77 = vector.load %arg8[%c0_86, %c0_87, %c0_88, %c0_89] : memref<1x16x16x16xf32, #tpu.memory_space<vmem>>, vector<1x16x16x16xf32>
    %78 = vector.shape_cast %77 : vector<1x16x16x16xf32> to vector<16x16x16xf32>
    %79 = vector.shape_cast %76 : vector<16x16x16xf32> to vector<1x16x16x16xf32>
    tpu.vector_store %arg8[%c0_86, %c0_87, %c0_88, %c0_89], %79 {strides = array<i32>} : memref<1x16x16x16xf32, #tpu.memory_space<vmem>>, vector<1x16x16x16xf32>,
    return
  }
  func.func @transform_0(%arg0: i32) -> (i32, i32, i32, i32) {
    %c0_i32 = arith.constant 0 : i32
    %c0_i32_0 = arith.constant 0 : i32
    %c0_i32_1 = arith.constant 0 : i32
    %c0_i32_2 = arith.constant 0 : i32
    return %arg0, %c0_i32, %c0_i32_0, %c0_i32_1 : i32, i32, i32, i32
  }
  func.func @transform_1(%arg0: i32) -> (i32, i32) {
    %c0_i32 = arith.constant 0 : i32
    %c0_i32_0 = arith.constant 0 : i32
    %c0_i32_1 = arith.constant 0 : i32
    return %c0_i32, %c0_i32_0 : i32, i32
  }
  func.func @transform_2(%arg0: i32) -> (i32, i32) {
    %c0_i32 = arith.constant 0 : i32
    %c0_i32_0 = arith.constant 0 : i32
    %c0_i32_1 = arith.constant 0 : i32
    return %c0_i32, %c0_i32_0 : i32, i32
  }
  func.func @transform_3(%arg0: i32) -> (i32, i32) {
    %c0_i32 = arith.constant 0 : i32
    %c0_i32_0 = arith.constant 0 : i32
    %c0_i32_1 = arith.constant 0 : i32
    return %c0_i32, %c0_i32_0 : i32, i32
  }
  func.func @transform_4(%arg0: i32) -> (i32, i32) {
    %c0_i32 = arith.constant 0 : i32
    %c0_i32_0 = arith.constant 0 : i32
    %c0_i32_1 = arith.constant 0 : i32
    return %c0_i32, %c0_i32_0 : i32, i32
  }
  func.func @transform_5(%arg0: i32) -> (i32, i32) {
    %c0_i32 = arith.constant 0 : i32
    %c0_i32_0 = arith.constant 0 : i32
    %c0_i32_1 = arith.constant 0 : i32
    return %c0_i32, %c0_i32_0 : i32, i32
  }
  func.func @transform_6(%arg0: i32) -> (i32, i32) {
    %c0_i32 = arith.constant 0 : i32
    %c0_i32_0 = arith.constant 0 : i32
    %c0_i32_1 = arith.constant 0 : i32
    return %c0_i32, %c0_i32_0 : i32, i32
  }
  func.func @transform_7(%arg0: i32) -> (i32, i32, i32, i32) {
    %c0_i32 = arith.constant 0 : i32
    %c0_i32_0 = arith.constant 0 : i32
    %c0_i32_1 = arith.constant 0 : i32
    %c0_i32_2 = arith.constant 0 : i32
    return %arg0, %c0_i32, %c0_i32_0, %c0_i32_1 : i32, i32, i32, i32
  }
}

</mosaic_0001>

<llo_original>
// kernel: tpu_custom_call.1
$region0: #{tpu_custom_call.1}
  #allocation0 [shape = 'u32[]', space=smem, size = 0x4, offset = 0x4, fixed_abs, tag = 'smem constant byte address 0x4 - core index']
  #allocation1 [shape = 'u32[144,128]{1,0:T(1,128)}', space=vmem, size = 0x12000, scoped, tag = 'internal scratch']
  #allocation2 [shape = 'f32[18,18,8]{2,1,0:T(8,128)}', space=vmem, size = 0x36000, scoped, tag = 'scratch operand']
  #allocation3 [shape = 'f32[18,18,16]{2,1,0:T(8,128)}', space=vmem, size = 0x36000, scoped, tag = 'scratch operand']
  #allocation4 [shape = 'f32[16,16,72]{2,1,0:T(8,128)}', space=vmem, size = 0x20000, scoped, tag = 'scratch operand']
  #allocation5 [shape = 'f32[16,16,144]{2,1,0:T(8,128)}', space=vmem, size = 0x40000, scoped, tag = 'scratch operand']
  %s0 = inlined_call_operand.vmem [shape: bf16[2,16,16,8], index: 0, kind: input, shape index: {}]
  %s1 = inlined_call_operand.vmem [shape: bf16[72,16], index: 1, kind: input, shape index: {}]
  %s2 = inlined_call_operand.vmem [shape: f32[1,16], index: 2, kind: input, shape index: {}]
  %s3 = inlined_call_operand.vmem [shape: bf16[144,16], index: 3, kind: input, shape index: {}]
  %s4 = inlined_call_operand.vmem [shape: f32[1,16], index: 4, kind: input, shape index: {}]
  %s5 = inlined_call_operand.vmem [shape: bf16[8,16], index: 5, kind: input, shape index: {}]
  %s6 = inlined_call_operand.vmem [shape: f32[1,16], index: 6, kind: input, shape index: {}]
  %s7 = inlined_call_operand.hbm [shape: f32[2,16,16,16], index: 7, kind: output, shape index: {}]
  %s8 = sld [smem:[#allocation0]]
  $region61: #{tpu_custom_call.1} parent=0
    _
  %s10 = ssub.s32 1, %s8
  %s11 = scalar_select 0, %s10, %s8
  $region1: #{tpu_custom_call.1} parent=0
    #allocation6 [shape = 'u8[262144]{0}', space=vmem, size = 0x40000, scoped, tag = 'output window, operand 0']
    #allocation7 [shape = 's32[2]{0}', space=sflag, size = 0x8, scoped, tag = 'scoped memory for tpu_custom_call.1']
    %12 = vsyncpa [#allocation7], 0
    %s13 = scalar_lea.sflag [#allocation7], 1
    %14 = vsyncpa %s13, 0
    loop: start=0, step=1, limit=4
    $region2: #{tpu_custom_call.1} parent=1 // loop_pre_header
      _
    $region3: #{tpu_custom_call.1} parent=1 // loop_header
      %s16 = sphi 0, %s20
      %p17 = scmp.ge.s32.totalorder %s16, 4
      %s26 = sphi 0, %s28
      %s29 = sphi 0, %s26
      %s30 = sphi 0, %s29
      %s46 = sphi 0, %s30
      %s50 = sphi 0, %s50
      %s52 = sphi 0, %s50
      %s53 = sphi 0, %s52
      %s67 = sphi 0, %s53
      %s71 = sphi 0, %s71
      %s73 = sphi 0, %s71
      %s74 = sphi 0, %s73
      %s88 = sphi 0, %s74
      %s92 = sphi 0, %s92
      %s94 = sphi 0, %s92
      %s95 = sphi 0, %s94
      %s109 = sphi 0, %s95
      %s113 = sphi 0, %s113
      %s115 = sphi 0, %s113
      %s116 = sphi 0, %s115
      %s130 = sphi 0, %s116
      %s134 = sphi 0, %s134
      %s136 = sphi 0, %s134
      %s137 = sphi 0, %s136
      %s151 = sphi 0, %s137
      %s155 = sphi 0, %s155
      %s157 = sphi 0, %s155
      %s158 = sphi 0, %s157
      %s172 = sphi 0, %s158
      %s178 = sphi 0, %s180
      %s181 = sphi 0, %s178
      %s182 = sphi 0, %s181
      %s198 = sphi 0, %s182
    $region4: #{tpu_custom_call.1} parent=1 // loop_header_branch
      %19 = sbr.rel (%p17) target = $region8
    $region5: #{tpu_custom_call.1} parent=1 // loop_body
      %s21 = ssub.s32 %s16, 1
      %s22 = ssub.s32 %s16, 2
      %s23 = sadd.s32 %s16, 1
      %s24 = ssub.s32 %s16, %s23
      %p25 = scmp.eq.s32.totalorder %s24, 0
      %s27 = sadd.s32 %s26, 1
      %s28 = scalar_select %p25, %s26, %s27
      %p31 = pneg %p25
      %p32 = scmp.eq.s32.totalorder %s16, 1
      %p33 = por %p31, %p32
      %p34 = scmp.ne.s32.totalorder %s26, %s29
      %p35 = scmp.eq.s32.totalorder %s16, 0
      %p36 = por %p34, %p35
      %p37 = scmp.ne.s32.totalorder %s26, %s29
      %p38 = scmp.eq.s32.totalorder %s21, 1
      %p39 = por %p37, %p38
      %p40 = scmp.ne.s32.totalorder %s29, %s30
      %p41 = scmp.eq.s32.totalorder %s21, 0
      %p42 = por %p40, %p41
      %p43 = scmp.ne.s32.totalorder %s29, %s30
      %p44 = scmp.eq.s32.totalorder %s22, 1
      %p45 = por %p43, %p44
      %p47 = scmp.ne.s32.totalorder %s30, %s46
      %p48 = scmp.eq.s32.totalorder %s22, 0
      %p49 = por %p47, %p48
      %s51 = sadd.s32 %s50, 1
      %p54 = scmp.eq.s32.totalorder %s16, 1
      %p55 = scmp.ne.s32.totalorder %s50, %s52
      %p56 = scmp.eq.s32.totalorder %s16, 0
      %p57 = por %p55, %p56
      %p58 = scmp.ne.s32.totalorder %s50, %s52
      %p59 = scmp.eq.s32.totalorder %s21, 1
      %p60 = por %p58, %p59
      %p61 = scmp.ne.s32.totalorder %s52, %s53
      %p62 = scmp.eq.s32.totalorder %s21, 0
      %p63 = por %p61, %p62
      %p64 = scmp.ne.s32.totalorder %s52, %s53
      %p65 = scmp.eq.s32.totalorder %s22, 1
      %p66 = por %p64, %p65
      %p68 = scmp.ne.s32.totalorder %s53, %s67
      %p69 = scmp.eq.s32.totalorder %s22, 0
      %p70 = por %p68, %p69
      %s72 = sadd.s32 %s71, 1
      %p75 = scmp.eq.s32.totalorder %s16, 1
      %p76 = scmp.ne.s32.totalorder %s71, %s73
      %p77 = scmp.eq.s32.totalorder %s16, 0
      %p78 = por %p76, %p77
      %p79 = scmp.ne.s32.totalorder %s71, %s73
      %p80 = scmp.eq.s32.totalorder %s21, 1
      %p81 = por %p79, %p80
      %p82 = scmp.ne.s32.totalorder %s73, %s74
      %p83 = scmp.eq.s32.totalorder %s21, 0
      %p84 = por %p82, %p83
      %p85 = scmp.ne.s32.totalorder %s73, %s74
      %p86 = scmp.eq.s32.totalorder %s22, 1
      %p87 = por %p85, %p86
      %p89 = scmp.ne.s32.totalorder %s74, %s88
      %p90 = scmp.eq.s32.totalorder %s22, 0
      %p91 = por %p89, %p90
      %s93 = sadd.s32 %s92, 1
      %p96 = scmp.eq.s32.totalorder %s16, 1
      %p97 = scmp.ne.s32.totalorder %s92, %s94
      %p98 = scmp.eq.s32.totalorder %s16, 0
      %p99 = por %p97, %p98
      %p100 = scmp.ne.s32.totalorder %s92, %s94
      %p101 = scmp.eq.s32.totalorder %s21, 1
      %p102 = por %p100, %p101
      %p103 = scmp.ne.s32.totalorder %s94, %s95
      %p104 = scmp.eq.s32.totalorder %s21, 0
      %p105 = por %p103, %p104
      %p106 = scmp.ne.s32.totalorder %s94, %s95
      %p107 = scmp.eq.s32.totalorder %s22, 1
      %p108 = por %p106, %p107
      %p110 = scmp.ne.s32.totalorder %s95, %s109
      %p111 = scmp.eq.s32.totalorder %s22, 0
      %p112 = por %p110, %p111
      %s114 = sadd.s32 %s113, 1
      %p117 = scmp.eq.s32.totalorder %s16, 1
      %p118 = scmp.ne.s32.totalorder %s113, %s115
      %p119 = scmp.eq.s32.totalorder %s16, 0
      %p120 = por %p118, %p119
      %p121 = scmp.ne.s32.totalorder %s113, %s115
      %p122 = scmp.eq.s32.totalorder %s21, 1
      %p123 = por %p121, %p122
      %p124 = scmp.ne.s32.totalorder %s115, %s116
      %p125 = scmp.eq.s32.totalorder %s21, 0
      %p126 = por %p124, %p125
      %p127 = scmp.ne.s32.totalorder %s115, %s116
      %p128 = scmp.eq.s32.totalorder %s22, 1
      %p129 = por %p127, %p128
      %p131 = scmp.ne.s32.totalorder %s116, %s130
      %p132 = scmp.eq.s32.totalorder %s22, 0
      %p133 = por %p131, %p132
      %s135 = sadd.s32 %s134, 1
      %p138 = scmp.eq.s32.totalorder %s16, 1
      %p139 = scmp.ne.s32.totalorder %s134, %s136
      %p140 = scmp.eq.s32.totalorder %s16, 0
      %p141 = por %p139, %p140
      %p142 = scmp.ne.s32.totalorder %s134, %s136
      %p143 = scmp.eq.s32.totalorder %s21, 1
      %p144 = por %p142, %p143
      %p145 = scmp.ne.s32.totalorder %s136, %s137
      %p146 = scmp.eq.s32.totalorder %s21, 0
      %p147 = por %p145, %p146
      %p148 = scmp.ne.s32.totalorder %s136, %s137
      %p149 = scmp.eq.s32.totalorder %s22, 1
      %p150 = por %p148, %p149
      %p152 = scmp.ne.s32.totalorder %s137, %s151
      %p153 = scmp.eq.s32.totalorder %s22, 0
      %p154 = por %p152, %p153
      %s156 = sadd.s32 %s155, 1
      %p159 = scmp.eq.s32.totalorder %s16, 1
      %p160 = scmp.ne.s32.totalorder %s155, %s157
      %p161 = scmp.eq.s32.totalorder %s16, 0
      %p162 = por %p160, %p161
      %p163 = scmp.ne.s32.totalorder %s155, %s157
      %p164 = scmp.eq.s32.totalorder %s21, 1
      %p165 = por %p163, %p164
      %p166 = scmp.ne.s32.totalorder %s157, %s158
      %p167 = scmp.eq.s32.totalorder %s21, 0
      %p168 = por %p166, %p167
      %p169 = scmp.ne.s32.totalorder %s157, %s158
      %p170 = scmp.eq.s32.totalorder %s22, 1
      %p171 = por %p169, %p170
      %p173 = scmp.ne.s32.totalorder %s158, %s172
      %p174 = scmp.eq.s32.totalorder %s22, 0
      %p175 = por %p173, %p174
      %s176 = ssub.s32 %s16, %s23
      %p177 = scmp.eq.s32.totalorder %s176, 0
      %s179 = sadd.s32 %s178, 1
      %s180 = scalar_select %p177, %s178, %s179
      %p183 = pneg %p177
      %p184 = scmp.eq.s32.totalorder %s16, 1
      %p185 = por %p183, %p184
      %p186 = scmp.ne.s32.totalorder %s178, %s181
      %p187 = scmp.eq.s32.totalorder %s16, 0
      %p188 = por %p186, %p187
      %p189 = scmp.ne.s32.totalorder %s178, %s181
      %p190 = scmp.eq.s32.totalorder %s21, 1
      %p191 = por %p189, %p190
      %p192 = scmp.ne.s32.totalorder %s181, %s182
      %p193 = scmp.eq.s32.totalorder %s21, 0
      %p194 = por %p192, %p193
      %p195 = scmp.ne.s32.totalorder %s181, %s182
      %p196 = scmp.eq.s32.totalorder %s22, 1
      %p197 = por %p195, %p196
      %p199 = scmp.ne.s32.totalorder %s182, %s198
      %p200 = scmp.eq.s32.totalorder %s22, 0
      %p201 = por %p199, %p200
      %p202 = scmp.le.s32.totalorder 1, %s16
      %p203 = scmp.lt.s32.totalorder %s16, 3
      %p204 = pnand %p202, %p203
      %p205 = pneg %p204
      // Predicated region
      $region9: #{tpu_custom_call.1} parent=5 // pred_check
        _
      $region10: #{tpu_custom_call.1} parent=5 // pred_check_branch
        %207 = sbr.rel (%p204) target = $region12
      $region11: #{tpu_custom_call.1} parent=5 // pred_region
        %s208 = ssub.s32 %s16, 1
        // Predicated region
        $region13: #{tpu_custom_call.1} parent=11 // pred_check
          %p209 = pneg %p63
        $region14: #{tpu_custom_call.1} parent=11 // pred_check_branch
          %211 = sbr.rel (%p209) target = $region16
        $region15: #{tpu_custom_call.1} parent=11 // pred_region
          _
        $region16: #{tpu_custom_call.1} parent=11 // pred_fallthru
          _
        // Predicated region
        $region17: #{tpu_custom_call.1} parent=11 // pred_check
          %p212 = pneg %p84
        $region18: #{tpu_custom_call.1} parent=11 // pred_check_branch
          %214 = sbr.rel (%p212) target = $region20
        $region19: #{tpu_custom_call.1} parent=11 // pred_region
          _
        $region20: #{tpu_custom_call.1} parent=11 // pred_fallthru
          _
        // Predicated region
        $region21: #{tpu_custom_call.1} parent=11 // pred_check
          %p215 = pneg %p105
        $region22: #{tpu_custom_call.1} parent=11 // pred_check_branch
          %217 = sbr.rel (%p215) target = $region24
        $region23: #{tpu_custom_call.1} parent=11 // pred_region
          _
        $region24: #{tpu_custom_call.1} parent=11 // pred_fallthru
          _
        // Predicated region
        $region25: #{tpu_custom_call.1} parent=11 // pred_check
          %p218 = pneg %p126
        $region26: #{tpu_custom_call.1} parent=11 // pred_check_branch
          %220 = sbr.rel (%p218) target = $region28
        $region27: #{tpu_custom_call.1} parent=11 // pred_region
          _
        $region28: #{tpu_custom_call.1} parent=11 // pred_fallthru
          _
        // Predicated region
        $region29: #{tpu_custom_call.1} parent=11 // pred_check
          %p221 = pneg %p147
        $region30: #{tpu_custom_call.1} parent=11 // pred_check_branch
          %223 = sbr.rel (%p221) target = $region32
        $region31: #{tpu_custom_call.1} parent=11 // pred_region
          _
        $region32: #{tpu_custom_call.1} parent=11 // pred_fallthru
          _
        // Predicated region
        $region33: #{tpu_custom_call.1} parent=11 // pred_check
          %p224 = pneg %p168
        $region34: #{tpu_custom_call.1} parent=11 // pred_check_branch
          %226 = sbr.rel (%p224) target = $region36
        $region35: #{tpu_custom_call.1} parent=11 // pred_region
          _
        $region36: #{tpu_custom_call.1} parent=11 // pred_fallthru
          _
      $region12: #{tpu_custom_call.1} parent=5 // pred_fallthru
        _
      %p227 = scmp.lt.s32.totalorder %s16, 2
      // Predicated region
      $region37: #{tpu_custom_call.1} parent=5 // pred_check
        %p228 = pneg %p227
      $region38: #{tpu_custom_call.1} parent=5 // pred_check_branch
        %230 = sbr.rel (%p228) target = $region40
      $region39: #{tpu_custom_call.1} parent=5 // pred_region
        // Predicated region
        $region41: #{tpu_custom_call.1} parent=39 // pred_check
          %p231 = pneg %p36
        $region42: #{tpu_custom_call.1} parent=39 // pred_check_branch
          %233 = sbr.rel (%p231) target = $region44
        $region43: #{tpu_custom_call.1} parent=39 // pred_region
          %p234 = scmp.lt.s32.totalorder %s16, 1
          %s235 = scalar_select %p234, %s16, 1
          %s236 = smul.addr %s235, 32
          %s237 = smul.addr %s236, 4
          %s238 = scalar_lea.vmem %s0, %s237
        $region44: #{tpu_custom_call.1} parent=39 // pred_fallthru
          _
      $region40: #{tpu_custom_call.1} parent=5 // pred_fallthru
        _
      %p239 = scmp.le.s32.totalorder 1, %s16
      %p240 = scmp.lt.s32.totalorder %s16, 3
      %p241 = pnand %p239, %p240
      %p242 = pneg %p241
      // Predicated region
      $region45: #{tpu_custom_call.1} parent=5 // pred_check
        _
      $region46: #{tpu_custom_call.1} parent=5 // pred_check_branch
        %244 = sbr.rel (%p241) target = $region48
      $region47: #{tpu_custom_call.1} parent=5 // pred_region
        %s245 = ssub.s32 %s16, 1
        %p246 = scmp.lt.s32.totalorder %s21, 1
        %s247 = scalar_select %p246, %s21, 1
        %s248 = smul.addr %s247, 32
        %s249 = smul.addr %s248, 4
        %s250 = scalar_lea.vmem %s0, %s249
        %p251 = pneg %p42
        %p252 = pneg %p39
        %p253 = pneg %p63
        %p254 = pneg %p60
        %p255 = pneg %p84
        %p256 = pneg %p81
        %p257 = pneg %p105
        %p258 = pneg %p102
        %p259 = pneg %p126
        %p260 = pneg %p123
        %p261 = pneg %p147
        %p262 = pneg %p144
        %p263 = pneg %p168
        %p264 = pneg %p165
        %p265 = pneg %p194
        %p266 = pneg %p191
        %s267 = sand.u32 %s181, 1
        %s268 = scalar_lea.sflag [#allocation7], %s267
        %s269 = sand.u32 %s181, 1
        %s270 = smul.addr %s269, 256
        %s271 = scalar_lea.vmem [#allocation6], %s270
        %p272 = scmp.lt.s32.totalorder %s21, 1
        %s273 = scalar_select %p272, %s21, 1
        %s274 = smul.addr %s273, 32
        %s275 = smul.addr %s274, 4
        %s276 = scalar_lea.vmem %s0, %s275
        %vm278 = vcmask 64512
        %279 = vst.msk [vmem:[#allocation2] sm:$0xff] %vm278, 0.0
        %280 = vst.msk [vmem:[#allocation2 + $0x8] sm:$0xff] %vm278, 0.0
        %vm281 = vcmask 58368
        %282 = vst.msk [vmem:[#allocation2 + $0x10] sm:$0x3] %vm281, 0.0
        %283 = vst.msk [vmem:[#allocation2 + $0x18] sm:$0xff] %vm278, 0.0
        %284 = vst.msk [vmem:[#allocation2 + $0x20] sm:$0xff] %vm278, 0.0
        %285 = vst.msk [vmem:[#allocation2 + $0x28] sm:$0x3] %vm281, 0.0
        %286 = vst.msk [vmem:[#allocation2 + $0x30] sm:$0xff] %vm278, 0.0
        %287 = vst.msk [vmem:[#allocation2 + $0x38] sm:$0xff] %vm278, 0.0
        %288 = vst.msk [vmem:[#allocation2 + $0x40] sm:$0x3] %vm281, 0.0
        %289 = vst.msk [vmem:[#allocation2 + $0x48] sm:$0xff] %vm278, 0.0
        %290 = vst.msk [vmem:[#allocation2 + $0x50] sm:$0xff] %vm278, 0.0
        %291 = vst.msk [vmem:[#allocation2 + $0x58] sm:$0x3] %vm281, 0.0
        %292 = vst.msk [vmem:[#allocation2 + $0x60] sm:$0xff] %vm278, 0.0
        %293 = vst.msk [vmem:[#allocation2 + $0x68] sm:$0xff] %vm278, 0.0
        %294 = vst.msk [vmem:[#allocation2 + $0x70] sm:$0x3] %vm281, 0.0
        %295 = vst.msk [vmem:[#allocation2 + $0x78] sm:$0xff] %vm278, 0.0
        %296 = vst.msk [vmem:[#allocation2 + $0x80] sm:$0xff] %vm278, 0.0
        %297 = vst.msk [vmem:[#allocation2 + $0x88] sm:$0x3] %vm281, 0.0
        %298 = vst.msk [vmem:[#allocation2 + $0x90] sm:$0xff] %vm278, 0.0
        %299 = vst.msk [vmem:[#allocation2 + $0x98] sm:$0xff] %vm278, 0.0
        %300 = vst.msk [vmem:[#allocation2 + $0xa0] sm:$0x3] %vm281, 0.0
        %301 = vst.msk [vmem:[#allocation2 + $0xa8] sm:$0xff] %vm278, 0.0
        %302 = vst.msk [vmem:[#allocation2 + $0xb0] sm:$0xff] %vm278, 0.0
        %303 = vst.msk [vmem:[#allocation2 + $0xb8] sm:$0x3] %vm281, 0.0
        %304 = vst.msk [vmem:[#allocation2 + $0xc0] sm:$0xff] %vm278, 0.0
        %305 = vst.msk [vmem:[#allocation2 + $0xc8] sm:$0xff] %vm278, 0.0
        %306 = vst.msk [vmem:[#allocation2 + $0xd0] sm:$0x3] %vm281, 0.0
        %307 = vst.msk [vmem:[#allocation2 + $0xd8] sm:$0xff] %vm278, 0.0
        %308 = vst.msk [vmem:[#allocation2 + $0xe0] sm:$0xff] %vm278, 0.0
        %309 = vst.msk [vmem:[#allocation2 + $0xe8] sm:$0x3] %vm281, 0.0
        %310 = vst.msk [vmem:[#allocation2 + $0xf0] sm:$0xff] %vm278, 0.0
        %311 = vst.msk [vmem:[#allocation2 + $0xf8] sm:$0xff] %vm278, 0.0
        %312 = vst.msk [vmem:[#allocation2 + $0x100] sm:$0x3] %vm281, 0.0
        %313 = vst.msk [vmem:[#allocation2 + $0x108] sm:$0xff] %vm278, 0.0
        %314 = vst.msk [vmem:[#allocation2 + $0x110] sm:$0xff] %vm278, 0.0
        %315 = vst.msk [vmem:[#allocation2 + $0x118] sm:$0x3] %vm281, 0.0
        %316 = vst.msk [vmem:[#allocation2 + $0x120] sm:$0xff] %vm278, 0.0
        %317 = vst.msk [vmem:[#allocation2 + $0x128] sm:$0xff] %vm278, 0.0
        %318 = vst.msk [vmem:[#allocation2 + $0x130] sm:$0x3] %vm281, 0.0
        %319 = vst.msk [vmem:[#allocation2 + $0x138] sm:$0xff] %vm278, 0.0
        %320 = vst.msk [vmem:[#allocation2 + $0x140] sm:$0xff] %vm278, 0.0
        %321 = vst.msk [vmem:[#allocation2 + $0x148] sm:$0x3] %vm281, 0.0
        %322 = vst.msk [vmem:[#allocation2 + $0x150] sm:$0xff] %vm278, 0.0
        %323 = vst.msk [vmem:[#allocation2 + $0x158] sm:$0xff] %vm278, 0.0
        %324 = vst.msk [vmem:[#allocation2 + $0x160] sm:$0x3] %vm281, 0.0
        %325 = vst.msk [vmem:[#allocation2 + $0x168] sm:$0xff] %vm278, 0.0
        %326 = vst.msk [vmem:[#allocation2 + $0x170] sm:$0xff] %vm278, 0.0
        %327 = vst.msk [vmem:[#allocation2 + $0x178] sm:$0x3] %vm281, 0.0
        %328 = vst.msk [vmem:[#allocation2 + $0x180] sm:$0xff] %vm278, 0.0
        %329 = vst.msk [vmem:[#allocation2 + $0x188] sm:$0xff] %vm278, 0.0
        %330 = vst.msk [vmem:[#allocation2 + $0x190] sm:$0x3] %vm281, 0.0
        %331 = vst.msk [vmem:[#allocation2 + $0x198] sm:$0xff] %vm278, 0.0
        %332 = vst.msk [vmem:[#allocation2 + $0x1a0] sm:$0xff] %vm278, 0.0
        %333 = vst.msk [vmem:[#allocation2 + $0x1a8] sm:$0x3] %vm281, 0.0
        %vm334 = vcmask 130048
        %335 = vst.msk [vmem:[#allocation3] sm:$0xff] %vm334, 0.0
        %336 = vst.msk [vmem:[#allocation3 + $0x8] sm:$0xff] %vm334, 0.0
        %vm337 = vcmask 123904
        %338 = vst.msk [vmem:[#allocation3 + $0x10] sm:$0x3] %vm337, 0.0
        %339 = vst.msk [vmem:[#allocation3 + $0x18] sm:$0xff] %vm334, 0.0
        %340 = vst.msk [vmem:[#allocation3 + $0x20] sm:$0xff] %vm334, 0.0
        %341 = vst.msk [vmem:[#allocation3 + $0x28] sm:$0x3] %vm337, 0.0
        %342 = vst.msk [vmem:[#allocation3 + $0x30] sm:$0xff] %vm334, 0.0
        %343 = vst.msk [vmem:[#allocation3 + $0x38] sm:$0xff] %vm334, 0.0
        %344 = vst.msk [vmem:[#allocation3 + $0x40] sm:$0x3] %vm337, 0.0
        %345 = vst.msk [vmem:[#allocation3 + $0x48] sm:$0xff] %vm334, 0.0
        %346 = vst.msk [vmem:[#allocation3 + $0x50] sm:$0xff] %vm334, 0.0
        %347 = vst.msk [vmem:[#allocation3 + $0x58] sm:$0x3] %vm337, 0.0
        %348 = vst.msk [vmem:[#allocation3 + $0x60] sm:$0xff] %vm334, 0.0
        %349 = vst.msk [vmem:[#allocation3 + $0x68] sm:$0xff] %vm334, 0.0
        %350 = vst.msk [vmem:[#allocation3 + $0x70] sm:$0x3] %vm337, 0.0
        %351 = vst.msk [vmem:[#allocation3 + $0x78] sm:$0xff] %vm334, 0.0
        %352 = vst.msk [vmem:[#allocation3 + $0x80] sm:$0xff] %vm334, 0.0
        %353 = vst.msk [vmem:[#allocation3 + $0x88] sm:$0x3] %vm337, 0.0
        %354 = vst.msk [vmem:[#allocation3 + $0x90] sm:$0xff] %vm334, 0.0
        %355 = vst.msk [vmem:[#allocation3 + $0x98] sm:$0xff] %vm334, 0.0
        %356 = vst.msk [vmem:[#allocation3 + $0xa0] sm:$0x3] %vm337, 0.0
        %357 = vst.msk [vmem:[#allocation3 + $0xa8] sm:$0xff] %vm334, 0.0
        %358 = vst.msk [vmem:[#allocation3 + $0xb0] sm:$0xff] %vm334, 0.0
        %359 = vst.msk [vmem:[#allocation3 + $0xb8] sm:$0x3] %vm337, 0.0
        %360 = vst.msk [vmem:[#allocation3 + $0xc0] sm:$0xff] %vm334, 0.0
        %361 = vst.msk [vmem:[#allocation3 + $0xc8] sm:$0xff] %vm334, 0.0
        %362 = vst.msk [vmem:[#allocation3 + $0xd0] sm:$0x3] %vm337, 0.0
        %363 = vst.msk [vmem:[#allocation3 + $0xd8] sm:$0xff] %vm334, 0.0
        %364 = vst.msk [vmem:[#allocation3 + $0xe0] sm:$0xff] %vm334, 0.0
        %365 = vst.msk [vmem:[#allocation3 + $0xe8] sm:$0x3] %vm337, 0.0
        %366 = vst.msk [vmem:[#allocation3 + $0xf0] sm:$0xff] %vm334, 0.0
        %367 = vst.msk [vmem:[#allocation3 + $0xf8] sm:$0xff] %vm334, 0.0
        %368 = vst.msk [vmem:[#allocation3 + $0x100] sm:$0x3] %vm337, 0.0
        %369 = vst.msk [vmem:[#allocation3 + $0x108] sm:$0xff] %vm334, 0.0
        %370 = vst.msk [vmem:[#allocation3 + $0x110] sm:$0xff] %vm334, 0.0
        %371 = vst.msk [vmem:[#allocation3 + $0x118] sm:$0x3] %vm337, 0.0
        %372 = vst.msk [vmem:[#allocation3 + $0x120] sm:$0xff] %vm334, 0.0
        %373 = vst.msk [vmem:[#allocation3 + $0x128] sm:$0xff] %vm334, 0.0
        %374 = vst.msk [vmem:[#allocation3 + $0x130] sm:$0x3] %vm337, 0.0
        %375 = vst.msk [vmem:[#allocation3 + $0x138] sm:$0xff] %vm334, 0.0
        %376 = vst.msk [vmem:[#allocation3 + $0x140] sm:$0xff] %vm334, 0.0
        %377 = vst.msk [vmem:[#allocation3 + $0x148] sm:$0x3] %vm337, 0.0
        %378 = vst.msk [vmem:[#allocation3 + $0x150] sm:$0xff] %vm334, 0.0
        %379 = vst.msk [vmem:[#allocation3 + $0x158] sm:$0xff] %vm334, 0.0
        %380 = vst.msk [vmem:[#allocation3 + $0x160] sm:$0x3] %vm337, 0.0
        %381 = vst.msk [vmem:[#allocation3 + $0x168] sm:$0xff] %vm334, 0.0
        %382 = vst.msk [vmem:[#allocation3 + $0x170] sm:$0xff] %vm334, 0.0
        %383 = vst.msk [vmem:[#allocation3 + $0x178] sm:$0x3] %vm337, 0.0
        %384 = vst.msk [vmem:[#allocation3 + $0x180] sm:$0xff] %vm334, 0.0
        %385 = vst.msk [vmem:[#allocation3 + $0x188] sm:$0xff] %vm334, 0.0
        %386 = vst.msk [vmem:[#allocation3 + $0x190] sm:$0x3] %vm337, 0.0
        %387 = vst.msk [vmem:[#allocation3 + $0x198] sm:$0xff] %vm334, 0.0
        %388 = vst.msk [vmem:[#allocation3 + $0x1a0] sm:$0xff] %vm334, 0.0
        %389 = vst.msk [vmem:[#allocation3 + $0x1a8] sm:$0x3] %vm337, 0.0
        %v390 = vld [vmem:[%s276] sm:$0xf]
        %v391 = vld [vmem:[%s276 + $0x4] sm:$0xf]
        %v392 = vld [vmem:[%s276 + $0x8] sm:$0xf]
        %v393 = vld [vmem:[%s276 + $0xc] sm:$0xf]
        %v394 = vld [vmem:[%s276 + $0x10] sm:$0xf]
        %v395 = vld [vmem:[%s276 + $0x14] sm:$0xf]
        %v396 = vld [vmem:[%s276 + $0x18] sm:$0xf]
        %v397 = vld [vmem:[%s276 + $0x1c] sm:$0xf]
        %v398 = vld [vmem:[%s276 + $0x20] sm:$0xf]
        %v399 = vld [vmem:[%s276 + $0x24] sm:$0xf]
        %v400 = vld [vmem:[%s276 + $0x28] sm:$0xf]
        %v401 = vld [vmem:[%s276 + $0x2c] sm:$0xf]
        %v402 = vld [vmem:[%s276 + $0x30] sm:$0xf]
        %v403 = vld [vmem:[%s276 + $0x34] sm:$0xf]
        %v404 = vld [vmem:[%s276 + $0x38] sm:$0xf]
        %v405 = vld [vmem:[%s276 + $0x3c] sm:$0xf]
        %v406 = vld [vmem:[%s276 + $0x40] sm:$0xf]
        %v407 = vld [vmem:[%s276 + $0x44] sm:$0xf]
        %v408 = vld [vmem:[%s276 + $0x48] sm:$0xf]
        %v409 = vld [vmem:[%s276 + $0x4c] sm:$0xf]
        %v410 = vld [vmem:[%s276 + $0x50] sm:$0xf]
        %v411 = vld [vmem:[%s276 + $0x54] sm:$0xf]
        %v412 = vld [vmem:[%s276 + $0x58] sm:$0xf]
        %v413 = vld [vmem:[%s276 + $0x5c] sm:$0xf]
        %v414 = vld [vmem:[%s276 + $0x60] sm:$0xf]
        %v415 = vld [vmem:[%s276 + $0x64] sm:$0xf]
        %v416 = vld [vmem:[%s276 + $0x68] sm:$0xf]
        %v417 = vld [vmem:[%s276 + $0x6c] sm:$0xf]
        %v418 = vld [vmem:[%s276 + $0x70] sm:$0xf]
        %v419 = vld [vmem:[%s276 + $0x74] sm:$0xf]
        %v420 = vld [vmem:[%s276 + $0x78] sm:$0xf]
        %v421 = vld [vmem:[%s276 + $0x7c] sm:$0xf]
        %v422 = vunpack.c.l.bf16 %v390
        %v423 = vunpack.c.l.bf16 %v391
        %v424 = vunpack.c.l.bf16 %v392
        %v425 = vunpack.c.l.bf16 %v393
        %v426 = vunpack.c.l.bf16 %v394
        %v427 = vunpack.c.l.bf16 %v395
        %v428 = vunpack.c.l.bf16 %v396
        %v429 = vunpack.c.l.bf16 %v397
        %v430 = vunpack.c.l.bf16 %v398
        %v431 = vunpack.c.l.bf16 %v399
        %v432 = vunpack.c.l.bf16 %v400
        %v433 = vunpack.c.l.bf16 %v401
        %v434 = vunpack.c.l.bf16 %v402
        %v435 = vunpack.c.l.bf16 %v403
        %v436 = vunpack.c.l.bf16 %v404
        %v437 = vunpack.c.l.bf16 %v405
        %v438 = vunpack.c.l.bf16 %v406
        %v439 = vunpack.c.l.bf16 %v407
        %v440 = vunpack.c.l.bf16 %v408
        %v441 = vunpack.c.l.bf16 %v409
        %v442 = vunpack.c.l.bf16 %v410
        %v443 = vunpack.c.l.bf16 %v411
        %v444 = vunpack.c.l.bf16 %v412
        %v445 = vunpack.c.l.bf16 %v413
        %v446 = vunpack.c.l.bf16 %v414
        %v447 = vunpack.c.l.bf16 %v415
        %v448 = vunpack.c.l.bf16 %v416
        %v449 = vunpack.c.l.bf16 %v417
        %v450 = vunpack.c.l.bf16 %v418
        %v451 = vunpack.c.l.bf16 %v419
        %v452 = vunpack.c.l.bf16 %v420
        %v453 = vunpack.c.l.bf16 %v421
        %s454 = scalar_lea.vmem [#allocation2], 24
        %455 = vst.msk [vmem:[%s454 + $0x1] sm:$0xff] %vm278, %v422
        %456 = vst.msk [vmem:[%s454 + $0x9] sm:$0xff] %vm278, %v423
        %457 = vst.msk [vmem:[%s454 + $0x19] sm:$0xff] %vm278, %v424
        %458 = vst.msk [vmem:[%s454 + $0x21] sm:$0xff] %vm278, %v425
        %459 = vst.msk [vmem:[%s454 + $0x31] sm:$0xff] %vm278, %v426
        %460 = vst.msk [vmem:[%s454 + $0x39] sm:$0xff] %vm278, %v427
        %461 = vst.msk [vmem:[%s454 + $0x49] sm:$0xff] %vm278, %v428
        %462 = vst.msk [vmem:[%s454 + $0x51] sm:$0xff] %vm278, %v429
        %463 = vst.msk [vmem:[%s454 + $0x61] sm:$0xff] %vm278, %v430
        %464 = vst.msk [vmem:[%s454 + $0x69] sm:$0xff] %vm278, %v431
        %465 = vst.msk [vmem:[%s454 + $0x79] sm:$0xff] %vm278, %v432
        %466 = vst.msk [vmem:[%s454 + $0x81] sm:$0xff] %vm278, %v433
        %467 = vst.msk [vmem:[%s454 + $0x91] sm:$0xff] %vm278, %v434
        %468 = vst.msk [vmem:[%s454 + $0x99] sm:$0xff] %vm278, %v435
        %469 = vst.msk [vmem:[%s454 + $0xa9] sm:$0xff] %vm278, %v436
        %470 = vst.msk [vmem:[%s454 + $0xb1] sm:$0xff] %vm278, %v437
        %471 = vst.msk [vmem:[%s454 + $0xc1] sm:$0xff] %vm278, %v438
        %472 = vst.msk [vmem:[%s454 + $0xc9] sm:$0xff] %vm278, %v439
        %473 = vst.msk [vmem:[%s454 + $0xd9] sm:$0xff] %vm278, %v440
        %474 = vst.msk [vmem:[%s454 + $0xe1] sm:$0xff] %vm278, %v441
        %475 = vst.msk [vmem:[%s454 + $0xf1] sm:$0xff] %vm278, %v442
        %476 = vst.msk [vmem:[%s454 + $0xf9] sm:$0xff] %vm278, %v443
        %477 = vst.msk [vmem:[%s454 + $0x109] sm:$0xff] %vm278, %v444
        %478 = vst.msk [vmem:[%s454 + $0x111] sm:$0xff] %vm278, %v445
        %479 = vst.msk [vmem:[%s454 + $0x121] sm:$0xff] %vm278, %v446
        %480 = vst.msk [vmem:[%s454 + $0x129] sm:$0xff] %vm278, %v447
        %481 = vst.msk [vmem:[%s454 + $0x139] sm:$0xff] %vm278, %v448
        %482 = vst.msk [vmem:[%s454 + $0x141] sm:$0xff] %vm278, %v449
        %483 = vst.msk [vmem:[%s454 + $0x151] sm:$0xff] %vm278, %v450
        %484 = vst.msk [vmem:[%s454 + $0x159] sm:$0xff] %vm278, %v451
        %485 = vst.msk [vmem:[%s454 + $0x169] sm:$0xff] %vm278, %v452
        %486 = vst.msk [vmem:[%s454 + $0x171] sm:$0xff] %vm278, %v453
        %v487 = vld [vmem:[#allocation2] sm:$0xff]
        %v488 = vld [vmem:[#allocation2 + $0x8] sm:$0xff]
        %v489 = vld [vmem:[#allocation2 + $0x10] sm:$0x3]
        %v490 = vld [vmem:[#allocation2 + $0x18] sm:$0xff]
        %v491 = vld [vmem:[#allocation2 + $0x20] sm:$0xff]
        %v492 = vld [vmem:[#allocation2 + $0x28] sm:$0x3]
        %v493 = vld [vmem:[#allocation2 + $0x30] sm:$0xff]
        %v494 = vld [vmem:[#allocation2 + $0x38] sm:$0xff]
        %v495 = vld [vmem:[#allocation2 + $0x40] sm:$0x3]
        %v496 = vld [vmem:[#allocation2 + $0x48] sm:$0xff]
        %v497 = vld [vmem:[#allocation2 + $0x50] sm:$0xff]
        %v498 = vld [vmem:[#allocation2 + $0x58] sm:$0x3]
        %v499 = vld [vmem:[#allocation2 + $0x60] sm:$0xff]
        %v500 = vld [vmem:[#allocation2 + $0x68] sm:$0xff]
        %v501 = vld [vmem:[#allocation2 + $0x70] sm:$0x3]
        %v502 = vld [vmem:[#allocation2 + $0x78] sm:$0xff]
        %v503 = vld [vmem:[#allocation2 + $0x80] sm:$0xff]
        %v504 = vld [vmem:[#allocation2 + $0x88] sm:$0x3]
        %v505 = vld [vmem:[#allocation2 + $0x90] sm:$0xff]
        %v506 = vld [vmem:[#allocation2 + $0x98] sm:$0xff]
        %v507 = vld [vmem:[#allocation2 + $0xa0] sm:$0x3]
        %v508 = vld [vmem:[#allocation2 + $0xa8] sm:$0xff]
        %v509 = vld [vmem:[#allocation2 + $0xb0] sm:$0xff]
        %v510 = vld [vmem:[#allocation2 + $0xb8] sm:$0x3]
        %v511 = vld [vmem:[#allocation2 + $0xc0] sm:$0xff]
        %v512 = vld [vmem:[#allocation2 + $0xc8] sm:$0xff]
        %v513 = vld [vmem:[#allocation2 + $0xd0] sm:$0x3]
        %v514 = vld [vmem:[#allocation2 + $0xd8] sm:$0xff]
        %v515 = vld [vmem:[#allocation2 + $0xe0] sm:$0xff]
        %v516 = vld [vmem:[#allocation2 + $0xe8] sm:$0x3]
        %v517 = vld [vmem:[#allocation2 + $0xf0] sm:$0xff]
        %v518 = vld [vmem:[#allocation2 + $0xf8] sm:$0xff]
        %v519 = vld [vmem:[#allocation2 + $0x100] sm:$0x3]
        %v520 = vld [vmem:[#allocation2 + $0x108] sm:$0xff]
        %v521 = vld [vmem:[#allocation2 + $0x110] sm:$0xff]
        %v522 = vld [vmem:[#allocation2 + $0x118] sm:$0x3]
        %v523 = vld [vmem:[#allocation2 + $0x120] sm:$0xff]
        %v524 = vld [vmem:[#allocation2 + $0x128] sm:$0xff]
        %v525 = vld [vmem:[#allocation2 + $0x130] sm:$0x3]
        %v526 = vld [vmem:[#allocation2 + $0x138] sm:$0xff]
        %v527 = vld [vmem:[#allocation2 + $0x140] sm:$0xff]
        %v528 = vld [vmem:[#allocation2 + $0x148] sm:$0x3]
        %v529 = vld [vmem:[#allocation2 + $0x150] sm:$0xff]
        %v530 = vld [vmem:[#allocation2 + $0x158] sm:$0xff]
        %v531 = vld [vmem:[#allocation2 + $0x160] sm:$0x3]
        %v532 = vld [vmem:[#allocation2 + $0x168] sm:$0xff]
        %v533 = vld [vmem:[#allocation2 + $0x170] sm:$0xff]
        %v534 = vld [vmem:[#allocation2 + $0x178] sm:$0x3]
        %v535 = vld [vmem:[#allocation2 + $0x180] sm:$0xff]
        %v536 = vld [vmem:[#allocation2 + $0x188] sm:$0xff]
        %v537 = vld [vmem:[#allocation2 + $0x190] sm:$0x3]
        %v538 = vld [vmem:[#allocation2 + $0x198] sm:$0xff]
        %v539 = vld [vmem:[#allocation2 + $0x1a0] sm:$0xff]
        %v540 = vld [vmem:[#allocation2 + $0x1a8] sm:$0x3]
        %541 = vst.msk [vmem:[#allocation4] sm:$0xff] %vm278, %v487
        %542 = vst.msk [vmem:[#allocation4 + $0x8] sm:$0xff] %vm278, %v488
        %543 = vst.msk [vmem:[#allocation4 + $0x10] sm:$0xff] %vm278, %v490
        %544 = vst.msk [vmem:[#allocation4 + $0x18] sm:$0xff] %vm278, %v491
        %545 = vst.msk [vmem:[#allocation4 + $0x20] sm:$0xff] %vm278, %v493
        %546 = vst.msk [vmem:[#allocation4 + $0x28] sm:$0xff] %vm278, %v494
        %547 = vst.msk [vmem:[#allocation4 + $0x30] sm:$0xff] %vm278, %v496
        %548 = vst.msk [vmem:[#allocation4 + $0x38] sm:$0xff] %vm278, %v497
        %549 = vst.msk [vmem:[#allocation4 + $0x40] sm:$0xff] %vm278, %v499
        %550 = vst.msk [vmem:[#allocation4 + $0x48] sm:$0xff] %vm278, %v500
        %551 = vst.msk [vmem:[#allocation4 + $0x50] sm:$0xff] %vm278, %v502
        %552 = vst.msk [vmem:[#allocation4 + $0x58] sm:$0xff] %vm278, %v503
        %553 = vst.msk [vmem:[#allocation4 + $0x60] sm:$0xff] %vm278, %v505
        %554 = vst.msk [vmem:[#allocation4 + $0x68] sm:$0xff] %vm278, %v506
        %555 = vst.msk [vmem:[#allocation4 + $0x70] sm:$0xff] %vm278, %v508
        %556 = vst.msk [vmem:[#allocation4 + $0x78] sm:$0xff] %vm278, %v509
        %557 = vst.msk [vmem:[#allocation4 + $0x80] sm:$0xff] %vm278, %v511
        %558 = vst.msk [vmem:[#allocation4 + $0x88] sm:$0xff] %vm278, %v512
        %559 = vst.msk [vmem:[#allocation4 + $0x90] sm:$0xff] %vm278, %v514
        %560 = vst.msk [vmem:[#allocation4 + $0x98] sm:$0xff] %vm278, %v515
        %561 = vst.msk [vmem:[#allocation4 + $0xa0] sm:$0xff] %vm278, %v517
        %562 = vst.msk [vmem:[#allocation4 + $0xa8] sm:$0xff] %vm278, %v518
        %563 = vst.msk [vmem:[#allocation4 + $0xb0] sm:$0xff] %vm278, %v520
        %564 = vst.msk [vmem:[#allocation4 + $0xb8] sm:$0xff] %vm278, %v521
        %565 = vst.msk [vmem:[#allocation4 + $0xc0] sm:$0xff] %vm278, %v523
        %566 = vst.msk [vmem:[#allocation4 + $0xc8] sm:$0xff] %vm278, %v524
        %567 = vst.msk [vmem:[#allocation4 + $0xd0] sm:$0xff] %vm278, %v526
        %568 = vst.msk [vmem:[#allocation4 + $0xd8] sm:$0xff] %vm278, %v527
        %569 = vst.msk [vmem:[#allocation4 + $0xe0] sm:$0xff] %vm278, %v529
        %570 = vst.msk [vmem:[#allocation4 + $0xe8] sm:$0xff] %vm278, %v530
        %571 = vst.msk [vmem:[#allocation4 + $0xf0] sm:$0xff] %vm278, %v532
        %572 = vst.msk [vmem:[#allocation4 + $0xf8] sm:$0xff] %vm278, %v533
        %621 = vrot.lane.b32.xlu0 %v487, 8
        %v622 = vpop.permute.xlu0 %621
        %623 = vrot.lane.b32.xlu0 %v488, 8
        %v624 = vpop.permute.xlu0 %623
        %625 = vrot.lane.b32.xlu0 %v489, 8
        %v626 = vpop.permute.xlu0 %625
        %627 = vrot.lane.b32.xlu0 %v490, 8
        %v628 = vpop.permute.xlu0 %627
        %629 = vrot.lane.b32.xlu0 %v491, 8
        %v630 = vpop.permute.xlu0 %629
        %631 = vrot.lane.b32.xlu0 %v492, 8
        %v632 = vpop.permute.xlu0 %631
        %633 = vrot.lane.b32.xlu0 %v493, 8
        %v634 = vpop.permute.xlu0 %633
        %635 = vrot.lane.b32.xlu0 %v494, 8
        %v636 = vpop.permute.xlu0 %635
        %637 = vrot.lane.b32.xlu0 %v495, 8
        %v638 = vpop.permute.xlu0 %637
        %639 = vrot.lane.b32.xlu0 %v496, 8
        %v640 = vpop.permute.xlu0 %639
        %641 = vrot.lane.b32.xlu0 %v497, 8
        %v642 = vpop.permute.xlu0 %641
        %643 = vrot.lane.b32.xlu0 %v498, 8
        %v644 = vpop.permute.xlu0 %643
        %645 = vrot.lane.b32.xlu0 %v499, 8
        %v646 = vpop.permute.xlu0 %645
        %647 = vrot.lane.b32.xlu0 %v500, 8
        %v648 = vpop.permute.xlu0 %647
        %649 = vrot.lane.b32.xlu0 %v501, 8
        %v650 = vpop.permute.xlu0 %649
        %651 = vrot.lane.b32.xlu0 %v502, 8
        %v652 = vpop.permute.xlu0 %651
        %653 = vrot.lane.b32.xlu0 %v503, 8
        %v654 = vpop.permute.xlu0 %653
        %655 = vrot.lane.b32.xlu0 %v504, 8
        %v656 = vpop.permute.xlu0 %655
        %657 = vrot.lane.b32.xlu0 %v505, 8
        %v658 = vpop.permute.xlu0 %657
        %659 = vrot.lane.b32.xlu0 %v506, 8
        %v660 = vpop.permute.xlu0 %659
        %661 = vrot.lane.b32.xlu0 %v507, 8
        %v662 = vpop.permute.xlu0 %661
        %663 = vrot.lane.b32.xlu0 %v508, 8
        %v664 = vpop.permute.xlu0 %663
        %665 = vrot.lane.b32.xlu0 %v509, 8
        %v666 = vpop.permute.xlu0 %665
        %667 = vrot.lane.b32.xlu0 %v510, 8
        %v668 = vpop.permute.xlu0 %667
        %669 = vrot.lane.b32.xlu0 %v511, 8
        %v670 = vpop.permute.xlu0 %669
        %671 = vrot.lane.b32.xlu0 %v512, 8
        %v672 = vpop.permute.xlu0 %671
        %673 = vrot.lane.b32.xlu0 %v513, 8
        %v674 = vpop.permute.xlu0 %673
        %675 = vrot.lane.b32.xlu0 %v514, 8
        %v676 = vpop.permute.xlu0 %675
        %677 = vrot.lane.b32.xlu0 %v515, 8
        %v678 = vpop.permute.xlu0 %677
        %679 = vrot.lane.b32.xlu0 %v516, 8
        %v680 = vpop.permute.xlu0 %679
        %681 = vrot.lane.b32.xlu0 %v517, 8
        %v682 = vpop.permute.xlu0 %681
        %683 = vrot.lane.b32.xlu0 %v518, 8
        %v684 = vpop.permute.xlu0 %683
        %685 = vrot.lane.b32.xlu0 %v519, 8
        %v686 = vpop.permute.xlu0 %685
        %687 = vrot.lane.b32.xlu0 %v520, 8
        %v688 = vpop.permute.xlu0 %687
        %689 = vrot.lane.b32.xlu0 %v521, 8
        %v690 = vpop.permute.xlu0 %689
        %691 = vrot.lane.b32.xlu0 %v522, 8
        %v692 = vpop.permute.xlu0 %691
        %693 = vrot.lane.b32.xlu0 %v523, 8
        %v694 = vpop.permute.xlu0 %693
        %695 = vrot.lane.b32.xlu0 %v524, 8
        %v696 = vpop.permute.xlu0 %695
        %697 = vrot.lane.b32.xlu0 %v525, 8
        %v698 = vpop.permute.xlu0 %697
        %699 = vrot.lane.b32.xlu0 %v526, 8
        %v700 = vpop.permute.xlu0 %699
        %701 = vrot.lane.b32.xlu0 %v527, 8
        %v702 = vpop.permute.xlu0 %701
        %703 = vrot.lane.b32.xlu0 %v528, 8
        %v704 = vpop.permute.xlu0 %703
        %705 = vrot.lane.b32.xlu0 %v529, 8
        %v706 = vpop.permute.xlu0 %705
        %707 = vrot.lane.b32.xlu0 %v530, 8
        %v708 = vpop.permute.xlu0 %707
        %709 = vrot.lane.b32.xlu0 %v531, 8
        %v710 = vpop.permute.xlu0 %709
        %711 = vrot.lane.b32.xlu0 %v532, 8
        %v712 = vpop.permute.xlu0 %711
        %713 = vrot.lane.b32.xlu0 %v533, 8
        %v714 = vpop.permute.xlu0 %713
        %715 = vrot.lane.b32.xlu0 %v534, 8
        %v716 = vpop.permute.xlu0 %715
        %vm765 = vcmask 130113
        %766 = vst.msk [vmem:[#allocation4 - $0x1] sm:$0xfe] %vm765, %v622
        %vm767 = vcmask 130112
        %768 = vst.msk [vmem:[#allocation4 + $0x7] sm:$0xff] %vm767, %v624
        %vm769 = vcmask 122944
        %770 = vst.msk [vmem:[#allocation4 + $0xf] sm:$0x1] %vm769, %v626
        %771 = vst.msk [vmem:[#allocation4 + $0xf] sm:$0xfe] %vm765, %v628
        %772 = vst.msk [vmem:[#allocation4 + $0x17] sm:$0xff] %vm767, %v630
        %773 = vst.msk [vmem:[#allocation4 + $0x1f] sm:$0x1] %vm769, %v632
        %774 = vst.msk [vmem:[#allocation4 + $0x1f] sm:$0xfe] %vm765, %v634
        %775 = vst.msk [vmem:[#allocation4 + $0x27] sm:$0xff] %vm767, %v636
        %776 = vst.msk [vmem:[#allocation4 + $0x2f] sm:$0x1] %vm769, %v638
        %777 = vst.msk [vmem:[#allocation4 + $0x2f] sm:$0xfe] %vm765, %v640
        %778 = vst.msk [vmem:[#allocation4 + $0x37] sm:$0xff] %vm767, %v642
        %779 = vst.msk [vmem:[#allocation4 + $0x3f] sm:$0x1] %vm769, %v644
        %780 = vst.msk [vmem:[#allocation4 + $0x3f] sm:$0xfe] %vm765, %v646
        %781 = vst.msk [vmem:[#allocation4 + $0x47] sm:$0xff] %vm767, %v648
        %782 = vst.msk [vmem:[#allocation4 + $0x4f] sm:$0x1] %vm769, %v650
        %783 = vst.msk [vmem:[#allocation4 + $0x4f] sm:$0xfe] %vm765, %v652
        %784 = vst.msk [vmem:[#allocation4 + $0x57] sm:$0xff] %vm767, %v654
        %785 = vst.msk [vmem:[#allocation4 + $0x5f] sm:$0x1] %vm769, %v656
        %786 = vst.msk [vmem:[#allocation4 + $0x5f] sm:$0xfe] %vm765, %v658
        %787 = vst.msk [vmem:[#allocation4 + $0x67] sm:$0xff] %vm767, %v660
        %788 = vst.msk [vmem:[#allocation4 + $0x6f] sm:$0x1] %vm769, %v662
        %789 = vst.msk [vmem:[#allocation4 + $0x6f] sm:$0xfe] %vm765, %v664
        %790 = vst.msk [vmem:[#allocation4 + $0x77] sm:$0xff] %vm767, %v666
        %791 = vst.msk [vmem:[#allocation4 + $0x7f] sm:$0x1] %vm769, %v668
        %792 = vst.msk [vmem:[#allocation4 + $0x7f] sm:$0xfe] %vm765, %v670
        %793 = vst.msk [vmem:[#allocation4 + $0x87] sm:$0xff] %vm767, %v672
        %794 = vst.msk [vmem:[#allocation4 + $0x8f] sm:$0x1] %vm769, %v674
        %795 = vst.msk [vmem:[#allocation4 + $0x8f] sm:$0xfe] %vm765, %v676
        %796 = vst.msk [vmem:[#allocation4 + $0x97] sm:$0xff] %vm767, %v678
        %797 = vst.msk [vmem:[#allocation4 + $0x9f] sm:$0x1] %vm769, %v680
        %798 = vst.msk [vmem:[#allocation4 + $0x9f] sm:$0xfe] %vm765, %v682
        %799 = vst.msk [vmem:[#allocation4 + $0xa7] sm:$0xff] %vm767, %v684
        %800 = vst.msk [vmem:[#allocation4 + $0xaf] sm:$0x1] %vm769, %v686
        %801 = vst.msk [vmem:[#allocation4 + $0xaf] sm:$0xfe] %vm765, %v688
        %802 = vst.msk [vmem:[#allocation4 + $0xb7] sm:$0xff] %vm767, %v690
        %803 = vst.msk [vmem:[#allocation4 + $0xbf] sm:$0x1] %vm769, %v692
        %804 = vst.msk [vmem:[#allocation4 + $0xbf] sm:$0xfe] %vm765, %v694
        %805 = vst.msk [vmem:[#allocation4 + $0xc7] sm:$0xff] %vm767, %v696
        %806 = vst.msk [vmem:[#allocation4 + $0xcf] sm:$0x1] %vm769, %v698
        %807 = vst.msk [vmem:[#allocation4 + $0xcf] sm:$0xfe] %vm765, %v700
        %808 = vst.msk [vmem:[#allocation4 + $0xd7] sm:$0xff] %vm767, %v702
        %809 = vst.msk [vmem:[#allocation4 + $0xdf] sm:$0x1] %vm769, %v704
        %810 = vst.msk [vmem:[#allocation4 + $0xdf] sm:$0xfe] %vm765, %v706
        %811 = vst.msk [vmem:[#allocation4 + $0xe7] sm:$0xff] %vm767, %v708
        %812 = vst.msk [vmem:[#allocation4 + $0xef] sm:$0x1] %vm769, %v710
        %813 = vst.msk [vmem:[#allocation4 + $0xef] sm:$0xfe] %vm765, %v712
        %814 = vst.msk [vmem:[#allocation4 + $0xf7] sm:$0xff] %vm767, %v714
        %815 = vst.msk [vmem:[#allocation4 + $0xff] sm:$0x1] %vm769, %v716
        %816 = vrot.lane.b32.xlu0 %v487, 16
        %v817 = vpop.permute.xlu0 %816
        %818 = vrot.lane.b32.xlu0 %v488, 16
        %v819 = vpop.permute.xlu0 %818
        %820 = vrot.lane.b32.xlu0 %v489, 16
        %v821 = vpop.permute.xlu0 %820
        %822 = vrot.lane.b32.xlu0 %v490, 16
        %v823 = vpop.permute.xlu0 %822
        %824 = vrot.lane.b32.xlu0 %v491, 16
        %v825 = vpop.permute.xlu0 %824
        %826 = vrot.lane.b32.xlu0 %v492, 16
        %v827 = vpop.permute.xlu0 %826
        %828 = vrot.lane.b32.xlu0 %v493, 16
        %v829 = vpop.permute.xlu0 %828
        %830 = vrot.lane.b32.xlu0 %v494, 16
        %v831 = vpop.permute.xlu0 %830
        %832 = vrot.lane.b32.xlu0 %v495, 16
        %v833 = vpop.permute.xlu0 %832
        %834 = vrot.lane.b32.xlu0 %v496, 16
        %v835 = vpop.permute.xlu0 %834
        %836 = vrot.lane.b32.xlu0 %v497, 16
        %v837 = vpop.permute.xlu0 %836
        %838 = vrot.lane.b32.xlu0 %v498, 16
        %v839 = vpop.permute.xlu0 %838
        %840 = vrot.lane.b32.xlu0 %v499, 16
        %v841 = vpop.permute.xlu0 %840
        %842 = vrot.lane.b32.xlu0 %v500, 16
        %v843 = vpop.permute.xlu0 %842
        %844 = vrot.lane.b32.xlu0 %v501, 16
        %v845 = vpop.permute.xlu0 %844
        %846 = vrot.lane.b32.xlu0 %v502, 16
        %v847 = vpop.permute.xlu0 %846
        %848 = vrot.lane.b32.xlu0 %v503, 16
        %v849 = vpop.permute.xlu0 %848
        %850 = vrot.lane.b32.xlu0 %v504, 16
        %v851 = vpop.permute.xlu0 %850
        %852 = vrot.lane.b32.xlu0 %v505, 16
        %v853 = vpop.permute.xlu0 %852
        %854 = vrot.lane.b32.xlu0 %v506, 16
        %v855 = vpop.permute.xlu0 %854
        %856 = vrot.lane.b32.xlu0 %v507, 16
        %v857 = vpop.permute.xlu0 %856
        %858 = vrot.lane.b32.xlu0 %v508, 16
        %v859 = vpop.permute.xlu0 %858
        %860 = vrot.lane.b32.xlu0 %v509, 16
        %v861 = vpop.permute.xlu0 %860
        %862 = vrot.lane.b32.xlu0 %v510, 16
        %v863 = vpop.permute.xlu0 %862
        %864 = vrot.lane.b32.xlu0 %v511, 16
        %v865 = vpop.permute.xlu0 %864
        %866 = vrot.lane.b32.xlu0 %v512, 16
        %v867 = vpop.permute.xlu0 %866
        %868 = vrot.lane.b32.xlu0 %v513, 16
        %v869 = vpop.permute.xlu0 %868
        %870 = vrot.lane.b32.xlu0 %v514, 16
        %v871 = vpop.permute.xlu0 %870
        %872 = vrot.lane.b32.xlu0 %v515, 16
        %v873 = vpop.permute.xlu0 %872
        %874 = vrot.lane.b32.xlu0 %v516, 16
        %v875 = vpop.permute.xlu0 %874
        %876 = vrot.lane.b32.xlu0 %v517, 16
        %v877 = vpop.permute.xlu0 %876
        %878 = vrot.lane.b32.xlu0 %v518, 16
        %v879 = vpop.permute.xlu0 %878
        %880 = vrot.lane.b32.xlu0 %v519, 16
        %v881 = vpop.permute.xlu0 %880
        %882 = vrot.lane.b32.xlu0 %v520, 16
        %v883 = vpop.permute.xlu0 %882
        %884 = vrot.lane.b32.xlu0 %v521, 16
        %v885 = vpop.permute.xlu0 %884
        %886 = vrot.lane.b32.xlu0 %v522, 16
        %v887 = vpop.permute.xlu0 %886
        %888 = vrot.lane.b32.xlu0 %v523, 16
        %v889 = vpop.permute.xlu0 %888
        %890 = vrot.lane.b32.xlu0 %v524, 16
        %v891 = vpop.permute.xlu0 %890
        %892 = vrot.lane.b32.xlu0 %v525, 16
        %v893 = vpop.permute.xlu0 %892
        %894 = vrot.lane.b32.xlu0 %v526, 16
        %v895 = vpop.permute.xlu0 %894
        %896 = vrot.lane.b32.xlu0 %v527, 16
        %v897 = vpop.permute.xlu0 %896
        %898 = vrot.lane.b32.xlu0 %v528, 16
        %v899 = vpop.permute.xlu0 %898
        %900 = vrot.lane.b32.xlu0 %v529, 16
        %v901 = vpop.permute.xlu0 %900
        %902 = vrot.lane.b32.xlu0 %v530, 16
        %v903 = vpop.permute.xlu0 %902
        %904 = vrot.lane.b32.xlu0 %v531, 16
        %v905 = vpop.permute.xlu0 %904
        %906 = vrot.lane.b32.xlu0 %v532, 16
        %v907 = vpop.permute.xlu0 %906
        %908 = vrot.lane.b32.xlu0 %v533, 16
        %v909 = vpop.permute.xlu0 %908
        %910 = vrot.lane.b32.xlu0 %v534, 16
        %v911 = vpop.permute.xlu0 %910
        %vm960 = vcmask 195714
        %961 = vst.msk [vmem:[#allocation4 - $0x2] sm:$0xfc] %vm960, %v817
        %vm962 = vcmask 195712
        %963 = vst.msk [vmem:[#allocation4 + $0x6] sm:$0xff] %vm962, %v819
        %vm964 = vcmask 189568
        %965 = vst.msk [vmem:[#allocation4 + $0xe] sm:$0x3] %vm964, %v821
        %966 = vst.msk [vmem:[#allocation4 + $0xe] sm:$0xfc] %vm960, %v823
        %967 = vst.msk [vmem:[#allocation4 + $0x16] sm:$0xff] %vm962, %v825
        %968 = vst.msk [vmem:[#allocation4 + $0x1e] sm:$0x3] %vm964, %v827
        %969 = vst.msk [vmem:[#allocation4 + $0x1e] sm:$0xfc] %vm960, %v829
        %970 = vst.msk [vmem:[#allocation4 + $0x26] sm:$0xff] %vm962, %v831
        %971 = vst.msk [vmem:[#allocation4 + $0x2e] sm:$0x3] %vm964, %v833
        %972 = vst.msk [vmem:[#allocation4 + $0x2e] sm:$0xfc] %vm960, %v835
        %973 = vst.msk [vmem:[#allocation4 + $0x36] sm:$0xff] %vm962, %v837
        %974 = vst.msk [vmem:[#allocation4 + $0x3e] sm:$0x3] %vm964, %v839
        %975 = vst.msk [vmem:[#allocation4 + $0x3e] sm:$0xfc] %vm960, %v841
        %976 = vst.msk [vmem:[#allocation4 + $0x46] sm:$0xff] %vm962, %v843
        %977 = vst.msk [vmem:[#allocation4 + $0x4e] sm:$0x3] %vm964, %v845
        %978 = vst.msk [vmem:[#allocation4 + $0x4e] sm:$0xfc] %vm960, %v847
        %979 = vst.msk [vmem:[#allocation4 + $0x56] sm:$0xff] %vm962, %v849
        %980 = vst.msk [vmem:[#allocation4 + $0x5e] sm:$0x3] %vm964, %v851
        %981 = vst.msk [vmem:[#allocation4 + $0x5e] sm:$0xfc] %vm960, %v853
        %982 = vst.msk [vmem:[#allocation4 + $0x66] sm:$0xff] %vm962, %v855
        %983 = vst.msk [vmem:[#allocation4 + $0x6e] sm:$0x3] %vm964, %v857
        %984 = vst.msk [vmem:[#allocation4 + $0x6e] sm:$0xfc] %vm960, %v859
        %985 = vst.msk [vmem:[#allocation4 + $0x76] sm:$0xff] %vm962, %v861
        %986 = vst.msk [vmem:[#allocation4 + $0x7e] sm:$0x3] %vm964, %v863
        %987 = vst.msk [vmem:[#allocation4 + $0x7e] sm:$0xfc] %vm960, %v865
        %988 = vst.msk [vmem:[#allocation4 + $0x86] sm:$0xff] %vm962, %v867
        %989 = vst.msk [vmem:[#allocation4 + $0x8e] sm:$0x3] %vm964, %v869
        %990 = vst.msk [vmem:[#allocation4 + $0x8e] sm:$0xfc] %vm960, %v871
        %991 = vst.msk [vmem:[#allocation4 + $0x96] sm:$0xff] %vm962, %v873
        %992 = vst.msk [vmem:[#allocation4 + $0x9e] sm:$0x3] %vm964, %v875
        %993 = vst.msk [vmem:[#allocation4 + $0x9e] sm:$0xfc] %vm960, %v877
        %994 = vst.msk [vmem:[#allocation4 + $0xa6] sm:$0xff] %vm962, %v879
        %995 = vst.msk [vmem:[#allocation4 + $0xae] sm:$0x3] %vm964, %v881
        %996 = vst.msk [vmem:[#allocation4 + $0xae] sm:$0xfc] %vm960, %v883
        %997 = vst.msk [vmem:[#allocation4 + $0xb6] sm:$0xff] %vm962, %v885
        %998 = vst.msk [vmem:[#allocation4 + $0xbe] sm:$0x3] %vm964, %v887
        %999 = vst.msk [vmem:[#allocation4 + $0xbe] sm:$0xfc] %vm960, %v889
        %1000 = vst.msk [vmem:[#allocation4 + $0xc6] sm:$0xff] %vm962, %v891
        %1001 = vst.msk [vmem:[#allocation4 + $0xce] sm:$0x3] %vm964, %v893
        %1002 = vst.msk [vmem:[#allocation4 + $0xce] sm:$0xfc] %vm960, %v895
        %1003 = vst.msk [vmem:[#allocation4 + $0xd6] sm:$0xff] %vm962, %v897
        %1004 = vst.msk [vmem:[#allocation4 + $0xde] sm:$0x3] %vm964, %v899
        %1005 = vst.msk [vmem:[#allocation4 + $0xde] sm:$0xfc] %vm960, %v901
        %1006 = vst.msk [vmem:[#allocation4 + $0xe6] sm:$0xff] %vm962, %v903
        %1007 = vst.msk [vmem:[#allocation4 + $0xee] sm:$0x3] %vm964, %v905
        %1008 = vst.msk [vmem:[#allocation4 + $0xee] sm:$0xfc] %vm960, %v907
        %1009 = vst.msk [vmem:[#allocation4 + $0xf6] sm:$0xff] %vm962, %v909
        %1010 = vst.msk [vmem:[#allocation4 + $0xfe] sm:$0x3] %vm964, %v911
        %1013 = vrot.lane.b32.xlu0 %v490, 24
        %v1014 = vpop.permute.xlu0 %1013
        %1015 = vrot.lane.b32.xlu0 %v491, 24
        %v1016 = vpop.permute.xlu0 %1015
        %1017 = vrot.lane.b32.xlu0 %v493, 24
        %v1018 = vpop.permute.xlu0 %1017
        %1019 = vrot.lane.b32.xlu0 %v494, 24
        %v1020 = vpop.permute.xlu0 %1019
        %1021 = vrot.lane.b32.xlu0 %v496, 24
        %v1022 = vpop.permute.xlu0 %1021
        %1023 = vrot.lane.b32.xlu0 %v497, 24
        %v1024 = vpop.permute.xlu0 %1023
        %1025 = vrot.lane.b32.xlu0 %v499, 24
        %v1026 = vpop.permute.xlu0 %1025
        %1027 = vrot.lane.b32.xlu0 %v500, 24
        %v1028 = vpop.permute.xlu0 %1027
        %1029 = vrot.lane.b32.xlu0 %v502, 24
        %v1030 = vpop.permute.xlu0 %1029
        %1031 = vrot.lane.b32.xlu0 %v503, 24
        %v1032 = vpop.permute.xlu0 %1031
        %1033 = vrot.lane.b32.xlu0 %v505, 24
        %v1034 = vpop.permute.xlu0 %1033
        %1035 = vrot.lane.b32.xlu0 %v506, 24
        %v1036 = vpop.permute.xlu0 %1035
        %1037 = vrot.lane.b32.xlu0 %v508, 24
        %v1038 = vpop.permute.xlu0 %1037
        %1039 = vrot.lane.b32.xlu0 %v509, 24
        %v1040 = vpop.permute.xlu0 %1039
        %1041 = vrot.lane.b32.xlu0 %v511, 24
        %v1042 = vpop.permute.xlu0 %1041
        %1043 = vrot.lane.b32.xlu0 %v512, 24
        %v1044 = vpop.permute.xlu0 %1043
        %1045 = vrot.lane.b32.xlu0 %v514, 24
        %v1046 = vpop.permute.xlu0 %1045
        %1047 = vrot.lane.b32.xlu0 %v515, 24
        %v1048 = vpop.permute.xlu0 %1047
        %1049 = vrot.lane.b32.xlu0 %v517, 24
        %v1050 = vpop.permute.xlu0 %1049
        %1051 = vrot.lane.b32.xlu0 %v518, 24
        %v1052 = vpop.permute.xlu0 %1051
        %1053 = vrot.lane.b32.xlu0 %v520, 24
        %v1054 = vpop.permute.xlu0 %1053
        %1055 = vrot.lane.b32.xlu0 %v521, 24
        %v1056 = vpop.permute.xlu0 %1055
        %1057 = vrot.lane.b32.xlu0 %v523, 24
        %v1058 = vpop.permute.xlu0 %1057
        %1059 = vrot.lane.b32.xlu0 %v524, 24
        %v1060 = vpop.permute.xlu0 %1059
        %1061 = vrot.lane.b32.xlu0 %v526, 24
        %v1062 = vpop.permute.xlu0 %1061
        %1063 = vrot.lane.b32.xlu0 %v527, 24
        %v1064 = vpop.permute.xlu0 %1063
        %1065 = vrot.lane.b32.xlu0 %v529, 24
        %v1066 = vpop.permute.xlu0 %1065
        %1067 = vrot.lane.b32.xlu0 %v530, 24
        %v1068 = vpop.permute.xlu0 %1067
        %1069 = vrot.lane.b32.xlu0 %v532, 24
        %v1070 = vpop.permute.xlu0 %1069
        %1071 = vrot.lane.b32.xlu0 %v533, 24
        %v1072 = vpop.permute.xlu0 %1071
        %1073 = vrot.lane.b32.xlu0 %v535, 24
        %v1074 = vpop.permute.xlu0 %1073
        %1075 = vrot.lane.b32.xlu0 %v536, 24
        %v1076 = vpop.permute.xlu0 %1075
        %vm1109 = vcmask 261312
        %1110 = vst.msk [vmem:[#allocation4] sm:$0xff] %vm1109, %v1014
        %1111 = vst.msk [vmem:[#allocation4 + $0x8] sm:$0xff] %vm1109, %v1016
        %1112 = vst.msk [vmem:[#allocation4 + $0x10] sm:$0xff] %vm1109, %v1018
        %1113 = vst.msk [vmem:[#allocation4 + $0x18] sm:$0xff] %vm1109, %v1020
        %1114 = vst.msk [vmem:[#allocation4 + $0x20] sm:$0xff] %vm1109, %v1022
        %1115 = vst.msk [vmem:[#allocation4 + $0x28] sm:$0xff] %vm1109, %v1024
        %1116 = vst.msk [vmem:[#allocation4 + $0x30] sm:$0xff] %vm1109, %v1026
        %1117 = vst.msk [vmem:[#allocation4 + $0x38] sm:$0xff] %vm1109, %v1028
        %1118 = vst.msk [vmem:[#allocation4 + $0x40] sm:$0xff] %vm1109, %v1030
        %1119 = vst.msk [vmem:[#allocation4 + $0x48] sm:$0xff] %vm1109, %v1032
        %1120 = vst.msk [vmem:[#allocation4 + $0x50] sm:$0xff] %vm1109, %v1034
        %1121 = vst.msk [vmem:[#allocation4 + $0x58] sm:$0xff] %vm1109, %v1036
        %1122 = vst.msk [vmem:[#allocation4 + $0x60] sm:$0xff] %vm1109, %v1038
        %1123 = vst.msk [vmem:[#allocation4 + $0x68] sm:$0xff] %vm1109, %v1040
        %1124 = vst.msk [vmem:[#allocation4 + $0x70] sm:$0xff] %vm1109, %v1042
        %1125 = vst.msk [vmem:[#allocation4 + $0x78] sm:$0xff] %vm1109, %v1044
        %1126 = vst.msk [vmem:[#allocation4 + $0x80] sm:$0xff] %vm1109, %v1046
        %1127 = vst.msk [vmem:[#allocation4 + $0x88] sm:$0xff] %vm1109, %v1048
        %1128 = vst.msk [vmem:[#allocation4 + $0x90] sm:$0xff] %vm1109, %v1050
        %1129 = vst.msk [vmem:[#allocation4 + $0x98] sm:$0xff] %vm1109, %v1052
        %1130 = vst.msk [vmem:[#allocation4 + $0xa0] sm:$0xff] %vm1109, %v1054
        %1131 = vst.msk [vmem:[#allocation4 + $0xa8] sm:$0xff] %vm1109, %v1056
        %1132 = vst.msk [vmem:[#allocation4 + $0xb0] sm:$0xff] %vm1109, %v1058
        %1133 = vst.msk [vmem:[#allocation4 + $0xb8] sm:$0xff] %vm1109, %v1060
        %1134 = vst.msk [vmem:[#allocation4 + $0xc0] sm:$0xff] %vm1109, %v1062
        %1135 = vst.msk [vmem:[#allocation4 + $0xc8] sm:$0xff] %vm1109, %v1064
        %1136 = vst.msk [vmem:[#allocation4 + $0xd0] sm:$0xff] %vm1109, %v1066
        %1137 = vst.msk [vmem:[#allocation4 + $0xd8] sm:$0xff] %vm1109, %v1068
        %1138 = vst.msk [vmem:[#allocation4 + $0xe0] sm:$0xff] %vm1109, %v1070
        %1139 = vst.msk [vmem:[#allocation4 + $0xe8] sm:$0xff] %vm1109, %v1072
        %1140 = vst.msk [vmem:[#allocation4 + $0xf0] sm:$0xff] %vm1109, %v1074
        %1141 = vst.msk [vmem:[#allocation4 + $0xf8] sm:$0xff] %vm1109, %v1076
        %1143 = vrot.lane.b32.xlu0 %v490, 32
        %v1144 = vpop.permute.xlu0 %1143
        %1145 = vrot.lane.b32.xlu0 %v491, 32
        %v1146 = vpop.permute.xlu0 %1145
        %1147 = vrot.lane.b32.xlu0 %v492, 32
        %v1148 = vpop.permute.xlu0 %1147
        %1149 = vrot.lane.b32.xlu0 %v493, 32
        %v1150 = vpop.permute.xlu0 %1149
        %1151 = vrot.lane.b32.xlu0 %v494, 32
        %v1152 = vpop.permute.xlu0 %1151
        %1153 = vrot.lane.b32.xlu0 %v495, 32
        %v1154 = vpop.permute.xlu0 %1153
        %1155 = vrot.lane.b32.xlu0 %v496, 32
        %v1156 = vpop.permute.xlu0 %1155
        %1157 = vrot.lane.b32.xlu0 %v497, 32
        %v1158 = vpop.permute.xlu0 %1157
        %1159 = vrot.lane.b32.xlu0 %v498, 32
        %v1160 = vpop.permute.xlu0 %1159
        %1161 = vrot.lane.b32.xlu0 %v499, 32
        %v1162 = vpop.permute.xlu0 %1161
        %1163 = vrot.lane.b32.xlu0 %v500, 32
        %v1164 = vpop.permute.xlu0 %1163
        %1165 = vrot.lane.b32.xlu0 %v501, 32
        %v1166 = vpop.permute.xlu0 %1165
        %1167 = vrot.lane.b32.xlu0 %v502, 32
        %v1168 = vpop.permute.xlu0 %1167
        %1169 = vrot.lane.b32.xlu0 %v503, 32
        %v1170 = vpop.permute.xlu0 %1169
        %1171 = vrot.lane.b32.xlu0 %v504, 32
        %v1172 = vpop.permute.xlu0 %1171
        %1173 = vrot.lane.b32.xlu0 %v505, 32
        %v1174 = vpop.permute.xlu0 %1173
        %1175 = vrot.lane.b32.xlu0 %v506, 32
        %v1176 = vpop.permute.xlu0 %1175
        %1177 = vrot.lane.b32.xlu0 %v507, 32
        %v1178 = vpop.permute.xlu0 %1177
        %1179 = vrot.lane.b32.xlu0 %v508, 32
        %v1180 = vpop.permute.xlu0 %1179
        %1181 = vrot.lane.b32.xlu0 %v509, 32
        %v1182 = vpop.permute.xlu0 %1181
        %1183 = vrot.lane.b32.xlu0 %v510, 32
        %v1184 = vpop.permute.xlu0 %1183
        %1185 = vrot.lane.b32.xlu0 %v511, 32
        %v1186 = vpop.permute.xlu0 %1185
        %1187 = vrot.lane.b32.xlu0 %v512, 32
        %v1188 = vpop.permute.xlu0 %1187
        %1189 = vrot.lane.b32.xlu0 %v513, 32
        %v1190 = vpop.permute.xlu0 %1189
        %1191 = vrot.lane.b32.xlu0 %v514, 32
        %v1192 = vpop.permute.xlu0 %1191
        %1193 = vrot.lane.b32.xlu0 %v515, 32
        %v1194 = vpop.permute.xlu0 %1193
        %1195 = vrot.lane.b32.xlu0 %v516, 32
        %v1196 = vpop.permute.xlu0 %1195
        %1197 = vrot.lane.b32.xlu0 %v517, 32
        %v1198 = vpop.permute.xlu0 %1197
        %1199 = vrot.lane.b32.xlu0 %v518, 32
        %v1200 = vpop.permute.xlu0 %1199
        %1201 = vrot.lane.b32.xlu0 %v519, 32
        %v1202 = vpop.permute.xlu0 %1201
        %1203 = vrot.lane.b32.xlu0 %v520, 32
        %v1204 = vpop.permute.xlu0 %1203
        %1205 = vrot.lane.b32.xlu0 %v521, 32
        %v1206 = vpop.permute.xlu0 %1205
        %1207 = vrot.lane.b32.xlu0 %v522, 32
        %v1208 = vpop.permute.xlu0 %1207
        %1209 = vrot.lane.b32.xlu0 %v523, 32
        %v1210 = vpop.permute.xlu0 %1209
        %1211 = vrot.lane.b32.xlu0 %v524, 32
        %v1212 = vpop.permute.xlu0 %1211
        %1213 = vrot.lane.b32.xlu0 %v525, 32
        %v1214 = vpop.permute.xlu0 %1213
        %1215 = vrot.lane.b32.xlu0 %v526, 32
        %v1216 = vpop.permute.xlu0 %1215
        %1217 = vrot.lane.b32.xlu0 %v527, 32
        %v1218 = vpop.permute.xlu0 %1217
        %1219 = vrot.lane.b32.xlu0 %v528, 32
        %v1220 = vpop.permute.xlu0 %1219
        %1221 = vrot.lane.b32.xlu0 %v529, 32
        %v1222 = vpop.permute.xlu0 %1221
        %1223 = vrot.lane.b32.xlu0 %v530, 32
        %v1224 = vpop.permute.xlu0 %1223
        %1225 = vrot.lane.b32.xlu0 %v531, 32
        %v1226 = vpop.permute.xlu0 %1225
        %1227 = vrot.lane.b32.xlu0 %v532, 32
        %v1228 = vpop.permute.xlu0 %1227
        %1229 = vrot.lane.b32.xlu0 %v533, 32
        %v1230 = vpop.permute.xlu0 %1229
        %1231 = vrot.lane.b32.xlu0 %v534, 32
        %v1232 = vpop.permute.xlu0 %1231
        %1233 = vrot.lane.b32.xlu0 %v535, 32
        %v1234 = vpop.permute.xlu0 %1233
        %1235 = vrot.lane.b32.xlu0 %v536, 32
        %v1236 = vpop.permute.xlu0 %1235
        %1237 = vrot.lane.b32.xlu0 %v537, 32
        %v1238 = vpop.permute.xlu0 %1237
        %vm1287 = vcmask 326913
        %1288 = vst.msk [vmem:[#allocation4 - $0x1] sm:$0xfe] %vm1287, %v1144
        %vm1289 = vcmask 326912
        %1290 = vst.msk [vmem:[#allocation4 + $0x7] sm:$0xff] %vm1289, %v1146
        %vm1291 = vcmask 319744
        %1292 = vst.msk [vmem:[#allocation4 + $0xf] sm:$0x1] %vm1291, %v1148
        %1293 = vst.msk [vmem:[#allocation4 + $0xf] sm:$0xfe] %vm1287, %v1150
        %1294 = vst.msk [vmem:[#allocation4 + $0x17] sm:$0xff] %vm1289, %v1152
        %1295 = vst.msk [vmem:[#allocation4 + $0x1f] sm:$0x1] %vm1291, %v1154
        %1296 = vst.msk [vmem:[#allocation4 + $0x1f] sm:$0xfe] %vm1287, %v1156
        %1297 = vst.msk [vmem:[#allocation4 + $0x27] sm:$0xff] %vm1289, %v1158
        %1298 = vst.msk [vmem:[#allocation4 + $0x2f] sm:$0x1] %vm1291, %v1160
        %1299 = vst.msk [vmem:[#allocation4 + $0x2f] sm:$0xfe] %vm1287, %v1162
        %1300 = vst.msk [vmem:[#allocation4 + $0x37] sm:$0xff] %vm1289, %v1164
        %1301 = vst.msk [vmem:[#allocation4 + $0x3f] sm:$0x1] %vm1291, %v1166
        %1302 = vst.msk [vmem:[#allocation4 + $0x3f] sm:$0xfe] %vm1287, %v1168
        %1303 = vst.msk [vmem:[#allocation4 + $0x47] sm:$0xff] %vm1289, %v1170
        %1304 = vst.msk [vmem:[#allocation4 + $0x4f] sm:$0x1] %vm1291, %v1172
        %1305 = vst.msk [vmem:[#allocation4 + $0x4f] sm:$0xfe] %vm1287, %v1174
        %1306 = vst.msk [vmem:[#allocation4 + $0x57] sm:$0xff] %vm1289, %v1176
        %1307 = vst.msk [vmem:[#allocation4 + $0x5f] sm:$0x1] %vm1291, %v1178
        %1308 = vst.msk [vmem:[#allocation4 + $0x5f] sm:$0xfe] %vm1287, %v1180
        %1309 = vst.msk [vmem:[#allocation4 + $0x67] sm:$0xff] %vm1289, %v1182
        %1310 = vst.msk [vmem:[#allocation4 + $0x6f] sm:$0x1] %vm1291, %v1184
        %1311 = vst.msk [vmem:[#allocation4 + $0x6f] sm:$0xfe] %vm1287, %v1186
        %1312 = vst.msk [vmem:[#allocation4 + $0x77] sm:$0xff] %vm1289, %v1188
        %1313 = vst.msk [vmem:[#allocation4 + $0x7f] sm:$0x1] %vm1291, %v1190
        %1314 = vst.msk [vmem:[#allocation4 + $0x7f] sm:$0xfe] %vm1287, %v1192
        %1315 = vst.msk [vmem:[#allocation4 + $0x87] sm:$0xff] %vm1289, %v1194
        %1316 = vst.msk [vmem:[#allocation4 + $0x8f] sm:$0x1] %vm1291, %v1196
        %1317 = vst.msk [vmem:[#allocation4 + $0x8f] sm:$0xfe] %vm1287, %v1198
        %1318 = vst.msk [vmem:[#allocation4 + $0x97] sm:$0xff] %vm1289, %v1200
        %1319 = vst.msk [vmem:[#allocation4 + $0x9f] sm:$0x1] %vm1291, %v1202
        %1320 = vst.msk [vmem:[#allocation4 + $0x9f] sm:$0xfe] %vm1287, %v1204
        %1321 = vst.msk [vmem:[#allocation4 + $0xa7] sm:$0xff] %vm1289, %v1206
        %1322 = vst.msk [vmem:[#allocation4 + $0xaf] sm:$0x1] %vm1291, %v1208
        %1323 = vst.msk [vmem:[#allocation4 + $0xaf] sm:$0xfe] %vm1287, %v1210
        %1324 = vst.msk [vmem:[#allocation4 + $0xb7] sm:$0xff] %vm1289, %v1212
        %1325 = vst.msk [vmem:[#allocation4 + $0xbf] sm:$0x1] %vm1291, %v1214
        %1326 = vst.msk [vmem:[#allocation4 + $0xbf] sm:$0xfe] %vm1287, %v1216
        %1327 = vst.msk [vmem:[#allocation4 + $0xc7] sm:$0xff] %vm1289, %v1218
        %1328 = vst.msk [vmem:[#allocation4 + $0xcf] sm:$0x1] %vm1291, %v1220
        %1329 = vst.msk [vmem:[#allocation4 + $0xcf] sm:$0xfe] %vm1287, %v1222
        %1330 = vst.msk [vmem:[#allocation4 + $0xd7] sm:$0xff] %vm1289, %v1224
        %1331 = vst.msk [vmem:[#allocation4 + $0xdf] sm:$0x1] %vm1291, %v1226
        %1332 = vst.msk [vmem:[#allocation4 + $0xdf] sm:$0xfe] %vm1287, %v1228
        %1333 = vst.msk [vmem:[#allocation4 + $0xe7] sm:$0xff] %vm1289, %v1230
        %1334 = vst.msk [vmem:[#allocation4 + $0xef] sm:$0x1] %vm1291, %v1232
        %1335 = vst.msk [vmem:[#allocation4 + $0xef] sm:$0xfe] %vm1287, %v1234
        %1336 = vst.msk [vmem:[#allocation4 + $0xf7] sm:$0xff] %vm1289, %v1236
        %1337 = vst.msk [vmem:[#allocation4 + $0xff] sm:$0x1] %vm1291, %v1238
        %1338 = vrot.lane.b32.xlu0 %v490, 40
        %v1339 = vpop.permute.xlu0 %1338
        %1340 = vrot.lane.b32.xlu0 %v491, 40
        %v1341 = vpop.permute.xlu0 %1340
        %1342 = vrot.lane.b32.xlu0 %v492, 40
        %v1343 = vpop.permute.xlu0 %1342
        %1344 = vrot.lane.b32.xlu0 %v493, 40
        %v1345 = vpop.permute.xlu0 %1344
        %1346 = vrot.lane.b32.xlu0 %v494, 40
        %v1347 = vpop.permute.xlu0 %1346
        %1348 = vrot.lane.b32.xlu0 %v495, 40
        %v1349 = vpop.permute.xlu0 %1348
        %1350 = vrot.lane.b32.xlu0 %v496, 40
        %v1351 = vpop.permute.xlu0 %1350
        %1352 = vrot.lane.b32.xlu0 %v497, 40
        %v1353 = vpop.permute.xlu0 %1352
        %1354 = vrot.lane.b32.xlu0 %v498, 40
        %v1355 = vpop.permute.xlu0 %1354
        %1356 = vrot.lane.b32.xlu0 %v499, 40
        %v1357 = vpop.permute.xlu0 %1356
        %1358 = vrot.lane.b32.xlu0 %v500, 40
        %v1359 = vpop.permute.xlu0 %1358
        %1360 = vrot.lane.b32.xlu0 %v501, 40
        %v1361 = vpop.permute.xlu0 %1360
        %1362 = vrot.lane.b32.xlu0 %v502, 40
        %v1363 = vpop.permute.xlu0 %1362
        %1364 = vrot.lane.b32.xlu0 %v503, 40
        %v1365 = vpop.permute.xlu0 %1364
        %1366 = vrot.lane.b32.xlu0 %v504, 40
        %v1367 = vpop.permute.xlu0 %1366
        %1368 = vrot.lane.b32.xlu0 %v505, 40
        %v1369 = vpop.permute.xlu0 %1368
        %1370 = vrot.lane.b32.xlu0 %v506, 40
        %v1371 = vpop.permute.xlu0 %1370
        %1372 = vrot.lane.b32.xlu0 %v507, 40
        %v1373 = vpop.permute.xlu0 %1372
        %1374 = vrot.lane.b32.xlu0 %v508, 40
        %v1375 = vpop.permute.xlu0 %1374
        %1376 = vrot.lane.b32.xlu0 %v509, 40
        %v1377 = vpop.permute.xlu0 %1376
        %1378 = vrot.lane.b32.xlu0 %v510, 40
        %v1379 = vpop.permute.xlu0 %1378
        %1380 = vrot.lane.b32.xlu0 %v511, 40
        %v1381 = vpop.permute.xlu0 %1380
        %1382 = vrot.lane.b32.xlu0 %v512, 40
        %v1383 = vpop.permute.xlu0 %1382
        %1384 = vrot.lane.b32.xlu0 %v513, 40
        %v1385 = vpop.permute.xlu0 %1384
        %1386 = vrot.lane.b32.xlu0 %v514, 40
        %v1387 = vpop.permute.xlu0 %1386
        %1388 = vrot.lane.b32.xlu0 %v515, 40
        %v1389 = vpop.permute.xlu0 %1388
        %1390 = vrot.lane.b32.xlu0 %v516, 40
        %v1391 = vpop.permute.xlu0 %1390
        %1392 = vrot.lane.b32.xlu0 %v517, 40
        %v1393 = vpop.permute.xlu0 %1392
        %1394 = vrot.lane.b32.xlu0 %v518, 40
        %v1395 = vpop.permute.xlu0 %1394
        %1396 = vrot.lane.b32.xlu0 %v519, 40
        %v1397 = vpop.permute.xlu0 %1396
        %1398 = vrot.lane.b32.xlu0 %v520, 40
        %v1399 = vpop.permute.xlu0 %1398
        %1400 = vrot.lane.b32.xlu0 %v521, 40
        %v1401 = vpop.permute.xlu0 %1400
        %1402 = vrot.lane.b32.xlu0 %v522, 40
        %v1403 = vpop.permute.xlu0 %1402
        %1404 = vrot.lane.b32.xlu0 %v523, 40
        %v1405 = vpop.permute.xlu0 %1404
        %1406 = vrot.lane.b32.xlu0 %v524, 40
        %v1407 = vpop.permute.xlu0 %1406
        %1408 = vrot.lane.b32.xlu0 %v525, 40
        %v1409 = vpop.permute.xlu0 %1408
        %1410 = vrot.lane.b32.xlu0 %v526, 40
        %v1411 = vpop.permute.xlu0 %1410
        %1412 = vrot.lane.b32.xlu0 %v527, 40
        %v1413 = vpop.permute.xlu0 %1412
        %1414 = vrot.lane.b32.xlu0 %v528, 40
        %v1415 = vpop.permute.xlu0 %1414
        %1416 = vrot.lane.b32.xlu0 %v529, 40
        %v1417 = vpop.permute.xlu0 %1416
        %1418 = vrot.lane.b32.xlu0 %v530, 40
        %v1419 = vpop.permute.xlu0 %1418
        %1420 = vrot.lane.b32.xlu0 %v531, 40
        %v1421 = vpop.permute.xlu0 %1420
        %1422 = vrot.lane.b32.xlu0 %v532, 40
        %v1423 = vpop.permute.xlu0 %1422
        %1424 = vrot.lane.b32.xlu0 %v533, 40
        %v1425 = vpop.permute.xlu0 %1424
        %1426 = vrot.lane.b32.xlu0 %v534, 40
        %v1427 = vpop.permute.xlu0 %1426
        %1428 = vrot.lane.b32.xlu0 %v535, 40
        %v1429 = vpop.permute.xlu0 %1428
        %1430 = vrot.lane.b32.xlu0 %v536, 40
        %v1431 = vpop.permute.xlu0 %1430
        %1432 = vrot.lane.b32.xlu0 %v537, 40
        %v1433 = vpop.permute.xlu0 %1432
        %vm1482 = vcmask 392514
        %1483 = vst.msk [vmem:[#allocation4 - $0x2] sm:$0xfc] %vm1482, %v1339
        %vm1484 = vcmask 392512
        %1485 = vst.msk [vmem:[#allocation4 + $0x6] sm:$0xff] %vm1484, %v1341
        %vm1486 = vcmask 386368
        %1487 = vst.msk [vmem:[#allocation4 + $0xe] sm:$0x3] %vm1486, %v1343
        %1488 = vst.msk [vmem:[#allocation4 + $0xe] sm:$0xfc] %vm1482, %v1345
        %1489 = vst.msk [vmem:[#allocation4 + $0x16] sm:$0xff] %vm1484, %v1347
        %1490 = vst.msk [vmem:[#allocation4 + $0x1e] sm:$0x3] %vm1486, %v1349
        %1491 = vst.msk [vmem:[#allocation4 + $0x1e] sm:$0xfc] %vm1482, %v1351
        %1492 = vst.msk [vmem:[#allocation4 + $0x26] sm:$0xff] %vm1484, %v1353
        %1493 = vst.msk [vmem:[#allocation4 + $0x2e] sm:$0x3] %vm1486, %v1355
        %1494 = vst.msk [vmem:[#allocation4 + $0x2e] sm:$0xfc] %vm1482, %v1357
        %1495 = vst.msk [vmem:[#allocation4 + $0x36] sm:$0xff] %vm1484, %v1359
        %1496 = vst.msk [vmem:[#allocation4 + $0x3e] sm:$0x3] %vm1486, %v1361
        %1497 = vst.msk [vmem:[#allocation4 + $0x3e] sm:$0xfc] %vm1482, %v1363
        %1498 = vst.msk [vmem:[#allocation4 + $0x46] sm:$0xff] %vm1484, %v1365
        %1499 = vst.msk [vmem:[#allocation4 + $0x4e] sm:$0x3] %vm1486, %v1367
        %1500 = vst.msk [vmem:[#allocation4 + $0x4e] sm:$0xfc] %vm1482, %v1369
        %1501 = vst.msk [vmem:[#allocation4 + $0x56] sm:$0xff] %vm1484, %v1371
        %1502 = vst.msk [vmem:[#allocation4 + $0x5e] sm:$0x3] %vm1486, %v1373
        %1503 = vst.msk [vmem:[#allocation4 + $0x5e] sm:$0xfc] %vm1482, %v1375
        %1504 = vst.msk [vmem:[#allocation4 + $0x66] sm:$0xff] %vm1484, %v1377
        %1505 = vst.msk [vmem:[#allocation4 + $0x6e] sm:$0x3] %vm1486, %v1379
        %1506 = vst.msk [vmem:[#allocation4 + $0x6e] sm:$0xfc] %vm1482, %v1381
        %1507 = vst.msk [vmem:[#allocation4 + $0x76] sm:$0xff] %vm1484, %v1383
        %1508 = vst.msk [vmem:[#allocation4 + $0x7e] sm:$0x3] %vm1486, %v1385
        %1509 = vst.msk [vmem:[#allocation4 + $0x7e] sm:$0xfc] %vm1482, %v1387
        %1510 = vst.msk [vmem:[#allocation4 + $0x86] sm:$0xff] %vm1484, %v1389
        %1511 = vst.msk [vmem:[#allocation4 + $0x8e] sm:$0x3] %vm1486, %v1391
        %1512 = vst.msk [vmem:[#allocation4 + $0x8e] sm:$0xfc] %vm1482, %v1393
        %1513 = vst.msk [vmem:[#allocation4 + $0x96] sm:$0xff] %vm1484, %v1395
        %1514 = vst.msk [vmem:[#allocation4 + $0x9e] sm:$0x3] %vm1486, %v1397
        %1515 = vst.msk [vmem:[#allocation4 + $0x9e] sm:$0xfc] %vm1482, %v1399
        %1516 = vst.msk [vmem:[#allocation4 + $0xa6] sm:$0xff] %vm1484, %v1401
        %1517 = vst.msk [vmem:[#allocation4 + $0xae] sm:$0x3] %vm1486, %v1403
        %1518 = vst.msk [vmem:[#allocation4 + $0xae] sm:$0xfc] %vm1482, %v1405
        %1519 = vst.msk [vmem:[#allocation4 + $0xb6] sm:$0xff] %vm1484, %v1407
        %1520 = vst.msk [vmem:[#allocation4 + $0xbe] sm:$0x3] %vm1486, %v1409
        %1521 = vst.msk [vmem:[#allocation4 + $0xbe] sm:$0xfc] %vm1482, %v1411
        %1522 = vst.msk [vmem:[#allocation4 + $0xc6] sm:$0xff] %vm1484, %v1413
        %1523 = vst.msk [vmem:[#allocation4 + $0xce] sm:$0x3] %vm1486, %v1415
        %1524 = vst.msk [vmem:[#allocation4 + $0xce] sm:$0xfc] %vm1482, %v1417
        %1525 = vst.msk [vmem:[#allocation4 + $0xd6] sm:$0xff] %vm1484, %v1419
        %1526 = vst.msk [vmem:[#allocation4 + $0xde] sm:$0x3] %vm1486, %v1421
        %1527 = vst.msk [vmem:[#allocation4 + $0xde] sm:$0xfc] %vm1482, %v1423
        %1528 = vst.msk [vmem:[#allocation4 + $0xe6] sm:$0xff] %vm1484, %v1425
        %1529 = vst.msk [vmem:[#allocation4 + $0xee] sm:$0x3] %vm1486, %v1427
        %1530 = vst.msk [vmem:[#allocation4 + $0xee] sm:$0xfc] %vm1482, %v1429
        %1531 = vst.msk [vmem:[#allocation4 + $0xf6] sm:$0xff] %vm1484, %v1431
        %1532 = vst.msk [vmem:[#allocation4 + $0xfe] sm:$0x3] %vm1486, %v1433
        %1535 = vrot.lane.b32.xlu0 %v493, 48
        %v1536 = vpop.permute.xlu0 %1535
        %1537 = vrot.lane.b32.xlu0 %v494, 48
        %v1538 = vpop.permute.xlu0 %1537
        %1539 = vrot.lane.b32.xlu0 %v496, 48
        %v1540 = vpop.permute.xlu0 %1539
        %1541 = vrot.lane.b32.xlu0 %v497, 48
        %v1542 = vpop.permute.xlu0 %1541
        %1543 = vrot.lane.b32.xlu0 %v499, 48
        %v1544 = vpop.permute.xlu0 %1543
        %1545 = vrot.lane.b32.xlu0 %v500, 48
        %v1546 = vpop.permute.xlu0 %1545
        %1547 = vrot.lane.b32.xlu0 %v502, 48
        %v1548 = vpop.permute.xlu0 %1547
        %1549 = vrot.lane.b32.xlu0 %v503, 48
        %v1550 = vpop.permute.xlu0 %1549
        %1551 = vrot.lane.b32.xlu0 %v505, 48
        %v1552 = vpop.permute.xlu0 %1551
        %1553 = vrot.lane.b32.xlu0 %v506, 48
        %v1554 = vpop.permute.xlu0 %1553
        %1555 = vrot.lane.b32.xlu0 %v508, 48
        %v1556 = vpop.permute.xlu0 %1555
        %1557 = vrot.lane.b32.xlu0 %v509, 48
        %v1558 = vpop.permute.xlu0 %1557
        %1559 = vrot.lane.b32.xlu0 %v511, 48
        %v1560 = vpop.permute.xlu0 %1559
        %1561 = vrot.lane.b32.xlu0 %v512, 48
        %v1562 = vpop.permute.xlu0 %1561
        %1563 = vrot.lane.b32.xlu0 %v514, 48
        %v1564 = vpop.permute.xlu0 %1563
        %1565 = vrot.lane.b32.xlu0 %v515, 48
        %v1566 = vpop.permute.xlu0 %1565
        %1567 = vrot.lane.b32.xlu0 %v517, 48
        %v1568 = vpop.permute.xlu0 %1567
        %1569 = vrot.lane.b32.xlu0 %v518, 48
        %v1570 = vpop.permute.xlu0 %1569
        %1571 = vrot.lane.b32.xlu0 %v520, 48
        %v1572 = vpop.permute.xlu0 %1571
        %1573 = vrot.lane.b32.xlu0 %v521, 48
        %v1574 = vpop.permute.xlu0 %1573
        %1575 = vrot.lane.b32.xlu0 %v523, 48
        %v1576 = vpop.permute.xlu0 %1575
        %1577 = vrot.lane.b32.xlu0 %v524, 48
        %v1578 = vpop.permute.xlu0 %1577
        %1579 = vrot.lane.b32.xlu0 %v526, 48
        %v1580 = vpop.permute.xlu0 %1579
        %1581 = vrot.lane.b32.xlu0 %v527, 48
        %v1582 = vpop.permute.xlu0 %1581
        %1583 = vrot.lane.b32.xlu0 %v529, 48
        %v1584 = vpop.permute.xlu0 %1583
        %1585 = vrot.lane.b32.xlu0 %v530, 48
        %v1586 = vpop.permute.xlu0 %1585
        %1587 = vrot.lane.b32.xlu0 %v532, 48
        %v1588 = vpop.permute.xlu0 %1587
        %1589 = vrot.lane.b32.xlu0 %v533, 48
        %v1590 = vpop.permute.xlu0 %1589
        %1591 = vrot.lane.b32.xlu0 %v535, 48
        %v1592 = vpop.permute.xlu0 %1591
        %1593 = vrot.lane.b32.xlu0 %v536, 48
        %v1594 = vpop.permute.xlu0 %1593
        %1595 = vrot.lane.b32.xlu0 %v538, 48
        %v1596 = vpop.permute.xlu0 %1595
        %1597 = vrot.lane.b32.xlu0 %v539, 48
        %v1598 = vpop.permute.xlu0 %1597
        %vm1631 = vcmask 458112
        %1632 = vst.msk [vmem:[#allocation4] sm:$0xff] %vm1631, %v1536
        %1633 = vst.msk [vmem:[#allocation4 + $0x8] sm:$0xff] %vm1631, %v1538
        %1634 = vst.msk [vmem:[#allocation4 + $0x10] sm:$0xff] %vm1631, %v1540
        %1635 = vst.msk [vmem:[#allocation4 + $0x18] sm:$0xff] %vm1631, %v1542
        %1636 = vst.msk [vmem:[#allocation4 + $0x20] sm:$0xff] %vm1631, %v1544
        %1637 = vst.msk [vmem:[#allocation4 + $0x28] sm:$0xff] %vm1631, %v1546
        %1638 = vst.msk [vmem:[#allocation4 + $0x30] sm:$0xff] %vm1631, %v1548
        %1639 = vst.msk [vmem:[#allocation4 + $0x38] sm:$0xff] %vm1631, %v1550
        %1640 = vst.msk [vmem:[#allocation4 + $0x40] sm:$0xff] %vm1631, %v1552
        %1641 = vst.msk [vmem:[#allocation4 + $0x48] sm:$0xff] %vm1631, %v1554
        %1642 = vst.msk [vmem:[#allocation4 + $0x50] sm:$0xff] %vm1631, %v1556
        %1643 = vst.msk [vmem:[#allocation4 + $0x58] sm:$0xff] %vm1631, %v1558
        %1644 = vst.msk [vmem:[#allocation4 + $0x60] sm:$0xff] %vm1631, %v1560
        %1645 = vst.msk [vmem:[#allocation4 + $0x68] sm:$0xff] %vm1631, %v1562
        %1646 = vst.msk [vmem:[#allocation4 + $0x70] sm:$0xff] %vm1631, %v1564
        %1647 = vst.msk [vmem:[#allocation4 + $0x78] sm:$0xff] %vm1631, %v1566
        %1648 = vst.msk [vmem:[#allocation4 + $0x80] sm:$0xff] %vm1631, %v1568
        %1649 = vst.msk [vmem:[#allocation4 + $0x88] sm:$0xff] %vm1631, %v1570
        %1650 = vst.msk [vmem:[#allocation4 + $0x90] sm:$0xff] %vm1631, %v1572
        %1651 = vst.msk [vmem:[#allocation4 + $0x98] sm:$0xff] %vm1631, %v1574
        %1652 = vst.msk [vmem:[#allocation4 + $0xa0] sm:$0xff] %vm1631, %v1576
        %1653 = vst.msk [vmem:[#allocation4 + $0xa8] sm:$0xff] %vm1631, %v1578
        %1654 = vst.msk [vmem:[#allocation4 + $0xb0] sm:$0xff] %vm1631, %v1580
        %1655 = vst.msk [vmem:[#allocation4 + $0xb8] sm:$0xff] %vm1631, %v1582
        %1656 = vst.msk [vmem:[#allocation4 + $0xc0] sm:$0xff] %vm1631, %v1584
        %1657 = vst.msk [vmem:[#allocation4 + $0xc8] sm:$0xff] %vm1631, %v1586
        %1658 = vst.msk [vmem:[#allocation4 + $0xd0] sm:$0xff] %vm1631, %v1588
        %1659 = vst.msk [vmem:[#allocation4 + $0xd8] sm:$0xff] %vm1631, %v1590
        %1660 = vst.msk [vmem:[#allocation4 + $0xe0] sm:$0xff] %vm1631, %v1592
        %1661 = vst.msk [vmem:[#allocation4 + $0xe8] sm:$0xff] %vm1631, %v1594
        %1662 = vst.msk [vmem:[#allocation4 + $0xf0] sm:$0xff] %vm1631, %v1596
        %1663 = vst.msk [vmem:[#allocation4 + $0xf8] sm:$0xff] %vm1631, %v1598
        %1665 = vrot.lane.b32.xlu0 %v493, 56
        %v1666 = vpop.permute.xlu0 %1665
        %1667 = vrot.lane.b32.xlu0 %v494, 56
        %v1668 = vpop.permute.xlu0 %1667
        %1669 = vrot.lane.b32.xlu0 %v495, 56
        %v1670 = vpop.permute.xlu0 %1669
        %1671 = vrot.lane.b32.xlu0 %v496, 56
        %v1672 = vpop.permute.xlu0 %1671
        %1673 = vrot.lane.b32.xlu0 %v497, 56
        %v1674 = vpop.permute.xlu0 %1673
        %1675 = vrot.lane.b32.xlu0 %v498, 56
        %v1676 = vpop.permute.xlu0 %1675
        %1677 = vrot.lane.b32.xlu0 %v499, 56
        %v1678 = vpop.permute.xlu0 %1677
        %1679 = vrot.lane.b32.xlu0 %v500, 56
        %v1680 = vpop.permute.xlu0 %1679
        %1681 = vrot.lane.b32.xlu0 %v501, 56
        %v1682 = vpop.permute.xlu0 %1681
        %1683 = vrot.lane.b32.xlu0 %v502, 56
        %v1684 = vpop.permute.xlu0 %1683
        %1685 = vrot.lane.b32.xlu0 %v503, 56
        %v1686 = vpop.permute.xlu0 %1685
        %1687 = vrot.lane.b32.xlu0 %v504, 56
        %v1688 = vpop.permute.xlu0 %1687
        %1689 = vrot.lane.b32.xlu0 %v505, 56
        %v1690 = vpop.permute.xlu0 %1689
        %1691 = vrot.lane.b32.xlu0 %v506, 56
        %v1692 = vpop.permute.xlu0 %1691
        %1693 = vrot.lane.b32.xlu0 %v507, 56
        %v1694 = vpop.permute.xlu0 %1693
        %1695 = vrot.lane.b32.xlu0 %v508, 56
        %v1696 = vpop.permute.xlu0 %1695
        %1697 = vrot.lane.b32.xlu0 %v509, 56
        %v1698 = vpop.permute.xlu0 %1697
        %1699 = vrot.lane.b32.xlu0 %v510, 56
        %v1700 = vpop.permute.xlu0 %1699
        %1701 = vrot.lane.b32.xlu0 %v511, 56
        %v1702 = vpop.permute.xlu0 %1701
        %1703 = vrot.lane.b32.xlu0 %v512, 56
        %v1704 = vpop.permute.xlu0 %1703
        %1705 = vrot.lane.b32.xlu0 %v513, 56
        %v1706 = vpop.permute.xlu0 %1705
        %1707 = vrot.lane.b32.xlu0 %v514, 56
        %v1708 = vpop.permute.xlu0 %1707
        %1709 = vrot.lane.b32.xlu0 %v515, 56
        %v1710 = vpop.permute.xlu0 %1709
        %1711 = vrot.lane.b32.xlu0 %v516, 56
        %v1712 = vpop.permute.xlu0 %1711
        %1713 = vrot.lane.b32.xlu0 %v517, 56
        %v1714 = vpop.permute.xlu0 %1713
        %1715 = vrot.lane.b32.xlu0 %v518, 56
        %v1716 = vpop.permute.xlu0 %1715
        %1717 = vrot.lane.b32.xlu0 %v519, 56
        %v1718 = vpop.permute.xlu0 %1717
        %1719 = vrot.lane.b32.xlu0 %v520, 56
        %v1720 = vpop.permute.xlu0 %1719
        %1721 = vrot.lane.b32.xlu0 %v521, 56
        %v1722 = vpop.permute.xlu0 %1721
        %1723 = vrot.lane.b32.xlu0 %v522, 56
        %v1724 = vpop.permute.xlu0 %1723
        %1725 = vrot.lane.b32.xlu0 %v523, 56
        %v1726 = vpop.permute.xlu0 %1725
        %1727 = vrot.lane.b32.xlu0 %v524, 56
        %v1728 = vpop.permute.xlu0 %1727
        %1729 = vrot.lane.b32.xlu0 %v525, 56
        %v1730 = vpop.permute.xlu0 %1729
        %1731 = vrot.lane.b32.xlu0 %v526, 56
        %v1732 = vpop.permute.xlu0 %1731
        %1733 = vrot.lane.b32.xlu0 %v527, 56
        %v1734 = vpop.permute.xlu0 %1733
        %1735 = vrot.lane.b32.xlu0 %v528, 56
        %v1736 = vpop.permute.xlu0 %1735
        %1737 = vrot.lane.b32.xlu0 %v529, 56
        %v1738 = vpop.permute.xlu0 %1737
        %1739 = vrot.lane.b32.xlu0 %v530, 56
        %v1740 = vpop.permute.xlu0 %1739
        %1741 = vrot.lane.b32.xlu0 %v531, 56
        %v1742 = vpop.permute.xlu0 %1741
        %1743 = vrot.lane.b32.xlu0 %v532, 56
        %v1744 = vpop.permute.xlu0 %1743
        %1745 = vrot.lane.b32.xlu0 %v533, 56
        %v1746 = vpop.permute.xlu0 %1745
        %1747 = vrot.lane.b32.xlu0 %v534, 56
        %v1748 = vpop.permute.xlu0 %1747
        %1749 = vrot.lane.b32.xlu0 %v535, 56
        %v1750 = vpop.permute.xlu0 %1749
        %1751 = vrot.lane.b32.xlu0 %v536, 56
        %v1752 = vpop.permute.xlu0 %1751
        %1753 = vrot.lane.b32.xlu0 %v537, 56
        %v1754 = vpop.permute.xlu0 %1753
        %1755 = vrot.lane.b32.xlu0 %v538, 56
        %v1756 = vpop.permute.xlu0 %1755
        %1757 = vrot.lane.b32.xlu0 %v539, 56
        %v1758 = vpop.permute.xlu0 %1757
        %1759 = vrot.lane.b32.xlu0 %v540, 56
        %v1760 = vpop.permute.xlu0 %1759
        %vm1809 = vcmask 523713
        %1810 = vst.msk [vmem:[#allocation4 - $0x1] sm:$0xfe] %vm1809, %v1666
        %vm1811 = vcmask 523712
        %1812 = vst.msk [vmem:[#allocation4 + $0x7] sm:$0xff] %vm1811, %v1668
        %vm1813 = vcmask 516544
        %1814 = vst.msk [vmem:[#allocation4 + $0xf] sm:$0x1] %vm1813, %v1670
        %1815 = vst.msk [vmem:[#allocation4 + $0xf] sm:$0xfe] %vm1809, %v1672
        %1816 = vst.msk [vmem:[#allocation4 + $0x17] sm:$0xff] %vm1811, %v1674
        %1817 = vst.msk [vmem:[#allocation4 + $0x1f] sm:$0x1] %vm1813, %v1676
        %1818 = vst.msk [vmem:[#allocation4 + $0x1f] sm:$0xfe] %vm1809, %v1678
        %1819 = vst.msk [vmem:[#allocation4 + $0x27] sm:$0xff] %vm1811, %v1680
        %1820 = vst.msk [vmem:[#allocation4 + $0x2f] sm:$0x1] %vm1813, %v1682
        %1821 = vst.msk [vmem:[#allocation4 + $0x2f] sm:$0xfe] %vm1809, %v1684
        %1822 = vst.msk [vmem:[#allocation4 + $0x37] sm:$0xff] %vm1811, %v1686
        %1823 = vst.msk [vmem:[#allocation4 + $0x3f] sm:$0x1] %vm1813, %v1688
        %1824 = vst.msk [vmem:[#allocation4 + $0x3f] sm:$0xfe] %vm1809, %v1690
        %1825 = vst.msk [vmem:[#allocation4 + $0x47] sm:$0xff] %vm1811, %v1692
        %1826 = vst.msk [vmem:[#allocation4 + $0x4f] sm:$0x1] %vm1813, %v1694
        %1827 = vst.msk [vmem:[#allocation4 + $0x4f] sm:$0xfe] %vm1809, %v1696
        %1828 = vst.msk [vmem:[#allocation4 + $0x57] sm:$0xff] %vm1811, %v1698
        %1829 = vst.msk [vmem:[#allocation4 + $0x5f] sm:$0x1] %vm1813, %v1700
        %1830 = vst.msk [vmem:[#allocation4 + $0x5f] sm:$0xfe] %vm1809, %v1702
        %1831 = vst.msk [vmem:[#allocation4 + $0x67] sm:$0xff] %vm1811, %v1704
        %1832 = vst.msk [vmem:[#allocation4 + $0x6f] sm:$0x1] %vm1813, %v1706
        %1833 = vst.msk [vmem:[#allocation4 + $0x6f] sm:$0xfe] %vm1809, %v1708
        %1834 = vst.msk [vmem:[#allocation4 + $0x77] sm:$0xff] %vm1811, %v1710
        %1835 = vst.msk [vmem:[#allocation4 + $0x7f] sm:$0x1] %vm1813, %v1712
        %1836 = vst.msk [vmem:[#allocation4 + $0x7f] sm:$0xfe] %vm1809, %v1714
        %1837 = vst.msk [vmem:[#allocation4 + $0x87] sm:$0xff] %vm1811, %v1716
        %1838 = vst.msk [vmem:[#allocation4 + $0x8f] sm:$0x1] %vm1813, %v1718
        %1839 = vst.msk [vmem:[#allocation4 + $0x8f] sm:$0xfe] %vm1809, %v1720
        %1840 = vst.msk [vmem:[#allocation4 + $0x97] sm:$0xff] %vm1811, %v1722
        %1841 = vst.msk [vmem:[#allocation4 + $0x9f] sm:$0x1] %vm1813, %v1724
        %1842 = vst.msk [vmem:[#allocation4 + $0x9f] sm:$0xfe] %vm1809, %v1726
        %1843 = vst.msk [vmem:[#allocation4 + $0xa7] sm:$0xff] %vm1811, %v1728
        %1844 = vst.msk [vmem:[#allocation4 + $0xaf] sm:$0x1] %vm1813, %v1730
        %1845 = vst.msk [vmem:[#allocation4 + $0xaf] sm:$0xfe] %vm1809, %v1732
        %1846 = vst.msk [vmem:[#allocation4 + $0xb7] sm:$0xff] %vm1811, %v1734
        %1847 = vst.msk [vmem:[#allocation4 + $0xbf] sm:$0x1] %vm1813, %v1736
        %1848 = vst.msk [vmem:[#allocation4 + $0xbf] sm:$0xfe] %vm1809, %v1738
        %1849 = vst.msk [vmem:[#allocation4 + $0xc7] sm:$0xff] %vm1811, %v1740
        %1850 = vst.msk [vmem:[#allocation4 + $0xcf] sm:$0x1] %vm1813, %v1742
        %1851 = vst.msk [vmem:[#allocation4 + $0xcf] sm:$0xfe] %vm1809, %v1744
        %1852 = vst.msk [vmem:[#allocation4 + $0xd7] sm:$0xff] %vm1811, %v1746
        %1853 = vst.msk [vmem:[#allocation4 + $0xdf] sm:$0x1] %vm1813, %v1748
        %1854 = vst.msk [vmem:[#allocation4 + $0xdf] sm:$0xfe] %vm1809, %v1750
        %1855 = vst.msk [vmem:[#allocation4 + $0xe7] sm:$0xff] %vm1811, %v1752
        %1856 = vst.msk [vmem:[#allocation4 + $0xef] sm:$0x1] %vm1813, %v1754
        %1857 = vst.msk [vmem:[#allocation4 + $0xef] sm:$0xfe] %vm1809, %v1756
        %1858 = vst.msk [vmem:[#allocation4 + $0xf7] sm:$0xff] %vm1811, %v1758
        %1859 = vst.msk [vmem:[#allocation4 + $0xff] sm:$0x1] %vm1813, %v1760
        %1860 = vrot.lane.b32.xlu0 %v493, 64
        %v1861 = vpop.permute.xlu0 %1860
        %1862 = vrot.lane.b32.xlu0 %v494, 64
        %v1863 = vpop.permute.xlu0 %1862
        %1864 = vrot.lane.b32.xlu0 %v495, 64
        %v1865 = vpop.permute.xlu0 %1864
        %1866 = vrot.lane.b32.xlu0 %v496, 64
        %v1867 = vpop.permute.xlu0 %1866
        %1868 = vrot.lane.b32.xlu0 %v497, 64
        %v1869 = vpop.permute.xlu0 %1868
        %1870 = vrot.lane.b32.xlu0 %v498, 64
        %v1871 = vpop.permute.xlu0 %1870
        %1872 = vrot.lane.b32.xlu0 %v499, 64
        %v1873 = vpop.permute.xlu0 %1872
        %1874 = vrot.lane.b32.xlu0 %v500, 64
        %v1875 = vpop.permute.xlu0 %1874
        %1876 = vrot.lane.b32.xlu0 %v501, 64
        %v1877 = vpop.permute.xlu0 %1876
        %1878 = vrot.lane.b32.xlu0 %v502, 64
        %v1879 = vpop.permute.xlu0 %1878
        %1880 = vrot.lane.b32.xlu0 %v503, 64
        %v1881 = vpop.permute.xlu0 %1880
        %1882 = vrot.lane.b32.xlu0 %v504, 64
        %v1883 = vpop.permute.xlu0 %1882
        %1884 = vrot.lane.b32.xlu0 %v505, 64
        %v1885 = vpop.permute.xlu0 %1884
        %1886 = vrot.lane.b32.xlu0 %v506, 64
        %v1887 = vpop.permute.xlu0 %1886
        %1888 = vrot.lane.b32.xlu0 %v507, 64
        %v1889 = vpop.permute.xlu0 %1888
        %1890 = vrot.lane.b32.xlu0 %v508, 64
        %v1891 = vpop.permute.xlu0 %1890
        %1892 = vrot.lane.b32.xlu0 %v509, 64
        %v1893 = vpop.permute.xlu0 %1892
        %1894 = vrot.lane.b32.xlu0 %v510, 64
        %v1895 = vpop.permute.xlu0 %1894
        %1896 = vrot.lane.b32.xlu0 %v511, 64
        %v1897 = vpop.permute.xlu0 %1896
        %1898 = vrot.lane.b32.xlu0 %v512, 64
        %v1899 = vpop.permute.xlu0 %1898
        %1900 = vrot.lane.b32.xlu0 %v513, 64
        %v1901 = vpop.permute.xlu0 %1900
        %1902 = vrot.lane.b32.xlu0 %v514, 64
        %v1903 = vpop.permute.xlu0 %1902
        %1904 = vrot.lane.b32.xlu0 %v515, 64
        %v1905 = vpop.permute.xlu0 %1904
        %1906 = vrot.lane.b32.xlu0 %v516, 64
        %v1907 = vpop.permute.xlu0 %1906
        %1908 = vrot.lane.b32.xlu0 %v517, 64
        %v1909 = vpop.permute.xlu0 %1908
        %1910 = vrot.lane.b32.xlu0 %v518, 64
        %v1911 = vpop.permute.xlu0 %1910
        %1912 = vrot.lane.b32.xlu0 %v519, 64
        %v1913 = vpop.permute.xlu0 %1912
        %1914 = vrot.lane.b32.xlu0 %v520, 64
        %v1915 = vpop.permute.xlu0 %1914
        %1916 = vrot.lane.b32.xlu0 %v521, 64
        %v1917 = vpop.permute.xlu0 %1916
        %1918 = vrot.lane.b32.xlu0 %v522, 64
        %v1919 = vpop.permute.xlu0 %1918
        %1920 = vrot.lane.b32.xlu0 %v523, 64
        %v1921 = vpop.permute.xlu0 %1920
        %1922 = vrot.lane.b32.xlu0 %v524, 64
        %v1923 = vpop.permute.xlu0 %1922
        %1924 = vrot.lane.b32.xlu0 %v525, 64
        %v1925 = vpop.permute.xlu0 %1924
        %1926 = vrot.lane.b32.xlu0 %v526, 64
        %v1927 = vpop.permute.xlu0 %1926
        %1928 = vrot.lane.b32.xlu0 %v527, 64
        %v1929 = vpop.permute.xlu0 %1928
        %1930 = vrot.lane.b32.xlu0 %v528, 64
        %v1931 = vpop.permute.xlu0 %1930
        %1932 = vrot.lane.b32.xlu0 %v529, 64
        %v1933 = vpop.permute.xlu0 %1932
        %1934 = vrot.lane.b32.xlu0 %v530, 64
        %v1935 = vpop.permute.xlu0 %1934
        %1936 = vrot.lane.b32.xlu0 %v531, 64
        %v1937 = vpop.permute.xlu0 %1936
        %1938 = vrot.lane.b32.xlu0 %v532, 64
        %v1939 = vpop.permute.xlu0 %1938
        %1940 = vrot.lane.b32.xlu0 %v533, 64
        %v1941 = vpop.permute.xlu0 %1940
        %1942 = vrot.lane.b32.xlu0 %v534, 64
        %v1943 = vpop.permute.xlu0 %1942
        %1944 = vrot.lane.b32.xlu0 %v535, 64
        %v1945 = vpop.permute.xlu0 %1944
        %1946 = vrot.lane.b32.xlu0 %v536, 64
        %v1947 = vpop.permute.xlu0 %1946
        %1948 = vrot.lane.b32.xlu0 %v537, 64
        %v1949 = vpop.permute.xlu0 %1948
        %1950 = vrot.lane.b32.xlu0 %v538, 64
        %v1951 = vpop.permute.xlu0 %1950
        %1952 = vrot.lane.b32.xlu0 %v539, 64
        %v1953 = vpop.permute.xlu0 %1952
        %1954 = vrot.lane.b32.xlu0 %v540, 64
        %v1955 = vpop.permute.xlu0 %1954
        %vm2004 = vcmask 589314
        %2005 = vst.msk [vmem:[#allocation4 - $0x2] sm:$0xfc] %vm2004, %v1861
        %vm2006 = vcmask 589312
        %2007 = vst.msk [vmem:[#allocation4 + $0x6] sm:$0xff] %vm2006, %v1863
        %vm2008 = vcmask 583168
        %2009 = vst.msk [vmem:[#allocation4 + $0xe] sm:$0x3] %vm2008, %v1865
        %2010 = vst.msk [vmem:[#allocation4 + $0xe] sm:$0xfc] %vm2004, %v1867
        %2011 = vst.msk [vmem:[#allocation4 + $0x16] sm:$0xff] %vm2006, %v1869
        %2012 = vst.msk [vmem:[#allocation4 + $0x1e] sm:$0x3] %vm2008, %v1871
        %2013 = vst.msk [vmem:[#allocation4 + $0x1e] sm:$0xfc] %vm2004, %v1873
        %2014 = vst.msk [vmem:[#allocation4 + $0x26] sm:$0xff] %vm2006, %v1875
        %2015 = vst.msk [vmem:[#allocation4 + $0x2e] sm:$0x3] %vm2008, %v1877
        %2016 = vst.msk [vmem:[#allocation4 + $0x2e] sm:$0xfc] %vm2004, %v1879
        %2017 = vst.msk [vmem:[#allocation4 + $0x36] sm:$0xff] %vm2006, %v1881
        %2018 = vst.msk [vmem:[#allocation4 + $0x3e] sm:$0x3] %vm2008, %v1883
        %2019 = vst.msk [vmem:[#allocation4 + $0x3e] sm:$0xfc] %vm2004, %v1885
        %2020 = vst.msk [vmem:[#allocation4 + $0x46] sm:$0xff] %vm2006, %v1887
        %2021 = vst.msk [vmem:[#allocation4 + $0x4e] sm:$0x3] %vm2008, %v1889
        %2022 = vst.msk [vmem:[#allocation4 + $0x4e] sm:$0xfc] %vm2004, %v1891
        %2023 = vst.msk [vmem:[#allocation4 + $0x56] sm:$0xff] %vm2006, %v1893
        %2024 = vst.msk [vmem:[#allocation4 + $0x5e] sm:$0x3] %vm2008, %v1895
        %2025 = vst.msk [vmem:[#allocation4 + $0x5e] sm:$0xfc] %vm2004, %v1897
        %2026 = vst.msk [vmem:[#allocation4 + $0x66] sm:$0xff] %vm2006, %v1899
        %2027 = vst.msk [vmem:[#allocation4 + $0x6e] sm:$0x3] %vm2008, %v1901
        %2028 = vst.msk [vmem:[#allocation4 + $0x6e] sm:$0xfc] %vm2004, %v1903
        %2029 = vst.msk [vmem:[#allocation4 + $0x76] sm:$0xff] %vm2006, %v1905
        %2030 = vst.msk [vmem:[#allocation4 + $0x7e] sm:$0x3] %vm2008, %v1907
        %2031 = vst.msk [vmem:[#allocation4 + $0x7e] sm:$0xfc] %vm2004, %v1909
        %2032 = vst.msk [vmem:[#allocation4 + $0x86] sm:$0xff] %vm2006, %v1911
        %2033 = vst.msk [vmem:[#allocation4 + $0x8e] sm:$0x3] %vm2008, %v1913
        %2034 = vst.msk [vmem:[#allocation4 + $0x8e] sm:$0xfc] %vm2004, %v1915
        %2035 = vst.msk [vmem:[#allocation4 + $0x96] sm:$0xff] %vm2006, %v1917
        %2036 = vst.msk [vmem:[#allocation4 + $0x9e] sm:$0x3] %vm2008, %v1919
        %2037 = vst.msk [vmem:[#allocation4 + $0x9e] sm:$0xfc] %vm2004, %v1921
        %2038 = vst.msk [vmem:[#allocation4 + $0xa6] sm:$0xff] %vm2006, %v1923
        %2039 = vst.msk [vmem:[#allocation4 + $0xae] sm:$0x3] %vm2008, %v1925
        %2040 = vst.msk [vmem:[#allocation4 + $0xae] sm:$0xfc] %vm2004, %v1927
        %2041 = vst.msk [vmem:[#allocation4 + $0xb6] sm:$0xff] %vm2006, %v1929
        %2042 = vst.msk [vmem:[#allocation4 + $0xbe] sm:$0x3] %vm2008, %v1931
        %2043 = vst.msk [vmem:[#allocation4 + $0xbe] sm:$0xfc] %vm2004, %v1933
        %2044 = vst.msk [vmem:[#allocation4 + $0xc6] sm:$0xff] %vm2006, %v1935
        %2045 = vst.msk [vmem:[#allocation4 + $0xce] sm:$0x3] %vm2008, %v1937
        %2046 = vst.msk [vmem:[#allocation4 + $0xce] sm:$0xfc] %vm2004, %v1939
        %2047 = vst.msk [vmem:[#allocation4 + $0xd6] sm:$0xff] %vm2006, %v1941
        %2048 = vst.msk [vmem:[#allocation4 + $0xde] sm:$0x3] %vm2008, %v1943
        %2049 = vst.msk [vmem:[#allocation4 + $0xde] sm:$0xfc] %vm2004, %v1945
        %2050 = vst.msk [vmem:[#allocation4 + $0xe6] sm:$0xff] %vm2006, %v1947
        %2051 = vst.msk [vmem:[#allocation4 + $0xee] sm:$0x3] %vm2008, %v1949
        %2052 = vst.msk [vmem:[#allocation4 + $0xee] sm:$0xfc] %vm2004, %v1951
        %2053 = vst.msk [vmem:[#allocation4 + $0xf6] sm:$0xff] %vm2006, %v1953
        %2054 = vst.msk [vmem:[#allocation4 + $0xfe] sm:$0x3] %vm2008, %v1955
        %v2055 = vld [vmem:[#allocation4] sm:$0xff]
        %v2056 = vld [vmem:[#allocation4 + $0x8] sm:$0xff]
        %v2057 = vld [vmem:[#allocation4 + $0x10] sm:$0xff]
        %v2058 = vld [vmem:[#allocation4 + $0x18] sm:$0xff]
        %v2059 = vld [vmem:[#allocation4 + $0x20] sm:$0xff]
        %v2060 = vld [vmem:[#allocation4 + $0x28] sm:$0xff]
        %v2061 = vld [vmem:[#allocation4 + $0x30] sm:$0xff]
        %v2062 = vld [vmem:[#allocation4 + $0x38] sm:$0xff]
        %v2063 = vld [vmem:[#allocation4 + $0x40] sm:$0xff]
        %v2064 = vld [vmem:[#allocation4 + $0x48] sm:$0xff]
        %v2065 = vld [vmem:[#allocation4 + $0x50] sm:$0xff]
        %v2066 = vld [vmem:[#allocation4 + $0x58] sm:$0xff]
        %v2067 = vld [vmem:[#allocation4 + $0x60] sm:$0xff]
        %v2068 = vld [vmem:[#allocation4 + $0x68] sm:$0xff]
        %v2069 = vld [vmem:[#allocation4 + $0x70] sm:$0xff]
        %v2070 = vld [vmem:[#allocation4 + $0x78] sm:$0xff]
        %v2071 = vld [vmem:[#allocation4 + $0x80] sm:$0xff]
        %v2072 = vld [vmem:[#allocation4 + $0x88] sm:$0xff]
        %v2073 = vld [vmem:[#allocation4 + $0x90] sm:$0xff]
        %v2074 = vld [vmem:[#allocation4 + $0x98] sm:$0xff]
        %v2075 = vld [vmem:[#allocation4 + $0xa0] sm:$0xff]
        %v2076 = vld [vmem:[#allocation4 + $0xa8] sm:$0xff]
        %v2077 = vld [vmem:[#allocation4 + $0xb0] sm:$0xff]
        %v2078 = vld [vmem:[#allocation4 + $0xb8] sm:$0xff]
        %v2079 = vld [vmem:[#allocation4 + $0xc0] sm:$0xff]
        %v2080 = vld [vmem:[#allocation4 + $0xc8] sm:$0xff]
        %v2081 = vld [vmem:[#allocation4 + $0xd0] sm:$0xff]
        %v2082 = vld [vmem:[#allocation4 + $0xd8] sm:$0xff]
        %v2083 = vld [vmem:[#allocation4 + $0xe0] sm:$0xff]
        %v2084 = vld [vmem:[#allocation4 + $0xe8] sm:$0xff]
        %v2085 = vld [vmem:[#allocation4 + $0xf0] sm:$0xff]
        %v2086 = vld [vmem:[#allocation4 + $0xf8] sm:$0xff]
        %v2087 = vpack.c.bf16 %v2056, %v2055
        %v2088 = vpack.c.bf16 %v2058, %v2057
        %v2089 = vpack.c.bf16 %v2060, %v2059
        %v2090 = vpack.c.bf16 %v2062, %v2061
        %v2091 = vpack.c.bf16 %v2064, %v2063
        %v2092 = vpack.c.bf16 %v2066, %v2065
        %v2093 = vpack.c.bf16 %v2068, %v2067
        %v2094 = vpack.c.bf16 %v2070, %v2069
        %v2095 = vpack.c.bf16 %v2072, %v2071
        %v2096 = vpack.c.bf16 %v2074, %v2073
        %v2097 = vpack.c.bf16 %v2076, %v2075
        %v2098 = vpack.c.bf16 %v2078, %v2077
        %v2099 = vpack.c.bf16 %v2080, %v2079
        %v2100 = vpack.c.bf16 %v2082, %v2081
        %v2101 = vpack.c.bf16 %v2084, %v2083
        %v2102 = vpack.c.bf16 %v2086, %v2085
        %v2103 = vld [vmem:[%s1] sm:$0xf]
        %v2104 = vld [vmem:[%s1 + $0x4] sm:$0xf]
        %v2105 = vld [vmem:[%s1 + $0x8] sm:$0xf]
        %v2106 = vld [vmem:[%s1 + $0xc] sm:$0xf]
        %v2107 = vld [vmem:[%s1 + $0x10] sm:$0xf]
        %v2108 = vld [vmem:[%s1 + $0x14] sm:$0xf]
        %v2109 = vld [vmem:[%s1 + $0x18] sm:$0xf]
        %v2110 = vld [vmem:[%s1 + $0x1c] sm:$0xf]
        %v2111 = vld [vmem:[%s1 + $0x20] sm:$0xf]
        %v2112 = vld [vmem:[%s2] sm:$0x1]
        %v2114 = vlaneseq
        %v2115 = vshrl.u32 %v2114, 7
        %v2116 = vsub.s32 0, %v2115
        %v2117 = vrot.slane %v2112, %v2116
        %v2128 = vunpack.c.l.b16 %v2103
        %v2129 = vunpack.c.l.b16 %v2104
        %v2130 = vunpack.c.l.b16 %v2105
        %v2131 = vunpack.c.l.b16 %v2106
        %v2132 = vunpack.c.l.b16 %v2107
        %v2133 = vunpack.c.l.b16 %v2108
        %v2134 = vunpack.c.l.b16 %v2109
        %v2135 = vunpack.c.l.b16 %v2110
        %v2136 = vunpack.c.l.b16 %v2111
        %v2137 = vpack.c.b16 %v2129, %v2128
        %v2138 = vpack.c.b16 %v2131, %v2130
        %v2139 = vpack.c.b16 %v2133, %v2132
        %v2140 = vpack.c.b16 %v2135, %v2134
        %v2141 = vpack.c.b16 %v2136, %v2136
        %vm2146 = vcmask 588800
        %v2148 = vsel %vm2146, %v2087, 0
        %v2151 = vsel %vm2146, %v2088, 0
        %v2154 = vsel %vm2146, %v2089, 0
        %v2157 = vsel %vm2146, %v2090, 0
        %v2160 = vsel %vm2146, %v2091, 0
        %v2163 = vsel %vm2146, %v2092, 0
        %v2166 = vsel %vm2146, %v2093, 0
        %v2169 = vsel %vm2146, %v2094, 0
        %v2172 = vsel %vm2146, %v2095, 0
        %v2175 = vsel %vm2146, %v2096, 0
        %v2178 = vsel %vm2146, %v2097, 0
        %v2181 = vsel %vm2146, %v2098, 0
        %v2184 = vsel %vm2146, %v2099, 0
        %v2187 = vsel %vm2146, %v2100, 0
        %v2190 = vsel %vm2146, %v2101, 0
        %v2193 = vsel %vm2146, %v2102, 0
        %vm2195 = vcmask 1043456
        %v2197 = vsel %vm2195, %v2141, 0
        %2199 = vmatprep.subr.bf16.mxu0 0
        %2200 = vmatpush1.bf16.msra.mxu0 0
        %2201 = vmatprep.subr.bf16.mxu0 0
        %2202 = vmatpush1.bf16.msra.mxu0 0
        %2203 = vmatprep.subr.bf16.mxu0 0
        %2204 = vmatpush1.bf16.msra.mxu0 0
        %2205 = vmatprep.subr.bf16.mxu0 0
        %2206 = vmatpush1.bf16.msra.mxu0 %v2197
        %2207 = vmatprep.subr.bf16.mxu0 0
        %2208 = vmatpush1.bf16.msra.mxu0 %v2140
        %2209 = vmatprep.subr.bf16.mxu0 0
        %2210 = vmatpush1.bf16.msra.mxu0 %v2139
        %2211 = vmatprep.subr.bf16.mxu0 0
        %2212 = vmatpush1.bf16.msra.mxu0 %v2138
        %2213 = vmatprep.subr.bf16.mxu0 0
        %2214 = vmatpush1.bf16.msra.mxu0 %v2137
        %2215 = vmatprep.subr.bf16.mxu0 0
        %2216 = vmatpush2.bf16.msra.mxu0 0
        %2217 = vmatprep.subr.bf16.mxu0 0
        %2218 = vmatpush2.bf16.msra.mxu0 0
        %2219 = vmatprep.subr.bf16.mxu0 0
        %2220 = vmatpush2.bf16.msra.mxu0 0
        %2221 = vmatprep.subr.bf16.mxu0 0
        %2222 = vmatpush2.bf16.msra.mxu0 0
        %2223 = vmatprep.subr.bf16.mxu0 0
        %2224 = vmatpush2.bf16.msra.mxu0 0
        %2225 = vmatprep.subr.bf16.mxu0 0
        %2226 = vmatpush2.bf16.msra.mxu0 0
        %2227 = vmatprep.subr.bf16.mxu0 0
        %2228 = vmatpush2.bf16.msra.mxu0 0
        %2229 = vmatprep.subr.bf16.mxu0 0
        %2230 = vmatpush2.bf16.msra.mxu0 0
        %2231 = vmatprep.mubr.bf16.mxu0 0
        %2232 = vmatmul.mubr.bf16.gmra.mxu0 %v2148
        %v2233 = vpop.f32.mrf.mxu0
        %v2234 = vadd.f32 %v2117, %v2233
        %v2235 = vpop.f32.mrf.mxu0
        %v2236 = vpop.f32.mrf.mxu0
        %v2237 = vadd.f32 %v2117, %v2236
        %v2238 = vpop.f32.mrf.mxu0
        %2239 = vmatprep.mubr.bf16.mxu0 0
        %2240 = vmatmul.mubr.bf16.gmra.mxu0 %v2151
        %v2241 = vpop.f32.mrf.mxu0
        %v2242 = vadd.f32 %v2117, %v2241
        %v2243 = vpop.f32.mrf.mxu0
        %v2244 = vpop.f32.mrf.mxu0
        %v2245 = vadd.f32 %v2117, %v2244
        %v2246 = vpop.f32.mrf.mxu0
        %2247 = vmatprep.mubr.bf16.mxu0 0
        %2248 = vmatmul.mubr.bf16.gmra.mxu0 %v2154
        %v2249 = vpop.f32.mrf.mxu0
        %v2250 = vadd.f32 %v2117, %v2249
        %v2251 = vpop.f32.mrf.mxu0
        %v2252 = vpop.f32.mrf.mxu0
        %v2253 = vadd.f32 %v2117, %v2252
        %v2254 = vpop.f32.mrf.mxu0
        %2255 = vmatprep.mubr.bf16.mxu0 0
        %2256 = vmatmul.mubr.bf16.gmra.mxu0 %v2157
        %v2257 = vpop.f32.mrf.mxu0
        %v2258 = vadd.f32 %v2117, %v2257
        %v2259 = vpop.f32.mrf.mxu0
        %v2260 = vpop.f32.mrf.mxu0
        %v2261 = vadd.f32 %v2117, %v2260
        %v2262 = vpop.f32.mrf.mxu0
        %2263 = vmatprep.mubr.bf16.mxu0 0
        %2264 = vmatmul.mubr.bf16.gmra.mxu0 %v2160
        %v2265 = vpop.f32.mrf.mxu0
        %v2266 = vadd.f32 %v2117, %v2265
        %v2267 = vpop.f32.mrf.mxu0
        %v2268 = vpop.f32.mrf.mxu0
        %v2269 = vadd.f32 %v2117, %v2268
        %v2270 = vpop.f32.mrf.mxu0
        %2271 = vmatprep.mubr.bf16.mxu0 0
        %2272 = vmatmul.mubr.bf16.gmra.mxu0 %v2163
        %v2273 = vpop.f32.mrf.mxu0
        %v2274 = vadd.f32 %v2117, %v2273
        %v2275 = vpop.f32.mrf.mxu0
        %v2276 = vpop.f32.mrf.mxu0
        %v2277 = vadd.f32 %v2117, %v2276
        %v2278 = vpop.f32.mrf.mxu0
        %2279 = vmatprep.mubr.bf16.mxu0 0
        %2280 = vmatmul.mubr.bf16.gmra.mxu0 %v2166
        %v2281 = vpop.f32.mrf.mxu0
        %v2282 = vadd.f32 %v2117, %v2281
        %v2283 = vpop.f32.mrf.mxu0
        %v2284 = vpop.f32.mrf.mxu0
        %v2285 = vadd.f32 %v2117, %v2284
        %v2286 = vpop.f32.mrf.mxu0
        %2287 = vmatprep.mubr.bf16.mxu0 0
        %2288 = vmatmul.mubr.bf16.gmra.mxu0 %v2169
        %v2289 = vpop.f32.mrf.mxu0
        %v2290 = vadd.f32 %v2117, %v2289
        %v2291 = vpop.f32.mrf.mxu0
        %v2292 = vpop.f32.mrf.mxu0
        %v2293 = vadd.f32 %v2117, %v2292
        %v2294 = vpop.f32.mrf.mxu0
        %2295 = vmatprep.mubr.bf16.mxu0 0
        %2296 = vmatmul.mubr.bf16.gmra.mxu0 %v2172
        %v2297 = vpop.f32.mrf.mxu0
        %v2298 = vadd.f32 %v2117, %v2297
        %v2299 = vpop.f32.mrf.mxu0
        %v2300 = vpop.f32.mrf.mxu0
        %v2301 = vadd.f32 %v2117, %v2300
        %v2302 = vpop.f32.mrf.mxu0
        %2303 = vmatprep.mubr.bf16.mxu0 0
        %2304 = vmatmul.mubr.bf16.gmra.mxu0 %v2175
        %v2305 = vpop.f32.mrf.mxu0
        %v2306 = vadd.f32 %v2117, %v2305
        %v2307 = vpop.f32.mrf.mxu0
        %v2308 = vpop.f32.mrf.mxu0
        %v2309 = vadd.f32 %v2117, %v2308
        %v2310 = vpop.f32.mrf.mxu0
        %2311 = vmatprep.mubr.bf16.mxu0 0
        %2312 = vmatmul.mubr.bf16.gmra.mxu0 %v2178
        %v2313 = vpop.f32.mrf.mxu0
        %v2314 = vadd.f32 %v2117, %v2313
        %v2315 = vpop.f32.mrf.mxu0
        %v2316 = vpop.f32.mrf.mxu0
        %v2317 = vadd.f32 %v2117, %v2316
        %v2318 = vpop.f32.mrf.mxu0
        %2319 = vmatprep.mubr.bf16.mxu0 0
        %2320 = vmatmul.mubr.bf16.gmra.mxu0 %v2181
        %v2321 = vpop.f32.mrf.mxu0
        %v2322 = vadd.f32 %v2117, %v2321
        %v2323 = vpop.f32.mrf.mxu0
        %v2324 = vpop.f32.mrf.mxu0
        %v2325 = vadd.f32 %v2117, %v2324
        %v2326 = vpop.f32.mrf.mxu0
        %2327 = vmatprep.mubr.bf16.mxu0 0
        %2328 = vmatmul.mubr.bf16.gmra.mxu0 %v2184
        %v2329 = vpop.f32.mrf.mxu0
        %v2330 = vadd.f32 %v2117, %v2329
        %v2331 = vpop.f32.mrf.mxu0
        %v2332 = vpop.f32.mrf.mxu0
        %v2333 = vadd.f32 %v2117, %v2332
        %v2334 = vpop.f32.mrf.mxu0
        %2335 = vmatprep.mubr.bf16.mxu0 0
        %2336 = vmatmul.mubr.bf16.gmra.mxu0 %v2187
        %v2337 = vpop.f32.mrf.mxu0
        %v2338 = vadd.f32 %v2117, %v2337
        %v2339 = vpop.f32.mrf.mxu0
        %v2340 = vpop.f32.mrf.mxu0
        %v2341 = vadd.f32 %v2117, %v2340
        %v2342 = vpop.f32.mrf.mxu0
        %2343 = vmatprep.mubr.bf16.mxu0 0
        %2344 = vmatmul.mubr.bf16.gmra.mxu0 %v2190
        %v2345 = vpop.f32.mrf.mxu0
        %v2346 = vadd.f32 %v2117, %v2345
        %v2347 = vpop.f32.mrf.mxu0
        %v2348 = vpop.f32.mrf.mxu0
        %v2349 = vadd.f32 %v2117, %v2348
        %v2350 = vpop.f32.mrf.mxu0
        %2351 = vmatprep.mubr.bf16.mxu0 0
        %2352 = vmatmul.mubr.bf16.gmra.mxu0 %v2193
        %v2353 = vpop.f32.mrf.mxu0
        %v2354 = vadd.f32 %v2117, %v2353
        %v2355 = vpop.f32.mrf.mxu0
        %v2356 = vpop.f32.mrf.mxu0
        %v2357 = vadd.f32 %v2117, %v2356
        %v2358 = vpop.f32.mrf.mxu0
        %2359 = vdwg.mxu0
        %v2360 = vmax.f32 %v2234, 0.0
        %v2361 = vmax.f32 %v2237, 0.0
        %v2362 = vmax.f32 %v2242, 0.0
        %v2363 = vmax.f32 %v2245, 0.0
        %v2364 = vmax.f32 %v2250, 0.0
        %v2365 = vmax.f32 %v2253, 0.0
        %v2366 = vmax.f32 %v2258, 0.0
        %v2367 = vmax.f32 %v2261, 0.0
        %v2368 = vmax.f32 %v2266, 0.0
        %v2369 = vmax.f32 %v2269, 0.0
        %v2370 = vmax.f32 %v2274, 0.0
        %v2371 = vmax.f32 %v2277, 0.0
        %v2372 = vmax.f32 %v2282, 0.0
        %v2373 = vmax.f32 %v2285, 0.0
        %v2374 = vmax.f32 %v2290, 0.0
        %v2375 = vmax.f32 %v2293, 0.0
        %v2376 = vmax.f32 %v2298, 0.0
        %v2377 = vmax.f32 %v2301, 0.0
        %v2378 = vmax.f32 %v2306, 0.0
        %v2379 = vmax.f32 %v2309, 0.0
        %v2380 = vmax.f32 %v2314, 0.0
        %v2381 = vmax.f32 %v2317, 0.0
        %v2382 = vmax.f32 %v2322, 0.0
        %v2383 = vmax.f32 %v2325, 0.0
        %v2384 = vmax.f32 %v2330, 0.0
        %v2385 = vmax.f32 %v2333, 0.0
        %v2386 = vmax.f32 %v2338, 0.0
        %v2387 = vmax.f32 %v2341, 0.0
        %v2388 = vmax.f32 %v2346, 0.0
        %v2389 = vmax.f32 %v2349, 0.0
        %v2390 = vmax.f32 %v2354, 0.0
        %v2391 = vmax.f32 %v2357, 0.0
        %s2392 = scalar_lea.vmem [#allocation3], 24
        %2393 = vst.msk [vmem:[%s2392 + $0x1] sm:$0xff] %vm334, %v2360
        %2394 = vst.msk [vmem:[%s2392 + $0x9] sm:$0xff] %vm334, %v2361
        %2395 = vst.msk [vmem:[%s2392 + $0x19] sm:$0xff] %vm334, %v2362
        %2396 = vst.msk [vmem:[%s2392 + $0x21] sm:$0xff] %vm334, %v2363
        %2397 = vst.msk [vmem:[%s2392 + $0x31] sm:$0xff] %vm334, %v2364
        %2398 = vst.msk [vmem:[%s2392 + $0x39] sm:$0xff] %vm334, %v2365
        %2399 = vst.msk [vmem:[%s2392 + $0x49] sm:$0xff] %vm334, %v2366
        %2400 = vst.msk [vmem:[%s2392 + $0x51] sm:$0xff] %vm334, %v2367
        %2401 = vst.msk [vmem:[%s2392 + $0x61] sm:$0xff] %vm334, %v2368
        %2402 = vst.msk [vmem:[%s2392 + $0x69] sm:$0xff] %vm334, %v2369
        %2403 = vst.msk [vmem:[%s2392 + $0x79] sm:$0xff] %vm334, %v2370
        %2404 = vst.msk [vmem:[%s2392 + $0x81] sm:$0xff] %vm334, %v2371
        %2405 = vst.msk [vmem:[%s2392 + $0x91] sm:$0xff] %vm334, %v2372
        %2406 = vst.msk [vmem:[%s2392 + $0x99] sm:$0xff] %vm334, %v2373
        %2407 = vst.msk [vmem:[%s2392 + $0xa9] sm:$0xff] %vm334, %v2374
        %2408 = vst.msk [vmem:[%s2392 + $0xb1] sm:$0xff] %vm334, %v2375
        %2409 = vst.msk [vmem:[%s2392 + $0xc1] sm:$0xff] %vm334, %v2376
        %2410 = vst.msk [vmem:[%s2392 + $0xc9] sm:$0xff] %vm334, %v2377
        %2411 = vst.msk [vmem:[%s2392 + $0xd9] sm:$0xff] %vm334, %v2378
        %2412 = vst.msk [vmem:[%s2392 + $0xe1] sm:$0xff] %vm334, %v2379
        %2413 = vst.msk [vmem:[%s2392 + $0xf1] sm:$0xff] %vm334, %v2380
        %2414 = vst.msk [vmem:[%s2392 + $0xf9] sm:$0xff] %vm334, %v2381
        %2415 = vst.msk [vmem:[%s2392 + $0x109] sm:$0xff] %vm334, %v2382
        %2416 = vst.msk [vmem:[%s2392 + $0x111] sm:$0xff] %vm334, %v2383
        %2417 = vst.msk [vmem:[%s2392 + $0x121] sm:$0xff] %vm334, %v2384
        %2418 = vst.msk [vmem:[%s2392 + $0x129] sm:$0xff] %vm334, %v2385
        %2419 = vst.msk [vmem:[%s2392 + $0x139] sm:$0xff] %vm334, %v2386
        %2420 = vst.msk [vmem:[%s2392 + $0x141] sm:$0xff] %vm334, %v2387
        %2421 = vst.msk [vmem:[%s2392 + $0x151] sm:$0xff] %vm334, %v2388
        %2422 = vst.msk [vmem:[%s2392 + $0x159] sm:$0xff] %vm334, %v2389
        %2423 = vst.msk [vmem:[%s2392 + $0x169] sm:$0xff] %vm334, %v2390
        %2424 = vst.msk [vmem:[%s2392 + $0x171] sm:$0xff] %vm334, %v2391
        %v2425 = vld [vmem:[#allocation3] sm:$0xff]
        %v2426 = vld [vmem:[#allocation3 + $0x8] sm:$0xff]
        %v2427 = vld [vmem:[#allocation3 + $0x10] sm:$0x3]
        %v2428 = vld [vmem:[#allocation3 + $0x18] sm:$0xff]
        %v2429 = vld [vmem:[#allocation3 + $0x20] sm:$0xff]
        %v2430 = vld [vmem:[#allocation3 + $0x28] sm:$0x3]
        %v2431 = vld [vmem:[#allocation3 + $0x30] sm:$0xff]
        %v2432 = vld [vmem:[#allocation3 + $0x38] sm:$0xff]
        %v2433 = vld [vmem:[#allocation3 + $0x40] sm:$0x3]
        %v2434 = vld [vmem:[#allocation3 + $0x48] sm:$0xff]
        %v2435 = vld [vmem:[#allocation3 + $0x50] sm:$0xff]
        %v2436 = vld [vmem:[#allocation3 + $0x58] sm:$0x3]
        %v2437 = vld [vmem:[#allocation3 + $0x60] sm:$0xff]
        %v2438 = vld [vmem:[#allocation3 + $0x68] sm:$0xff]
        %v2439 = vld [vmem:[#allocation3 + $0x70] sm:$0x3]
        %v2440 = vld [vmem:[#allocation3 + $0x78] sm:$0xff]
        %v2441 = vld [vmem:[#allocation3 + $0x80] sm:$0xff]
        %v2442 = vld [vmem:[#allocation3 + $0x88] sm:$0x3]
        %v2443 = vld [vmem:[#allocation3 + $0x90] sm:$0xff]
        %v2444 = vld [vmem:[#allocation3 + $0x98] sm:$0xff]
        %v2445 = vld [vmem:[#allocation3 + $0xa0] sm:$0x3]
        %v2446 = vld [vmem:[#allocation3 + $0xa8] sm:$0xff]
        %v2447 = vld [vmem:[#allocation3 + $0xb0] sm:$0xff]
        %v2448 = vld [vmem:[#allocation3 + $0xb8] sm:$0x3]
        %v2449 = vld [vmem:[#allocation3 + $0xc0] sm:$0xff]
        %v2450 = vld [vmem:[#allocation3 + $0xc8] sm:$0xff]
        %v2451 = vld [vmem:[#allocation3 + $0xd0] sm:$0x3]
        %v2452 = vld [vmem:[#allocation3 + $0xd8] sm:$0xff]
        %v2453 = vld [vmem:[#allocation3 + $0xe0] sm:$0xff]
        %v2454 = vld [vmem:[#allocation3 + $0xe8] sm:$0x3]
        %v2455 = vld [vmem:[#allocation3 + $0xf0] sm:$0xff]
        %v2456 = vld [vmem:[#allocation3 + $0xf8] sm:$0xff]
        %v2457 = vld [vmem:[#allocation3 + $0x100] sm:$0x3]
        %v2458 = vld [vmem:[#allocation3 + $0x108] sm:$0xff]
        %v2459 = vld [vmem:[#allocation3 + $0x110] sm:$0xff]
        %v2460 = vld [vmem:[#allocation3 + $0x118] sm:$0x3]
        %v2461 = vld [vmem:[#allocation3 + $0x120] sm:$0xff]
        %v2462 = vld [vmem:[#allocation3 + $0x128] sm:$0xff]
        %v2463 = vld [vmem:[#allocation3 + $0x130] sm:$0x3]
        %v2464 = vld [vmem:[#allocation3 + $0x138] sm:$0xff]
        %v2465 = vld [vmem:[#allocation3 + $0x140] sm:$0xff]
        %v2466 = vld [vmem:[#allocation3 + $0x148] sm:$0x3]
        %v2467 = vld [vmem:[#allocation3 + $0x150] sm:$0xff]
        %v2468 = vld [vmem:[#allocation3 + $0x158] sm:$0xff]
        %v2469 = vld [vmem:[#allocation3 + $0x160] sm:$0x3]
        %v2470 = vld [vmem:[#allocation3 + $0x168] sm:$0xff]
        %v2471 = vld [vmem:[#allocation3 + $0x170] sm:$0xff]
        %v2472 = vld [vmem:[#allocation3 + $0x178] sm:$0x3]
        %v2473 = vld [vmem:[#allocation3 + $0x180] sm:$0xff]
        %v2474 = vld [vmem:[#allocation3 + $0x188] sm:$0xff]
        %v2475 = vld [vmem:[#allocation3 + $0x190] sm:$0x3]
        %v2476 = vld [vmem:[#allocation3 + $0x198] sm:$0xff]
        %v2477 = vld [vmem:[#allocation3 + $0x1a0] sm:$0xff]
        %v2478 = vld [vmem:[#allocation3 + $0x1a8] sm:$0x3]
        %2479 = vst.msk [vmem:[#allocation5] sm:$0xff] %vm334, %v2425
        %2480 = vst.msk [vmem:[#allocation5 + $0x10] sm:$0xff] %vm334, %v2426
        %2481 = vst.msk [vmem:[#allocation5 + $0x20] sm:$0xff] %vm334, %v2428
        %2482 = vst.msk [vmem:[#allocation5 + $0x30] sm:$0xff] %vm334, %v2429
        %2483 = vst.msk [vmem:[#allocation5 + $0x40] sm:$0xff] %vm334, %v2431
        %2484 = vst.msk [vmem:[#allocation5 + $0x50] sm:$0xff] %vm334, %v2432
        %2485 = vst.msk [vmem:[#allocation5 + $0x60] sm:$0xff] %vm334, %v2434
        %2486 = vst.msk [vmem:[#allocation5 + $0x70] sm:$0xff] %vm334, %v2435
        %2487 = vst.msk [vmem:[#allocation5 + $0x80] sm:$0xff] %vm334, %v2437
        %2488 = vst.msk [vmem:[#allocation5 + $0x90] sm:$0xff] %vm334, %v2438
        %2489 = vst.msk [vmem:[#allocation5 + $0xa0] sm:$0xff] %vm334, %v2440
        %2490 = vst.msk [vmem:[#allocation5 + $0xb0] sm:$0xff] %vm334, %v2441
        %2491 = vst.msk [vmem:[#allocation5 + $0xc0] sm:$0xff] %vm334, %v2443
        %2492 = vst.msk [vmem:[#allocation5 + $0xd0] sm:$0xff] %vm334, %v2444
        %2493 = vst.msk [vmem:[#allocation5 + $0xe0] sm:$0xff] %vm334, %v2446
        %2494 = vst.msk [vmem:[#allocation5 + $0xf0] sm:$0xff] %vm334, %v2447
        %2495 = vst.msk [vmem:[#allocation5 + $0x100] sm:$0xff] %vm334, %v2449
        %2496 = vst.msk [vmem:[#allocation5 + $0x110] sm:$0xff] %vm334, %v2450
        %2497 = vst.msk [vmem:[#allocation5 + $0x120] sm:$0xff] %vm334, %v2452
        %2498 = vst.msk [vmem:[#allocation5 + $0x130] sm:$0xff] %vm334, %v2453
        %2499 = vst.msk [vmem:[#allocation5 + $0x140] sm:$0xff] %vm334, %v2455
        %2500 = vst.msk [vmem:[#allocation5 + $0x150] sm:$0xff] %vm334, %v2456
        %2501 = vst.msk [vmem:[#allocation5 + $0x160] sm:$0xff] %vm334, %v2458
        %2502 = vst.msk [vmem:[#allocation5 + $0x170] sm:$0xff] %vm334, %v2459
        %2503 = vst.msk [vmem:[#allocation5 + $0x180] sm:$0xff] %vm334, %v2461
        %2504 = vst.msk [vmem:[#allocation5 + $0x190] sm:$0xff] %vm334, %v2462
        %2505 = vst.msk [vmem:[#allocation5 + $0x1a0] sm:$0xff] %vm334, %v2464
        %2506 = vst.msk [vmem:[#allocation5 + $0x1b0] sm:$0xff] %vm334, %v2465
        %2507 = vst.msk [vmem:[#allocation5 + $0x1c0] sm:$0xff] %vm334, %v2467
        %2508 = vst.msk [vmem:[#allocation5 + $0x1d0] sm:$0xff] %vm334, %v2468
        %2509 = vst.msk [vmem:[#allocation5 + $0x1e0] sm:$0xff] %vm334, %v2470
        %2510 = vst.msk [vmem:[#allocation5 + $0x1f0] sm:$0xff] %vm334, %v2471
        %vm2559 = vcmask 1046528
        %v2560 = vrot.slane %v2425, 1
        %v2561 = vrot.slane %v2426, 1
        %v2562 = vsel %vm2559, %v2560, %v2561
        %v2563 = vrot.slane %v2427, 1
        %v2564 = vsel %vm2559, %v2561, %v2563
        %v2565 = vrot.slane %v2428, 1
        %v2566 = vrot.slane %v2429, 1
        %v2567 = vsel %vm2559, %v2565, %v2566
        %v2568 = vrot.slane %v2430, 1
        %v2569 = vsel %vm2559, %v2566, %v2568
        %v2570 = vrot.slane %v2431, 1
        %v2571 = vrot.slane %v2432, 1
        %v2572 = vsel %vm2559, %v2570, %v2571
        %v2573 = vrot.slane %v2433, 1
        %v2574 = vsel %vm2559, %v2571, %v2573
        %v2575 = vrot.slane %v2434, 1
        %v2576 = vrot.slane %v2435, 1
        %v2577 = vsel %vm2559, %v2575, %v2576
        %v2578 = vrot.slane %v2436, 1
        %v2579 = vsel %vm2559, %v2576, %v2578
        %v2580 = vrot.slane %v2437, 1
        %v2581 = vrot.slane %v2438, 1
        %v2582 = vsel %vm2559, %v2580, %v2581
        %v2583 = vrot.slane %v2439, 1
        %v2584 = vsel %vm2559, %v2581, %v2583
        %v2585 = vrot.slane %v2440, 1
        %v2586 = vrot.slane %v2441, 1
        %v2587 = vsel %vm2559, %v2585, %v2586
        %v2588 = vrot.slane %v2442, 1
        %v2589 = vsel %vm2559, %v2586, %v2588
        %v2590 = vrot.slane %v2443, 1
        %v2591 = vrot.slane %v2444, 1
        %v2592 = vsel %vm2559, %v2590, %v2591
        %v2593 = vrot.slane %v2445, 1
        %v2594 = vsel %vm2559, %v2591, %v2593
        %v2595 = vrot.slane %v2446, 1
        %v2596 = vrot.slane %v2447, 1
        %v2597 = vsel %vm2559, %v2595, %v2596
        %v2598 = vrot.slane %v2448, 1
        %v2599 = vsel %vm2559, %v2596, %v2598
        %v2600 = vrot.slane %v2449, 1
        %v2601 = vrot.slane %v2450, 1
        %v2602 = vsel %vm2559, %v2600, %v2601
        %v2603 = vrot.slane %v2451, 1
        %v2604 = vsel %vm2559, %v2601, %v2603
        %v2605 = vrot.slane %v2452, 1
        %v2606 = vrot.slane %v2453, 1
        %v2607 = vsel %vm2559, %v2605, %v2606
        %v2608 = vrot.slane %v2454, 1
        %v2609 = vsel %vm2559, %v2606, %v2608
        %v2610 = vrot.slane %v2455, 1
        %v2611 = vrot.slane %v2456, 1
        %v2612 = vsel %vm2559, %v2610, %v2611
        %v2613 = vrot.slane %v2457, 1
        %v2614 = vsel %vm2559, %v2611, %v2613
        %v2615 = vrot.slane %v2458, 1
        %v2616 = vrot.slane %v2459, 1
        %v2617 = vsel %vm2559, %v2615, %v2616
        %v2618 = vrot.slane %v2460, 1
        %v2619 = vsel %vm2559, %v2616, %v2618
        %v2620 = vrot.slane %v2461, 1
        %v2621 = vrot.slane %v2462, 1
        %v2622 = vsel %vm2559, %v2620, %v2621
        %v2623 = vrot.slane %v2463, 1
        %v2624 = vsel %vm2559, %v2621, %v2623
        %v2625 = vrot.slane %v2464, 1
        %v2626 = vrot.slane %v2465, 1
        %v2627 = vsel %vm2559, %v2625, %v2626
        %v2628 = vrot.slane %v2466, 1
        %v2629 = vsel %vm2559, %v2626, %v2628
        %v2630 = vrot.slane %v2467, 1
        %v2631 = vrot.slane %v2468, 1
        %v2632 = vsel %vm2559, %v2630, %v2631
        %v2633 = vrot.slane %v2469, 1
        %v2634 = vsel %vm2559, %v2631, %v2633
        %v2635 = vrot.slane %v2470, 1
        %v2636 = vrot.slane %v2471, 1
        %v2637 = vsel %vm2559, %v2635, %v2636
        %v2638 = vrot.slane %v2472, 1
        %v2639 = vsel %vm2559, %v2636, %v2638
        %2640 = vrot.lane.b32.xlu0 %v2562, 16
        %v2641 = vpop.permute.xlu0 %2640
        %2642 = vrot.lane.b32.xlu0 %v2564, 16
        %v2643 = vpop.permute.xlu0 %2642
        %2644 = vrot.lane.b32.xlu0 %v2567, 16
        %v2645 = vpop.permute.xlu0 %2644
        %2646 = vrot.lane.b32.xlu0 %v2569, 16
        %v2647 = vpop.permute.xlu0 %2646
        %2648 = vrot.lane.b32.xlu0 %v2572, 16
        %v2649 = vpop.permute.xlu0 %2648
        %2650 = vrot.lane.b32.xlu0 %v2574, 16
        %v2651 = vpop.permute.xlu0 %2650
        %2652 = vrot.lane.b32.xlu0 %v2577, 16
        %v2653 = vpop.permute.xlu0 %2652
        %2654 = vrot.lane.b32.xlu0 %v2579, 16
        %v2655 = vpop.permute.xlu0 %2654
        %2656 = vrot.lane.b32.xlu0 %v2582, 16
        %v2657 = vpop.permute.xlu0 %2656
        %2658 = vrot.lane.b32.xlu0 %v2584, 16
        %v2659 = vpop.permute.xlu0 %2658
        %2660 = vrot.lane.b32.xlu0 %v2587, 16
        %v2661 = vpop.permute.xlu0 %2660
        %2662 = vrot.lane.b32.xlu0 %v2589, 16
        %v2663 = vpop.permute.xlu0 %2662
        %2664 = vrot.lane.b32.xlu0 %v2592, 16
        %v2665 = vpop.permute.xlu0 %2664
        %2666 = vrot.lane.b32.xlu0 %v2594, 16
        %v2667 = vpop.permute.xlu0 %2666
        %2668 = vrot.lane.b32.xlu0 %v2597, 16
        %v2669 = vpop.permute.xlu0 %2668
        %2670 = vrot.lane.b32.xlu0 %v2599, 16
        %v2671 = vpop.permute.xlu0 %2670
        %2672 = vrot.lane.b32.xlu0 %v2602, 16
        %v2673 = vpop.permute.xlu0 %2672
        %2674 = vrot.lane.b32.xlu0 %v2604, 16
        %v2675 = vpop.permute.xlu0 %2674
        %2676 = vrot.lane.b32.xlu0 %v2607, 16
        %v2677 = vpop.permute.xlu0 %2676
        %2678 = vrot.lane.b32.xlu0 %v2609, 16
        %v2679 = vpop.permute.xlu0 %2678
        %2680 = vrot.lane.b32.xlu0 %v2612, 16
        %v2681 = vpop.permute.xlu0 %2680
        %2682 = vrot.lane.b32.xlu0 %v2614, 16
        %v2683 = vpop.permute.xlu0 %2682
        %2684 = vrot.lane.b32.xlu0 %v2617, 16
        %v2685 = vpop.permute.xlu0 %2684
        %2686 = vrot.lane.b32.xlu0 %v2619, 16
        %v2687 = vpop.permute.xlu0 %2686
        %2688 = vrot.lane.b32.xlu0 %v2622, 16
        %v2689 = vpop.permute.xlu0 %2688
        %2690 = vrot.lane.b32.xlu0 %v2624, 16
        %v2691 = vpop.permute.xlu0 %2690
        %2692 = vrot.lane.b32.xlu0 %v2627, 16
        %v2693 = vpop.permute.xlu0 %2692
        %2694 = vrot.lane.b32.xlu0 %v2629, 16
        %v2695 = vpop.permute.xlu0 %2694
        %2696 = vrot.lane.b32.xlu0 %v2632, 16
        %v2697 = vpop.permute.xlu0 %2696
        %2698 = vrot.lane.b32.xlu0 %v2634, 16
        %v2699 = vpop.permute.xlu0 %2698
        %2700 = vrot.lane.b32.xlu0 %v2637, 16
        %v2701 = vpop.permute.xlu0 %2700
        %2702 = vrot.lane.b32.xlu0 %v2639, 16
        %v2703 = vpop.permute.xlu0 %2702
        %vm2736 = vcmask 261248
        %2737 = vst.msk [vmem:[#allocation5] sm:$0xff] %vm2736, %v2641
        %2738 = vst.msk [vmem:[#allocation5 + $0x10] sm:$0xff] %vm2736, %v2643
        %2739 = vst.msk [vmem:[#allocation5 + $0x20] sm:$0xff] %vm2736, %v2645
        %2740 = vst.msk [vmem:[#allocation5 + $0x30] sm:$0xff] %vm2736, %v2647
        %2741 = vst.msk [vmem:[#allocation5 + $0x40] sm:$0xff] %vm2736, %v2649
        %2742 = vst.msk [vmem:[#allocation5 + $0x50] sm:$0xff] %vm2736, %v2651
        %2743 = vst.msk [vmem:[#allocation5 + $0x60] sm:$0xff] %vm2736, %v2653
        %2744 = vst.msk [vmem:[#allocation5 + $0x70] sm:$0xff] %vm2736, %v2655
        %2745 = vst.msk [vmem:[#allocation5 + $0x80] sm:$0xff] %vm2736, %v2657
        %2746 = vst.msk [vmem:[#allocation5 + $0x90] sm:$0xff] %vm2736, %v2659
        %2747 = vst.msk [vmem:[#allocation5 + $0xa0] sm:$0xff] %vm2736, %v2661
        %2748 = vst.msk [vmem:[#allocation5 + $0xb0] sm:$0xff] %vm2736, %v2663
        %2749 = vst.msk [vmem:[#allocation5 + $0xc0] sm:$0xff] %vm2736, %v2665
        %2750 = vst.msk [vmem:[#allocation5 + $0xd0] sm:$0xff] %vm2736, %v2667
        %2751 = vst.msk [vmem:[#allocation5 + $0xe0] sm:$0xff] %vm2736, %v2669
        %2752 = vst.msk [vmem:[#allocation5 + $0xf0] sm:$0xff] %vm2736, %v2671
        %2753 = vst.msk [vmem:[#allocation5 + $0x100] sm:$0xff] %vm2736, %v2673
        %2754 = vst.msk [vmem:[#allocation5 + $0x110] sm:$0xff] %vm2736, %v2675
        %2755 = vst.msk [vmem:[#allocation5 + $0x120] sm:$0xff] %vm2736, %v2677
        %2756 = vst.msk [vmem:[#allocation5 + $0x130] sm:$0xff] %vm2736, %v2679
        %2757 = vst.msk [vmem:[#allocation5 + $0x140] sm:$0xff] %vm2736, %v2681
        %2758 = vst.msk [vmem:[#allocation5 + $0x150] sm:$0xff] %vm2736, %v2683
        %2759 = vst.msk [vmem:[#allocation5 + $0x160] sm:$0xff] %vm2736, %v2685
        %2760 = vst.msk [vmem:[#allocation5 + $0x170] sm:$0xff] %vm2736, %v2687
        %2761 = vst.msk [vmem:[#allocation5 + $0x180] sm:$0xff] %vm2736, %v2689
        %2762 = vst.msk [vmem:[#allocation5 + $0x190] sm:$0xff] %vm2736, %v2691
        %2763 = vst.msk [vmem:[#allocation5 + $0x1a0] sm:$0xff] %vm2736, %v2693
        %2764 = vst.msk [vmem:[#allocation5 + $0x1b0] sm:$0xff] %vm2736, %v2695
        %2765 = vst.msk [vmem:[#allocation5 + $0x1c0] sm:$0xff] %vm2736, %v2697
        %2766 = vst.msk [vmem:[#allocation5 + $0x1d0] sm:$0xff] %vm2736, %v2699
        %2767 = vst.msk [vmem:[#allocation5 + $0x1e0] sm:$0xff] %vm2736, %v2701
        %2768 = vst.msk [vmem:[#allocation5 + $0x1f0] sm:$0xff] %vm2736, %v2703
        %vm2769 = vcmask 1045504
        %v2770 = vrot.slane %v2425, 2
        %v2771 = vrot.slane %v2426, 2
        %v2772 = vsel %vm2769, %v2770, %v2771
        %v2773 = vrot.slane %v2427, 2
        %v2774 = vsel %vm2769, %v2771, %v2773
        %v2775 = vrot.slane %v2428, 2
        %v2776 = vrot.slane %v2429, 2
        %v2777 = vsel %vm2769, %v2775, %v2776
        %v2778 = vrot.slane %v2430, 2
        %v2779 = vsel %vm2769, %v2776, %v2778
        %v2780 = vrot.slane %v2431, 2
        %v2781 = vrot.slane %v2432, 2
        %v2782 = vsel %vm2769, %v2780, %v2781
        %v2783 = vrot.slane %v2433, 2
        %v2784 = vsel %vm2769, %v2781, %v2783
        %v2785 = vrot.slane %v2434, 2
        %v2786 = vrot.slane %v2435, 2
        %v2787 = vsel %vm2769, %v2785, %v2786
        %v2788 = vrot.slane %v2436, 2
        %v2789 = vsel %vm2769, %v2786, %v2788
        %v2790 = vrot.slane %v2437, 2
        %v2791 = vrot.slane %v2438, 2
        %v2792 = vsel %vm2769, %v2790, %v2791
        %v2793 = vrot.slane %v2439, 2
        %v2794 = vsel %vm2769, %v2791, %v2793
        %v2795 = vrot.slane %v2440, 2
        %v2796 = vrot.slane %v2441, 2
        %v2797 = vsel %vm2769, %v2795, %v2796
        %v2798 = vrot.slane %v2442, 2
        %v2799 = vsel %vm2769, %v2796, %v2798
        %v2800 = vrot.slane %v2443, 2
        %v2801 = vrot.slane %v2444, 2
        %v2802 = vsel %vm2769, %v2800, %v2801
        %v2803 = vrot.slane %v2445, 2
        %v2804 = vsel %vm2769, %v2801, %v2803
        %v2805 = vrot.slane %v2446, 2
        %v2806 = vrot.slane %v2447, 2
        %v2807 = vsel %vm2769, %v2805, %v2806
        %v2808 = vrot.slane %v2448, 2
        %v2809 = vsel %vm2769, %v2806, %v2808
        %v2810 = vrot.slane %v2449, 2
        %v2811 = vrot.slane %v2450, 2
        %v2812 = vsel %vm2769, %v2810, %v2811
        %v2813 = vrot.slane %v2451, 2
        %v2814 = vsel %vm2769, %v2811, %v2813
        %v2815 = vrot.slane %v2452, 2
        %v2816 = vrot.slane %v2453, 2
        %v2817 = vsel %vm2769, %v2815, %v2816
        %v2818 = vrot.slane %v2454, 2
        %v2819 = vsel %vm2769, %v2816, %v2818
        %v2820 = vrot.slane %v2455, 2
        %v2821 = vrot.slane %v2456, 2
        %v2822 = vsel %vm2769, %v2820, %v2821
        %v2823 = vrot.slane %v2457, 2
        %v2824 = vsel %vm2769, %v2821, %v2823
        %v2825 = vrot.slane %v2458, 2
        %v2826 = vrot.slane %v2459, 2
        %v2827 = vsel %vm2769, %v2825, %v2826
        %v2828 = vrot.slane %v2460, 2
        %v2829 = vsel %vm2769, %v2826, %v2828
        %v2830 = vrot.slane %v2461, 2
        %v2831 = vrot.slane %v2462, 2
        %v2832 = vsel %vm2769, %v2830, %v2831
        %v2833 = vrot.slane %v2463, 2
        %v2834 = vsel %vm2769, %v2831, %v2833
        %v2835 = vrot.slane %v2464, 2
        %v2836 = vrot.slane %v2465, 2
        %v2837 = vsel %vm2769, %v2835, %v2836
        %v2838 = vrot.slane %v2466, 2
        %v2839 = vsel %vm2769, %v2836, %v2838
        %v2840 = vrot.slane %v2467, 2
        %v2841 = vrot.slane %v2468, 2
        %v2842 = vsel %vm2769, %v2840, %v2841
        %v2843 = vrot.slane %v2469, 2
        %v2844 = vsel %vm2769, %v2841, %v2843
        %v2845 = vrot.slane %v2470, 2
        %v2846 = vrot.slane %v2471, 2
        %v2847 = vsel %vm2769, %v2845, %v2846
        %v2848 = vrot.slane %v2472, 2
        %v2849 = vsel %vm2769, %v2846, %v2848
        %2850 = vrot.lane.b32.xlu0 %v2772, 32
        %v2851 = vpop.permute.xlu0 %2850
        %2852 = vrot.lane.b32.xlu0 %v2774, 32
        %v2853 = vpop.permute.xlu0 %2852
        %2854 = vrot.lane.b32.xlu0 %v2777, 32
        %v2855 = vpop.permute.xlu0 %2854
        %2856 = vrot.lane.b32.xlu0 %v2779, 32
        %v2857 = vpop.permute.xlu0 %2856
        %2858 = vrot.lane.b32.xlu0 %v2782, 32
        %v2859 = vpop.permute.xlu0 %2858
        %2860 = vrot.lane.b32.xlu0 %v2784, 32
        %v2861 = vpop.permute.xlu0 %2860
        %2862 = vrot.lane.b32.xlu0 %v2787, 32
        %v2863 = vpop.permute.xlu0 %2862
        %2864 = vrot.lane.b32.xlu0 %v2789, 32
        %v2865 = vpop.permute.xlu0 %2864
        %2866 = vrot.lane.b32.xlu0 %v2792, 32
        %v2867 = vpop.permute.xlu0 %2866
        %2868 = vrot.lane.b32.xlu0 %v2794, 32
        %v2869 = vpop.permute.xlu0 %2868
        %2870 = vrot.lane.b32.xlu0 %v2797, 32
        %v2871 = vpop.permute.xlu0 %2870
        %2872 = vrot.lane.b32.xlu0 %v2799, 32
        %v2873 = vpop.permute.xlu0 %2872
        %2874 = vrot.lane.b32.xlu0 %v2802, 32
        %v2875 = vpop.permute.xlu0 %2874
        %2876 = vrot.lane.b32.xlu0 %v2804, 32
        %v2877 = vpop.permute.xlu0 %2876
        %2878 = vrot.lane.b32.xlu0 %v2807, 32
        %v2879 = vpop.permute.xlu0 %2878
        %2880 = vrot.lane.b32.xlu0 %v2809, 32
        %v2881 = vpop.permute.xlu0 %2880
        %2882 = vrot.lane.b32.xlu0 %v2812, 32
        %v2883 = vpop.permute.xlu0 %2882
        %2884 = vrot.lane.b32.xlu0 %v2814, 32
        %v2885 = vpop.permute.xlu0 %2884
        %2886 = vrot.lane.b32.xlu0 %v2817, 32
        %v2887 = vpop.permute.xlu0 %2886
        %2888 = vrot.lane.b32.xlu0 %v2819, 32
        %v2889 = vpop.permute.xlu0 %2888
        %2890 = vrot.lane.b32.xlu0 %v2822, 32
        %v2891 = vpop.permute.xlu0 %2890
        %2892 = vrot.lane.b32.xlu0 %v2824, 32
        %v2893 = vpop.permute.xlu0 %2892
        %2894 = vrot.lane.b32.xlu0 %v2827, 32
        %v2895 = vpop.permute.xlu0 %2894
        %2896 = vrot.lane.b32.xlu0 %v2829, 32
        %v2897 = vpop.permute.xlu0 %2896
        %2898 = vrot.lane.b32.xlu0 %v2832, 32
        %v2899 = vpop.permute.xlu0 %2898
        %2900 = vrot.lane.b32.xlu0 %v2834, 32
        %v2901 = vpop.permute.xlu0 %2900
        %2902 = vrot.lane.b32.xlu0 %v2837, 32
        %v2903 = vpop.permute.xlu0 %2902
        %2904 = vrot.lane.b32.xlu0 %v2839, 32
        %v2905 = vpop.permute.xlu0 %2904
        %2906 = vrot.lane.b32.xlu0 %v2842, 32
        %v2907 = vpop.permute.xlu0 %2906
        %2908 = vrot.lane.b32.xlu0 %v2844, 32
        %v2909 = vpop.permute.xlu0 %2908
        %2910 = vrot.lane.b32.xlu0 %v2847, 32
        %v2911 = vpop.permute.xlu0 %2910
        %2912 = vrot.lane.b32.xlu0 %v2849, 32
        %v2913 = vpop.permute.xlu0 %2912
        %vm2946 = vcmask 392448
        %2947 = vst.msk [vmem:[#allocation5] sm:$0xff] %vm2946, %v2851
        %2948 = vst.msk [vmem:[#allocation5 + $0x10] sm:$0xff] %vm2946, %v2853
        %2949 = vst.msk [vmem:[#allocation5 + $0x20] sm:$0xff] %vm2946, %v2855
        %2950 = vst.msk [vmem:[#allocation5 + $0x30] sm:$0xff] %vm2946, %v2857
        %2951 = vst.msk [vmem:[#allocation5 + $0x40] sm:$0xff] %vm2946, %v2859
        %2952 = vst.msk [vmem:[#allocation5 + $0x50] sm:$0xff] %vm2946, %v2861
        %2953 = vst.msk [vmem:[#allocation5 + $0x60] sm:$0xff] %vm2946, %v2863
        %2954 = vst.msk [vmem:[#allocation5 + $0x70] sm:$0xff] %vm2946, %v2865
        %2955 = vst.msk [vmem:[#allocation5 + $0x80] sm:$0xff] %vm2946, %v2867
        %2956 = vst.msk [vmem:[#allocation5 + $0x90] sm:$0xff] %vm2946, %v2869
        %2957 = vst.msk [vmem:[#allocation5 + $0xa0] sm:$0xff] %vm2946, %v2871
        %2958 = vst.msk [vmem:[#allocation5 + $0xb0] sm:$0xff] %vm2946, %v2873
        %2959 = vst.msk [vmem:[#allocation5 + $0xc0] sm:$0xff] %vm2946, %v2875
        %2960 = vst.msk [vmem:[#allocation5 + $0xd0] sm:$0xff] %vm2946, %v2877
        %2961 = vst.msk [vmem:[#allocation5 + $0xe0] sm:$0xff] %vm2946, %v2879
        %2962 = vst.msk [vmem:[#allocation5 + $0xf0] sm:$0xff] %vm2946, %v2881
        %2963 = vst.msk [vmem:[#allocation5 + $0x100] sm:$0xff] %vm2946, %v2883
        %2964 = vst.msk [vmem:[#allocation5 + $0x110] sm:$0xff] %vm2946, %v2885
        %2965 = vst.msk [vmem:[#allocation5 + $0x120] sm:$0xff] %vm2946, %v2887
        %2966 = vst.msk [vmem:[#allocation5 + $0x130] sm:$0xff] %vm2946, %v2889
        %2967 = vst.msk [vmem:[#allocation5 + $0x140] sm:$0xff] %vm2946, %v2891
        %2968 = vst.msk [vmem:[#allocation5 + $0x150] sm:$0xff] %vm2946, %v2893
        %2969 = vst.msk [vmem:[#allocation5 + $0x160] sm:$0xff] %vm2946, %v2895
        %2970 = vst.msk [vmem:[#allocation5 + $0x170] sm:$0xff] %vm2946, %v2897
        %2971 = vst.msk [vmem:[#allocation5 + $0x180] sm:$0xff] %vm2946, %v2899
        %2972 = vst.msk [vmem:[#allocation5 + $0x190] sm:$0xff] %vm2946, %v2901
        %2973 = vst.msk [vmem:[#allocation5 + $0x1a0] sm:$0xff] %vm2946, %v2903
        %2974 = vst.msk [vmem:[#allocation5 + $0x1b0] sm:$0xff] %vm2946, %v2905
        %2975 = vst.msk [vmem:[#allocation5 + $0x1c0] sm:$0xff] %vm2946, %v2907
        %2976 = vst.msk [vmem:[#allocation5 + $0x1d0] sm:$0xff] %vm2946, %v2909
        %2977 = vst.msk [vmem:[#allocation5 + $0x1e0] sm:$0xff] %vm2946, %v2911
        %2978 = vst.msk [vmem:[#allocation5 + $0x1f0] sm:$0xff] %vm2946, %v2913
        %2981 = vrot.lane.b32.xlu0 %v2428, 48
        %v2982 = vpop.permute.xlu0 %2981
        %2983 = vrot.lane.b32.xlu0 %v2429, 48
        %v2984 = vpop.permute.xlu0 %2983
        %2985 = vrot.lane.b32.xlu0 %v2431, 48
        %v2986 = vpop.permute.xlu0 %2985
        %2987 = vrot.lane.b32.xlu0 %v2432, 48
        %v2988 = vpop.permute.xlu0 %2987
        %2989 = vrot.lane.b32.xlu0 %v2434, 48
        %v2990 = vpop.permute.xlu0 %2989
        %2991 = vrot.lane.b32.xlu0 %v2435, 48
        %v2992 = vpop.permute.xlu0 %2991
        %2993 = vrot.lane.b32.xlu0 %v2437, 48
        %v2994 = vpop.permute.xlu0 %2993
        %2995 = vrot.lane.b32.xlu0 %v2438, 48
        %v2996 = vpop.permute.xlu0 %2995
        %2997 = vrot.lane.b32.xlu0 %v2440, 48
        %v2998 = vpop.permute.xlu0 %2997
        %2999 = vrot.lane.b32.xlu0 %v2441, 48
        %v3000 = vpop.permute.xlu0 %2999
        %3001 = vrot.lane.b32.xlu0 %v2443, 48
        %v3002 = vpop.permute.xlu0 %3001
        %3003 = vrot.lane.b32.xlu0 %v2444, 48
        %v3004 = vpop.permute.xlu0 %3003
        %3005 = vrot.lane.b32.xlu0 %v2446, 48
        %v3006 = vpop.permute.xlu0 %3005
        %3007 = vrot.lane.b32.xlu0 %v2447, 48
        %v3008 = vpop.permute.xlu0 %3007
        %3009 = vrot.lane.b32.xlu0 %v2449, 48
        %v3010 = vpop.permute.xlu0 %3009
        %3011 = vrot.lane.b32.xlu0 %v2450, 48
        %v3012 = vpop.permute.xlu0 %3011
        %3013 = vrot.lane.b32.xlu0 %v2452, 48
        %v3014 = vpop.permute.xlu0 %3013
        %3015 = vrot.lane.b32.xlu0 %v2453, 48
        %v3016 = vpop.permute.xlu0 %3015
        %3017 = vrot.lane.b32.xlu0 %v2455, 48
        %v3018 = vpop.permute.xlu0 %3017
        %3019 = vrot.lane.b32.xlu0 %v2456, 48
        %v3020 = vpop.permute.xlu0 %3019
        %3021 = vrot.lane.b32.xlu0 %v2458, 48
        %v3022 = vpop.permute.xlu0 %3021
        %3023 = vrot.lane.b32.xlu0 %v2459, 48
        %v3024 = vpop.permute.xlu0 %3023
        %3025 = vrot.lane.b32.xlu0 %v2461, 48
        %v3026 = vpop.permute.xlu0 %3025
        %3027 = vrot.lane.b32.xlu0 %v2462, 48
        %v3028 = vpop.permute.xlu0 %3027
        %3029 = vrot.lane.b32.xlu0 %v2464, 48
        %v3030 = vpop.permute.xlu0 %3029
        %3031 = vrot.lane.b32.xlu0 %v2465, 48
        %v3032 = vpop.permute.xlu0 %3031
        %3033 = vrot.lane.b32.xlu0 %v2467, 48
        %v3034 = vpop.permute.xlu0 %3033
        %3035 = vrot.lane.b32.xlu0 %v2468, 48
        %v3036 = vpop.permute.xlu0 %3035
        %3037 = vrot.lane.b32.xlu0 %v2470, 48
        %v3038 = vpop.permute.xlu0 %3037
        %3039 = vrot.lane.b32.xlu0 %v2471, 48
        %v3040 = vpop.permute.xlu0 %3039
        %3041 = vrot.lane.b32.xlu0 %v2473, 48
        %v3042 = vpop.permute.xlu0 %3041
        %3043 = vrot.lane.b32.xlu0 %v2474, 48
        %v3044 = vpop.permute.xlu0 %3043
        %vm3077 = vcmask 523648
        %3078 = vst.msk [vmem:[#allocation5] sm:$0xff] %vm3077, %v2982
        %3079 = vst.msk [vmem:[#allocation5 + $0x10] sm:$0xff] %vm3077, %v2984
        %3080 = vst.msk [vmem:[#allocation5 + $0x20] sm:$0xff] %vm3077, %v2986
        %3081 = vst.msk [vmem:[#allocation5 + $0x30] sm:$0xff] %vm3077, %v2988
        %3082 = vst.msk [vmem:[#allocation5 + $0x40] sm:$0xff] %vm3077, %v2990
        %3083 = vst.msk [vmem:[#allocation5 + $0x50] sm:$0xff] %vm3077, %v2992
        %3084 = vst.msk [vmem:[#allocation5 + $0x60] sm:$0xff] %vm3077, %v2994
        %3085 = vst.msk [vmem:[#allocation5 + $0x70] sm:$0xff] %vm3077, %v2996
        %3086 = vst.msk [vmem:[#allocation5 + $0x80] sm:$0xff] %vm3077, %v2998
        %3087 = vst.msk [vmem:[#allocation5 + $0x90] sm:$0xff] %vm3077, %v3000
        %3088 = vst.msk [vmem:[#allocation5 + $0xa0] sm:$0xff] %vm3077, %v3002
        %3089 = vst.msk [vmem:[#allocation5 + $0xb0] sm:$0xff] %vm3077, %v3004
        %3090 = vst.msk [vmem:[#allocation5 + $0xc0] sm:$0xff] %vm3077, %v3006
        %3091 = vst.msk [vmem:[#allocation5 + $0xd0] sm:$0xff] %vm3077, %v3008
        %3092 = vst.msk [vmem:[#allocation5 + $0xe0] sm:$0xff] %vm3077, %v3010
        %3093 = vst.msk [vmem:[#allocation5 + $0xf0] sm:$0xff] %vm3077, %v3012
        %3094 = vst.msk [vmem:[#allocation5 + $0x100] sm:$0xff] %vm3077, %v3014
        %3095 = vst.msk [vmem:[#allocation5 + $0x110] sm:$0xff] %vm3077, %v3016
        %3096 = vst.msk [vmem:[#allocation5 + $0x120] sm:$0xff] %vm3077, %v3018
        %3097 = vst.msk [vmem:[#allocation5 + $0x130] sm:$0xff] %vm3077, %v3020
        %3098 = vst.msk [vmem:[#allocation5 + $0x140] sm:$0xff] %vm3077, %v3022
        %3099 = vst.msk [vmem:[#allocation5 + $0x150] sm:$0xff] %vm3077, %v3024
        %3100 = vst.msk [vmem:[#allocation5 + $0x160] sm:$0xff] %vm3077, %v3026
        %3101 = vst.msk [vmem:[#allocation5 + $0x170] sm:$0xff] %vm3077, %v3028
        %3102 = vst.msk [vmem:[#allocation5 + $0x180] sm:$0xff] %vm3077, %v3030
        %3103 = vst.msk [vmem:[#allocation5 + $0x190] sm:$0xff] %vm3077, %v3032
        %3104 = vst.msk [vmem:[#allocation5 + $0x1a0] sm:$0xff] %vm3077, %v3034
        %3105 = vst.msk [vmem:[#allocation5 + $0x1b0] sm:$0xff] %vm3077, %v3036
        %3106 = vst.msk [vmem:[#allocation5 + $0x1c0] sm:$0xff] %vm3077, %v3038
        %3107 = vst.msk [vmem:[#allocation5 + $0x1d0] sm:$0xff] %vm3077, %v3040
        %3108 = vst.msk [vmem:[#allocation5 + $0x1e0] sm:$0xff] %vm3077, %v3042
        %3109 = vst.msk [vmem:[#allocation5 + $0x1f0] sm:$0xff] %vm3077, %v3044
        %v3111 = vrot.slane %v2473, 1
        %v3112 = vrot.slane %v2474, 1
        %v3113 = vsel %vm2559, %v3111, %v3112
        %v3114 = vrot.slane %v2475, 1
        %v3115 = vsel %vm2559, %v3112, %v3114
        %3116 = vrot.lane.b32.xlu0 %v2567, 64
        %v3117 = vpop.permute.xlu0 %3116
        %3118 = vrot.lane.b32.xlu0 %v2569, 64
        %v3119 = vpop.permute.xlu0 %3118
        %3120 = vrot.lane.b32.xlu0 %v2572, 64
        %v3121 = vpop.permute.xlu0 %3120
        %3122 = vrot.lane.b32.xlu0 %v2574, 64
        %v3123 = vpop.permute.xlu0 %3122
        %3124 = vrot.lane.b32.xlu0 %v2577, 64
        %v3125 = vpop.permute.xlu0 %3124
        %3126 = vrot.lane.b32.xlu0 %v2579, 64
        %v3127 = vpop.permute.xlu0 %3126
        %3128 = vrot.lane.b32.xlu0 %v2582, 64
        %v3129 = vpop.permute.xlu0 %3128
        %3130 = vrot.lane.b32.xlu0 %v2584, 64
        %v3131 = vpop.permute.xlu0 %3130
        %3132 = vrot.lane.b32.xlu0 %v2587, 64
        %v3133 = vpop.permute.xlu0 %3132
        %3134 = vrot.lane.b32.xlu0 %v2589, 64
        %v3135 = vpop.permute.xlu0 %3134
        %3136 = vrot.lane.b32.xlu0 %v2592, 64
        %v3137 = vpop.permute.xlu0 %3136
        %3138 = vrot.lane.b32.xlu0 %v2594, 64
        %v3139 = vpop.permute.xlu0 %3138
        %3140 = vrot.lane.b32.xlu0 %v2597, 64
        %v3141 = vpop.permute.xlu0 %3140
        %3142 = vrot.lane.b32.xlu0 %v2599, 64
        %v3143 = vpop.permute.xlu0 %3142
        %3144 = vrot.lane.b32.xlu0 %v2602, 64
        %v3145 = vpop.permute.xlu0 %3144
        %3146 = vrot.lane.b32.xlu0 %v2604, 64
        %v3147 = vpop.permute.xlu0 %3146
        %3148 = vrot.lane.b32.xlu0 %v2607, 64
        %v3149 = vpop.permute.xlu0 %3148
        %3150 = vrot.lane.b32.xlu0 %v2609, 64
        %v3151 = vpop.permute.xlu0 %3150
        %3152 = vrot.lane.b32.xlu0 %v2612, 64
        %v3153 = vpop.permute.xlu0 %3152
        %3154 = vrot.lane.b32.xlu0 %v2614, 64
        %v3155 = vpop.permute.xlu0 %3154
        %3156 = vrot.lane.b32.xlu0 %v2617, 64
        %v3157 = vpop.permute.xlu0 %3156
        %3158 = vrot.lane.b32.xlu0 %v2619, 64
        %v3159 = vpop.permute.xlu0 %3158
        %3160 = vrot.lane.b32.xlu0 %v2622, 64
        %v3161 = vpop.permute.xlu0 %3160
        %3162 = vrot.lane.b32.xlu0 %v2624, 64
        %v3163 = vpop.permute.xlu0 %3162
        %3164 = vrot.lane.b32.xlu0 %v2627, 64
        %v3165 = vpop.permute.xlu0 %3164
        %3166 = vrot.lane.b32.xlu0 %v2629, 64
        %v3167 = vpop.permute.xlu0 %3166
        %3168 = vrot.lane.b32.xlu0 %v2632, 64
        %v3169 = vpop.permute.xlu0 %3168
        %3170 = vrot.lane.b32.xlu0 %v2634, 64
        %v3171 = vpop.permute.xlu0 %3170
        %3172 = vrot.lane.b32.xlu0 %v2637, 64
        %v3173 = vpop.permute.xlu0 %3172
        %3174 = vrot.lane.b32.xlu0 %v2639, 64
        %v3175 = vpop.permute.xlu0 %3174
        %3176 = vrot.lane.b32.xlu0 %v3113, 64
        %v3177 = vpop.permute.xlu0 %3176
        %3178 = vrot.lane.b32.xlu0 %v3115, 64
        %v3179 = vpop.permute.xlu0 %3178
        %vm3212 = vcmask 654848
        %3213 = vst.msk [vmem:[#allocation5] sm:$0xff] %vm3212, %v3117
        %3214 = vst.msk [vmem:[#allocation5 + $0x10] sm:$0xff] %vm3212, %v3119
        %3215 = vst.msk [vmem:[#allocation5 + $0x20] sm:$0xff] %vm3212, %v3121
        %3216 = vst.msk [vmem:[#allocation5 + $0x30] sm:$0xff] %vm3212, %v3123
        %3217 = vst.msk [vmem:[#allocation5 + $0x40] sm:$0xff] %vm3212, %v3125
        %3218 = vst.msk [vmem:[#allocation5 + $0x50] sm:$0xff] %vm3212, %v3127
        %3219 = vst.msk [vmem:[#allocation5 + $0x60] sm:$0xff] %vm3212, %v3129
        %3220 = vst.msk [vmem:[#allocation5 + $0x70] sm:$0xff] %vm3212, %v3131
        %3221 = vst.msk [vmem:[#allocation5 + $0x80] sm:$0xff] %vm3212, %v3133
        %3222 = vst.msk [vmem:[#allocation5 + $0x90] sm:$0xff] %vm3212, %v3135
        %3223 = vst.msk [vmem:[#allocation5 + $0xa0] sm:$0xff] %vm3212, %v3137
        %3224 = vst.msk [vmem:[#allocation5 + $0xb0] sm:$0xff] %vm3212, %v3139
        %3225 = vst.msk [vmem:[#allocation5 + $0xc0] sm:$0xff] %vm3212, %v3141
        %3226 = vst.msk [vmem:[#allocation5 + $0xd0] sm:$0xff] %vm3212, %v3143
        %3227 = vst.msk [vmem:[#allocation5 + $0xe0] sm:$0xff] %vm3212, %v3145
        %3228 = vst.msk [vmem:[#allocation5 + $0xf0] sm:$0xff] %vm3212, %v3147
        %3229 = vst.msk [vmem:[#allocation5 + $0x100] sm:$0xff] %vm3212, %v3149
        %3230 = vst.msk [vmem:[#allocation5 + $0x110] sm:$0xff] %vm3212, %v3151
        %3231 = vst.msk [vmem:[#allocation5 + $0x120] sm:$0xff] %vm3212, %v3153
        %3232 = vst.msk [vmem:[#allocation5 + $0x130] sm:$0xff] %vm3212, %v3155
        %3233 = vst.msk [vmem:[#allocation5 + $0x140] sm:$0xff] %vm3212, %v3157
        %3234 = vst.msk [vmem:[#allocation5 + $0x150] sm:$0xff] %vm3212, %v3159
        %3235 = vst.msk [vmem:[#allocation5 + $0x160] sm:$0xff] %vm3212, %v3161
        %3236 = vst.msk [vmem:[#allocation5 + $0x170] sm:$0xff] %vm3212, %v3163
        %3237 = vst.msk [vmem:[#allocation5 + $0x180] sm:$0xff] %vm3212, %v3165
        %3238 = vst.msk [vmem:[#allocation5 + $0x190] sm:$0xff] %vm3212, %v3167
        %3239 = vst.msk [vmem:[#allocation5 + $0x1a0] sm:$0xff] %vm3212, %v3169
        %3240 = vst.msk [vmem:[#allocation5 + $0x1b0] sm:$0xff] %vm3212, %v3171
        %3241 = vst.msk [vmem:[#allocation5 + $0x1c0] sm:$0xff] %vm3212, %v3173
        %3242 = vst.msk [vmem:[#allocation5 + $0x1d0] sm:$0xff] %vm3212, %v3175
        %3243 = vst.msk [vmem:[#allocation5 + $0x1e0] sm:$0xff] %vm3212, %v3177
        %3244 = vst.msk [vmem:[#allocation5 + $0x1f0] sm:$0xff] %vm3212, %v3179
        %v3245 = vrot.slane %v2473, 2
        %v3246 = vrot.slane %v2474, 2
        %v3247 = vsel %vm2769, %v3245, %v3246
        %v3248 = vrot.slane %v2475, 2
        %v3249 = vsel %vm2769, %v3246, %v3248
        %3250 = vrot.lane.b32.xlu0 %v2777, 80
        %v3251 = vpop.permute.xlu0 %3250
        %3252 = vrot.lane.b32.xlu0 %v2779, 80
        %v3253 = vpop.permute.xlu0 %3252
        %3254 = vrot.lane.b32.xlu0 %v2782, 80
        %v3255 = vpop.permute.xlu0 %3254
        %3256 = vrot.lane.b32.xlu0 %v2784, 80
        %v3257 = vpop.permute.xlu0 %3256
        %3258 = vrot.lane.b32.xlu0 %v2787, 80
        %v3259 = vpop.permute.xlu0 %3258
        %3260 = vrot.lane.b32.xlu0 %v2789, 80
        %v3261 = vpop.permute.xlu0 %3260
        %3262 = vrot.lane.b32.xlu0 %v2792, 80
        %v3263 = vpop.permute.xlu0 %3262
        %3264 = vrot.lane.b32.xlu0 %v2794, 80
        %v3265 = vpop.permute.xlu0 %3264
        %3266 = vrot.lane.b32.xlu0 %v2797, 80
        %v3267 = vpop.permute.xlu0 %3266
        %3268 = vrot.lane.b32.xlu0 %v2799, 80
        %v3269 = vpop.permute.xlu0 %3268
        %3270 = vrot.lane.b32.xlu0 %v2802, 80
        %v3271 = vpop.permute.xlu0 %3270
        %3272 = vrot.lane.b32.xlu0 %v2804, 80
        %v3273 = vpop.permute.xlu0 %3272
        %3274 = vrot.lane.b32.xlu0 %v2807, 80
        %v3275 = vpop.permute.xlu0 %3274
        %3276 = vrot.lane.b32.xlu0 %v2809, 80
        %v3277 = vpop.permute.xlu0 %3276
        %3278 = vrot.lane.b32.xlu0 %v2812, 80
        %v3279 = vpop.permute.xlu0 %3278
        %3280 = vrot.lane.b32.xlu0 %v2814, 80
        %v3281 = vpop.permute.xlu0 %3280
        %3282 = vrot.lane.b32.xlu0 %v2817, 80
        %v3283 = vpop.permute.xlu0 %3282
        %3284 = vrot.lane.b32.xlu0 %v2819, 80
        %v3285 = vpop.permute.xlu0 %3284
        %3286 = vrot.lane.b32.xlu0 %v2822, 80
        %v3287 = vpop.permute.xlu0 %3286
        %3288 = vrot.lane.b32.xlu0 %v2824, 80
        %v3289 = vpop.permute.xlu0 %3288
        %3290 = vrot.lane.b32.xlu0 %v2827, 80
        %v3291 = vpop.permute.xlu0 %3290
        %3292 = vrot.lane.b32.xlu0 %v2829, 80
        %v3293 = vpop.permute.xlu0 %3292
        %3294 = vrot.lane.b32.xlu0 %v2832, 80
        %v3295 = vpop.permute.xlu0 %3294
        %3296 = vrot.lane.b32.xlu0 %v2834, 80
        %v3297 = vpop.permute.xlu0 %3296
        %3298 = vrot.lane.b32.xlu0 %v2837, 80
        %v3299 = vpop.permute.xlu0 %3298
        %3300 = vrot.lane.b32.xlu0 %v2839, 80
        %v3301 = vpop.permute.xlu0 %3300
        %3302 = vrot.lane.b32.xlu0 %v2842, 80
        %v3303 = vpop.permute.xlu0 %3302
        %3304 = vrot.lane.b32.xlu0 %v2844, 80
        %v3305 = vpop.permute.xlu0 %3304
        %3306 = vrot.lane.b32.xlu0 %v2847, 80
        %v3307 = vpop.permute.xlu0 %3306
        %3308 = vrot.lane.b32.xlu0 %v2849, 80
        %v3309 = vpop.permute.xlu0 %3308
        %3310 = vrot.lane.b32.xlu0 %v3247, 80
        %v3311 = vpop.permute.xlu0 %3310
        %3312 = vrot.lane.b32.xlu0 %v3249, 80
        %v3313 = vpop.permute.xlu0 %3312
        %vm3346 = vcmask 786048
        %3347 = vst.msk [vmem:[#allocation5] sm:$0xff] %vm3346, %v3251
        %3348 = vst.msk [vmem:[#allocation5 + $0x10] sm:$0xff] %vm3346, %v3253
        %3349 = vst.msk [vmem:[#allocation5 + $0x20] sm:$0xff] %vm3346, %v3255
        %3350 = vst.msk [vmem:[#allocation5 + $0x30] sm:$0xff] %vm3346, %v3257
        %3351 = vst.msk [vmem:[#allocation5 + $0x40] sm:$0xff] %vm3346, %v3259
        %3352 = vst.msk [vmem:[#allocation5 + $0x50] sm:$0xff] %vm3346, %v3261
        %3353 = vst.msk [vmem:[#allocation5 + $0x60] sm:$0xff] %vm3346, %v3263
        %3354 = vst.msk [vmem:[#allocation5 + $0x70] sm:$0xff] %vm3346, %v3265
        %3355 = vst.msk [vmem:[#allocation5 + $0x80] sm:$0xff] %vm3346, %v3267
        %3356 = vst.msk [vmem:[#allocation5 + $0x90] sm:$0xff] %vm3346, %v3269
        %3357 = vst.msk [vmem:[#allocation5 + $0xa0] sm:$0xff] %vm3346, %v3271
        %3358 = vst.msk [vmem:[#allocation5 + $0xb0] sm:$0xff] %vm3346, %v3273
        %3359 = vst.msk [vmem:[#allocation5 + $0xc0] sm:$0xff] %vm3346, %v3275
        %3360 = vst.msk [vmem:[#allocation5 + $0xd0] sm:$0xff] %vm3346, %v3277
        %3361 = vst.msk [vmem:[#allocation5 + $0xe0] sm:$0xff] %vm3346, %v3279
        %3362 = vst.msk [vmem:[#allocation5 + $0xf0] sm:$0xff] %vm3346, %v3281
        %3363 = vst.msk [vmem:[#allocation5 + $0x100] sm:$0xff] %vm3346, %v3283
        %3364 = vst.msk [vmem:[#allocation5 + $0x110] sm:$0xff] %vm3346, %v3285
        %3365 = vst.msk [vmem:[#allocation5 + $0x120] sm:$0xff] %vm3346, %v3287
        %3366 = vst.msk [vmem:[#allocation5 + $0x130] sm:$0xff] %vm3346, %v3289
        %3367 = vst.msk [vmem:[#allocation5 + $0x140] sm:$0xff] %vm3346, %v3291
        %3368 = vst.msk [vmem:[#allocation5 + $0x150] sm:$0xff] %vm3346, %v3293
        %3369 = vst.msk [vmem:[#allocation5 + $0x160] sm:$0xff] %vm3346, %v3295
        %3370 = vst.msk [vmem:[#allocation5 + $0x170] sm:$0xff] %vm3346, %v3297
        %3371 = vst.msk [vmem:[#allocation5 + $0x180] sm:$0xff] %vm3346, %v3299
        %3372 = vst.msk [vmem:[#allocation5 + $0x190] sm:$0xff] %vm3346, %v3301
        %3373 = vst.msk [vmem:[#allocation5 + $0x1a0] sm:$0xff] %vm3346, %v3303
        %3374 = vst.msk [vmem:[#allocation5 + $0x1b0] sm:$0xff] %vm3346, %v3305
        %3375 = vst.msk [vmem:[#allocation5 + $0x1c0] sm:$0xff] %vm3346, %v3307
        %3376 = vst.msk [vmem:[#allocation5 + $0x1d0] sm:$0xff] %vm3346, %v3309
        %3377 = vst.msk [vmem:[#allocation5 + $0x1e0] sm:$0xff] %vm3346, %v3311
        %3378 = vst.msk [vmem:[#allocation5 + $0x1f0] sm:$0xff] %vm3346, %v3313
        %3381 = vrot.lane.b32.xlu0 %v2431, 96
        %v3382 = vpop.permute.xlu0 %3381
        %3383 = vrot.lane.b32.xlu0 %v2432, 96
        %v3384 = vpop.permute.xlu0 %3383
        %3385 = vrot.lane.b32.xlu0 %v2434, 96
        %v3386 = vpop.permute.xlu0 %3385
        %3387 = vrot.lane.b32.xlu0 %v2435, 96
        %v3388 = vpop.permute.xlu0 %3387
        %3389 = vrot.lane.b32.xlu0 %v2437, 96
        %v3390 = vpop.permute.xlu0 %3389
        %3391 = vrot.lane.b32.xlu0 %v2438, 96
        %v3392 = vpop.permute.xlu0 %3391
        %3393 = vrot.lane.b32.xlu0 %v2440, 96
        %v3394 = vpop.permute.xlu0 %3393
        %3395 = vrot.lane.b32.xlu0 %v2441, 96
        %v3396 = vpop.permute.xlu0 %3395
        %3397 = vrot.lane.b32.xlu0 %v2443, 96
        %v3398 = vpop.permute.xlu0 %3397
        %3399 = vrot.lane.b32.xlu0 %v2444, 96
        %v3400 = vpop.permute.xlu0 %3399
        %3401 = vrot.lane.b32.xlu0 %v2446, 96
        %v3402 = vpop.permute.xlu0 %3401
        %3403 = vrot.lane.b32.xlu0 %v2447, 96
        %v3404 = vpop.permute.xlu0 %3403
        %3405 = vrot.lane.b32.xlu0 %v2449, 96
        %v3406 = vpop.permute.xlu0 %3405
        %3407 = vrot.lane.b32.xlu0 %v2450, 96
        %v3408 = vpop.permute.xlu0 %3407
        %3409 = vrot.lane.b32.xlu0 %v2452, 96
        %v3410 = vpop.permute.xlu0 %3409
        %3411 = vrot.lane.b32.xlu0 %v2453, 96
        %v3412 = vpop.permute.xlu0 %3411
        %3413 = vrot.lane.b32.xlu0 %v2455, 96
        %v3414 = vpop.permute.xlu0 %3413
        %3415 = vrot.lane.b32.xlu0 %v2456, 96
        %v3416 = vpop.permute.xlu0 %3415
        %3417 = vrot.lane.b32.xlu0 %v2458, 96
        %v3418 = vpop.permute.xlu0 %3417
        %3419 = vrot.lane.b32.xlu0 %v2459, 96
        %v3420 = vpop.permute.xlu0 %3419
        %3421 = vrot.lane.b32.xlu0 %v2461, 96
        %v3422 = vpop.permute.xlu0 %3421
        %3423 = vrot.lane.b32.xlu0 %v2462, 96
        %v3424 = vpop.permute.xlu0 %3423
        %3425 = vrot.lane.b32.xlu0 %v2464, 96
        %v3426 = vpop.permute.xlu0 %3425
        %3427 = vrot.lane.b32.xlu0 %v2465, 96
        %v3428 = vpop.permute.xlu0 %3427
        %3429 = vrot.lane.b32.xlu0 %v2467, 96
        %v3430 = vpop.permute.xlu0 %3429
        %3431 = vrot.lane.b32.xlu0 %v2468, 96
        %v3432 = vpop.permute.xlu0 %3431
        %3433 = vrot.lane.b32.xlu0 %v2470, 96
        %v3434 = vpop.permute.xlu0 %3433
        %3435 = vrot.lane.b32.xlu0 %v2471, 96
        %v3436 = vpop.permute.xlu0 %3435
        %3437 = vrot.lane.b32.xlu0 %v2473, 96
        %v3438 = vpop.permute.xlu0 %3437
        %3439 = vrot.lane.b32.xlu0 %v2474, 96
        %v3440 = vpop.permute.xlu0 %3439
        %3441 = vrot.lane.b32.xlu0 %v2476, 96
        %v3442 = vpop.permute.xlu0 %3441
        %3443 = vrot.lane.b32.xlu0 %v2477, 96
        %v3444 = vpop.permute.xlu0 %3443
        %vm3477 = vcmask 917248
        %3478 = vst.msk [vmem:[#allocation5] sm:$0xff] %vm3477, %v3382
        %3479 = vst.msk [vmem:[#allocation5 + $0x10] sm:$0xff] %vm3477, %v3384
        %3480 = vst.msk [vmem:[#allocation5 + $0x20] sm:$0xff] %vm3477, %v3386
        %3481 = vst.msk [vmem:[#allocation5 + $0x30] sm:$0xff] %vm3477, %v3388
        %3482 = vst.msk [vmem:[#allocation5 + $0x40] sm:$0xff] %vm3477, %v3390
        %3483 = vst.msk [vmem:[#allocation5 + $0x50] sm:$0xff] %vm3477, %v3392
        %3484 = vst.msk [vmem:[#allocation5 + $0x60] sm:$0xff] %vm3477, %v3394
        %3485 = vst.msk [vmem:[#allocation5 + $0x70] sm:$0xff] %vm3477, %v3396
        %3486 = vst.msk [vmem:[#allocation5 + $0x80] sm:$0xff] %vm3477, %v3398
        %3487 = vst.msk [vmem:[#allocation5 + $0x90] sm:$0xff] %vm3477, %v3400
        %3488 = vst.msk [vmem:[#allocation5 + $0xa0] sm:$0xff] %vm3477, %v3402
        %3489 = vst.msk [vmem:[#allocation5 + $0xb0] sm:$0xff] %vm3477, %v3404
        %3490 = vst.msk [vmem:[#allocation5 + $0xc0] sm:$0xff] %vm3477, %v3406
        %3491 = vst.msk [vmem:[#allocation5 + $0xd0] sm:$0xff] %vm3477, %v3408
        %3492 = vst.msk [vmem:[#allocation5 + $0xe0] sm:$0xff] %vm3477, %v3410
        %3493 = vst.msk [vmem:[#allocation5 + $0xf0] sm:$0xff] %vm3477, %v3412
        %3494 = vst.msk [vmem:[#allocation5 + $0x100] sm:$0xff] %vm3477, %v3414
        %3495 = vst.msk [vmem:[#allocation5 + $0x110] sm:$0xff] %vm3477, %v3416
        %3496 = vst.msk [vmem:[#allocation5 + $0x120] sm:$0xff] %vm3477, %v3418
        %3497 = vst.msk [vmem:[#allocation5 + $0x130] sm:$0xff] %vm3477, %v3420
        %3498 = vst.msk [vmem:[#allocation5 + $0x140] sm:$0xff] %vm3477, %v3422
        %3499 = vst.msk [vmem:[#allocation5 + $0x150] sm:$0xff] %vm3477, %v3424
        %3500 = vst.msk [vmem:[#allocation5 + $0x160] sm:$0xff] %vm3477, %v3426
        %3501 = vst.msk [vmem:[#allocation5 + $0x170] sm:$0xff] %vm3477, %v3428
        %3502 = vst.msk [vmem:[#allocation5 + $0x180] sm:$0xff] %vm3477, %v3430
        %3503 = vst.msk [vmem:[#allocation5 + $0x190] sm:$0xff] %vm3477, %v3432
        %3504 = vst.msk [vmem:[#allocation5 + $0x1a0] sm:$0xff] %vm3477, %v3434
        %3505 = vst.msk [vmem:[#allocation5 + $0x1b0] sm:$0xff] %vm3477, %v3436
        %3506 = vst.msk [vmem:[#allocation5 + $0x1c0] sm:$0xff] %vm3477, %v3438
        %3507 = vst.msk [vmem:[#allocation5 + $0x1d0] sm:$0xff] %vm3477, %v3440
        %3508 = vst.msk [vmem:[#allocation5 + $0x1e0] sm:$0xff] %vm3477, %v3442
        %3509 = vst.msk [vmem:[#allocation5 + $0x1f0] sm:$0xff] %vm3477, %v3444
        %v3511 = vrot.slane %v2476, 1
        %v3512 = vrot.slane %v2477, 1
        %v3513 = vsel %vm2559, %v3511, %v3512
        %v3514 = vrot.slane %v2478, 1
        %v3515 = vsel %vm2559, %v3512, %v3514
        %3516 = vrot.lane.b32.xlu0 %v2572, 112
        %v3517 = vpop.permute.xlu0 %3516
        %3518 = vrot.lane.b32.xlu0 %v2574, 112
        %v3519 = vpop.permute.xlu0 %3518
        %3520 = vrot.lane.b32.xlu0 %v2577, 112
        %v3521 = vpop.permute.xlu0 %3520
        %3522 = vrot.lane.b32.xlu0 %v2579, 112
        %v3523 = vpop.permute.xlu0 %3522
        %3524 = vrot.lane.b32.xlu0 %v2582, 112
        %v3525 = vpop.permute.xlu0 %3524
        %3526 = vrot.lane.b32.xlu0 %v2584, 112
        %v3527 = vpop.permute.xlu0 %3526
        %3528 = vrot.lane.b32.xlu0 %v2587, 112
        %v3529 = vpop.permute.xlu0 %3528
        %3530 = vrot.lane.b32.xlu0 %v2589, 112
        %v3531 = vpop.permute.xlu0 %3530
        %3532 = vrot.lane.b32.xlu0 %v2592, 112
        %v3533 = vpop.permute.xlu0 %3532
        %3534 = vrot.lane.b32.xlu0 %v2594, 112
        %v3535 = vpop.permute.xlu0 %3534
        %3536 = vrot.lane.b32.xlu0 %v2597, 112
        %v3537 = vpop.permute.xlu0 %3536
        %3538 = vrot.lane.b32.xlu0 %v2599, 112
        %v3539 = vpop.permute.xlu0 %3538
        %3540 = vrot.lane.b32.xlu0 %v2602, 112
        %v3541 = vpop.permute.xlu0 %3540
        %3542 = vrot.lane.b32.xlu0 %v2604, 112
        %v3543 = vpop.permute.xlu0 %3542
        %3544 = vrot.lane.b32.xlu0 %v2607, 112
        %v3545 = vpop.permute.xlu0 %3544
        %3546 = vrot.lane.b32.xlu0 %v2609, 112
        %v3547 = vpop.permute.xlu0 %3546
        %3548 = vrot.lane.b32.xlu0 %v2612, 112
        %v3549 = vpop.permute.xlu0 %3548
        %3550 = vrot.lane.b32.xlu0 %v2614, 112
        %v3551 = vpop.permute.xlu0 %3550
        %3552 = vrot.lane.b32.xlu0 %v2617, 112
        %v3553 = vpop.permute.xlu0 %3552
        %3554 = vrot.lane.b32.xlu0 %v2619, 112
        %v3555 = vpop.permute.xlu0 %3554
        %3556 = vrot.lane.b32.xlu0 %v2622, 112
        %v3557 = vpop.permute.xlu0 %3556
        %3558 = vrot.lane.b32.xlu0 %v2624, 112
        %v3559 = vpop.permute.xlu0 %3558
        %3560 = vrot.lane.b32.xlu0 %v2627, 112
        %v3561 = vpop.permute.xlu0 %3560
        %3562 = vrot.lane.b32.xlu0 %v2629, 112
        %v3563 = vpop.permute.xlu0 %3562
        %3564 = vrot.lane.b32.xlu0 %v2632, 112
        %v3565 = vpop.permute.xlu0 %3564
        %3566 = vrot.lane.b32.xlu0 %v2634, 112
        %v3567 = vpop.permute.xlu0 %3566
        %3568 = vrot.lane.b32.xlu0 %v2637, 112
        %v3569 = vpop.permute.xlu0 %3568
        %3570 = vrot.lane.b32.xlu0 %v2639, 112
        %v3571 = vpop.permute.xlu0 %3570
        %3572 = vrot.lane.b32.xlu0 %v3113, 112
        %v3573 = vpop.permute.xlu0 %3572
        %3574 = vrot.lane.b32.xlu0 %v3115, 112
        %v3575 = vpop.permute.xlu0 %3574
        %3576 = vrot.lane.b32.xlu0 %v3513, 112
        %v3577 = vpop.permute.xlu0 %3576
        %3578 = vrot.lane.b32.xlu0 %v3515, 112
        %v3579 = vpop.permute.xlu0 %3578
        %vm3612 = vcmask 1048448
        %3613 = vst.msk [vmem:[#allocation5] sm:$0xff] %vm3612, %v3517
        %3614 = vst.msk [vmem:[#allocation5 + $0x10] sm:$0xff] %vm3612, %v3519
        %3615 = vst.msk [vmem:[#allocation5 + $0x20] sm:$0xff] %vm3612, %v3521
        %3616 = vst.msk [vmem:[#allocation5 + $0x30] sm:$0xff] %vm3612, %v3523
        %3617 = vst.msk [vmem:[#allocation5 + $0x40] sm:$0xff] %vm3612, %v3525
        %3618 = vst.msk [vmem:[#allocation5 + $0x50] sm:$0xff] %vm3612, %v3527
        %3619 = vst.msk [vmem:[#allocation5 + $0x60] sm:$0xff] %vm3612, %v3529
        %3620 = vst.msk [vmem:[#allocation5 + $0x70] sm:$0xff] %vm3612, %v3531
        %3621 = vst.msk [vmem:[#allocation5 + $0x80] sm:$0xff] %vm3612, %v3533
        %3622 = vst.msk [vmem:[#allocation5 + $0x90] sm:$0xff] %vm3612, %v3535
        %3623 = vst.msk [vmem:[#allocation5 + $0xa0] sm:$0xff] %vm3612, %v3537
        %3624 = vst.msk [vmem:[#allocation5 + $0xb0] sm:$0xff] %vm3612, %v3539
        %3625 = vst.msk [vmem:[#allocation5 + $0xc0] sm:$0xff] %vm3612, %v3541
        %3626 = vst.msk [vmem:[#allocation5 + $0xd0] sm:$0xff] %vm3612, %v3543
        %3627 = vst.msk [vmem:[#allocation5 + $0xe0] sm:$0xff] %vm3612, %v3545
        %3628 = vst.msk [vmem:[#allocation5 + $0xf0] sm:$0xff] %vm3612, %v3547
        %3629 = vst.msk [vmem:[#allocation5 + $0x100] sm:$0xff] %vm3612, %v3549
        %3630 = vst.msk [vmem:[#allocation5 + $0x110] sm:$0xff] %vm3612, %v3551
        %3631 = vst.msk [vmem:[#allocation5 + $0x120] sm:$0xff] %vm3612, %v3553
        %3632 = vst.msk [vmem:[#allocation5 + $0x130] sm:$0xff] %vm3612, %v3555
        %3633 = vst.msk [vmem:[#allocation5 + $0x140] sm:$0xff] %vm3612, %v3557
        %3634 = vst.msk [vmem:[#allocation5 + $0x150] sm:$0xff] %vm3612, %v3559
        %3635 = vst.msk [vmem:[#allocation5 + $0x160] sm:$0xff] %vm3612, %v3561
        %3636 = vst.msk [vmem:[#allocation5 + $0x170] sm:$0xff] %vm3612, %v3563
        %3637 = vst.msk [vmem:[#allocation5 + $0x180] sm:$0xff] %vm3612, %v3565
        %3638 = vst.msk [vmem:[#allocation5 + $0x190] sm:$0xff] %vm3612, %v3567
        %3639 = vst.msk [vmem:[#allocation5 + $0x1a0] sm:$0xff] %vm3612, %v3569
        %3640 = vst.msk [vmem:[#allocation5 + $0x1b0] sm:$0xff] %vm3612, %v3571
        %3641 = vst.msk [vmem:[#allocation5 + $0x1c0] sm:$0xff] %vm3612, %v3573
        %3642 = vst.msk [vmem:[#allocation5 + $0x1d0] sm:$0xff] %vm3612, %v3575
        %3643 = vst.msk [vmem:[#allocation5 + $0x1e0] sm:$0xff] %vm3612, %v3577
        %3644 = vst.msk [vmem:[#allocation5 + $0x1f0] sm:$0xff] %vm3612, %v3579
        %v3645 = vrot.slane %v2476, 2
        %v3646 = vrot.slane %v2477, 2
        %v3647 = vsel %vm2769, %v3645, %v3646
        %v3648 = vrot.slane %v2478, 2
        %v3649 = vsel %vm2769, %v3646, %v3648
        %3682 = vst.msk [vmem:[#allocation5 + $0x8] sm:$0xff] %vm334, %v2782
        %3683 = vst.msk [vmem:[#allocation5 + $0x18] sm:$0xff] %vm334, %v2784
        %3684 = vst.msk [vmem:[#allocation5 + $0x28] sm:$0xff] %vm334, %v2787
        %3685 = vst.msk [vmem:[#allocation5 + $0x38] sm:$0xff] %vm334, %v2789
        %3686 = vst.msk [vmem:[#allocation5 + $0x48] sm:$0xff] %vm334, %v2792
        %3687 = vst.msk [vmem:[#allocation5 + $0x58] sm:$0xff] %vm334, %v2794
        %3688 = vst.msk [vmem:[#allocation5 + $0x68] sm:$0xff] %vm334, %v2797
        %3689 = vst.msk [vmem:[#allocation5 + $0x78] sm:$0xff] %vm334, %v2799
        %3690 = vst.msk [vmem:[#allocation5 + $0x88] sm:$0xff] %vm334, %v2802
        %3691 = vst.msk [vmem:[#allocation5 + $0x98] sm:$0xff] %vm334, %v2804
        %3692 = vst.msk [vmem:[#allocation5 + $0xa8] sm:$0xff] %vm334, %v2807
        %3693 = vst.msk [vmem:[#allocation5 + $0xb8] sm:$0xff] %vm334, %v2809
        %3694 = vst.msk [vmem:[#allocation5 + $0xc8] sm:$0xff] %vm334, %v2812
        %3695 = vst.msk [vmem:[#allocation5 + $0xd8] sm:$0xff] %vm334, %v2814
        %3696 = vst.msk [vmem:[#allocation5 + $0xe8] sm:$0xff] %vm334, %v2817
        %3697 = vst.msk [vmem:[#allocation5 + $0xf8] sm:$0xff] %vm334, %v2819
        %3698 = vst.msk [vmem:[#allocation5 + $0x108] sm:$0xff] %vm334, %v2822
        %3699 = vst.msk [vmem:[#allocation5 + $0x118] sm:$0xff] %vm334, %v2824
        %3700 = vst.msk [vmem:[#allocation5 + $0x128] sm:$0xff] %vm334, %v2827
        %3701 = vst.msk [vmem:[#allocation5 + $0x138] sm:$0xff] %vm334, %v2829
        %3702 = vst.msk [vmem:[#allocation5 + $0x148] sm:$0xff] %vm334, %v2832
        %3703 = vst.msk [vmem:[#allocation5 + $0x158] sm:$0xff] %vm334, %v2834
        %3704 = vst.msk [vmem:[#allocation5 + $0x168] sm:$0xff] %vm334, %v2837
        %3705 = vst.msk [vmem:[#allocation5 + $0x178] sm:$0xff] %vm334, %v2839
        %3706 = vst.msk [vmem:[#allocation5 + $0x188] sm:$0xff] %vm334, %v2842
        %3707 = vst.msk [vmem:[#allocation5 + $0x198] sm:$0xff] %vm334, %v2844
        %3708 = vst.msk [vmem:[#allocation5 + $0x1a8] sm:$0xff] %vm334, %v2847
        %3709 = vst.msk [vmem:[#allocation5 + $0x1b8] sm:$0xff] %vm334, %v2849
        %3710 = vst.msk [vmem:[#allocation5 + $0x1c8] sm:$0xff] %vm334, %v3247
        %3711 = vst.msk [vmem:[#allocation5 + $0x1d8] sm:$0xff] %vm334, %v3249
        %3712 = vst.msk [vmem:[#allocation5 + $0x1e8] sm:$0xff] %vm334, %v3647
        %3713 = vst.msk [vmem:[#allocation5 + $0x1f8] sm:$0xff] %vm334, %v3649
        %v3714 = vld [vmem:[#allocation5] sm:$0xff]
        %v3715 = vld [vmem:[#allocation5 + $0x8] sm:$0xff]
        %v3716 = vld [vmem:[#allocation5 + $0x10] sm:$0xff]
        %v3717 = vld [vmem:[#allocation5 + $0x18] sm:$0xff]
        %v3718 = vld [vmem:[#allocation5 + $0x20] sm:$0xff]
        %v3719 = vld [vmem:[#allocation5 + $0x28] sm:$0xff]
        %v3720 = vld [vmem:[#allocation5 + $0x30] sm:$0xff]
        %v3721 = vld [vmem:[#allocation5 + $0x38] sm:$0xff]
        %v3722 = vld [vmem:[#allocation5 + $0x40] sm:$0xff]
        %v3723 = vld [vmem:[#allocation5 + $0x48] sm:$0xff]
        %v3724 = vld [vmem:[#allocation5 + $0x50] sm:$0xff]
        %v3725 = vld [vmem:[#allocation5 + $0x58] sm:$0xff]
        %v3726 = vld [vmem:[#allocation5 + $0x60] sm:$0xff]
        %v3727 = vld [vmem:[#allocation5 + $0x68] sm:$0xff]
        %v3728 = vld [vmem:[#allocation5 + $0x70] sm:$0xff]
        %v3729 = vld [vmem:[#allocation5 + $0x78] sm:$0xff]
        %v3730 = vld [vmem:[#allocation5 + $0x80] sm:$0xff]
        %v3731 = vld [vmem:[#allocation5 + $0x88] sm:$0xff]
        %v3732 = vld [vmem:[#allocation5 + $0x90] sm:$0xff]
        %v3733 = vld [vmem:[#allocation5 + $0x98] sm:$0xff]
        %v3734 = vld [vmem:[#allocation5 + $0xa0] sm:$0xff]
        %v3735 = vld [vmem:[#allocation5 + $0xa8] sm:$0xff]
        %v3736 = vld [vmem:[#allocation5 + $0xb0] sm:$0xff]
        %v3737 = vld [vmem:[#allocation5 + $0xb8] sm:$0xff]
        %v3738 = vld [vmem:[#allocation5 + $0xc0] sm:$0xff]
        %v3739 = vld [vmem:[#allocation5 + $0xc8] sm:$0xff]
        %v3740 = vld [vmem:[#allocation5 + $0xd0] sm:$0xff]
        %v3741 = vld [vmem:[#allocation5 + $0xd8] sm:$0xff]
        %v3742 = vld [vmem:[#allocation5 + $0xe0] sm:$0xff]
        %v3743 = vld [vmem:[#allocation5 + $0xe8] sm:$0xff]
        %v3744 = vld [vmem:[#allocation5 + $0xf0] sm:$0xff]
        %v3745 = vld [vmem:[#allocation5 + $0xf8] sm:$0xff]
        %v3746 = vld [vmem:[#allocation5 + $0x100] sm:$0xff]
        %v3747 = vld [vmem:[#allocation5 + $0x108] sm:$0xff]
        %v3748 = vld [vmem:[#allocation5 + $0x110] sm:$0xff]
        %v3749 = vld [vmem:[#allocation5 + $0x118] sm:$0xff]
        %v3750 = vld [vmem:[#allocation5 + $0x120] sm:$0xff]
        %v3751 = vld [vmem:[#allocation5 + $0x128] sm:$0xff]
        %v3752 = vld [vmem:[#allocation5 + $0x130] sm:$0xff]
        %v3753 = vld [vmem:[#allocation5 + $0x138] sm:$0xff]
        %v3754 = vld [vmem:[#allocation5 + $0x140] sm:$0xff]
        %v3755 = vld [vmem:[#allocation5 + $0x148] sm:$0xff]
        %v3756 = vld [vmem:[#allocation5 + $0x150] sm:$0xff]
        %v3757 = vld [vmem:[#allocation5 + $0x158] sm:$0xff]
        %v3758 = vld [vmem:[#allocation5 + $0x160] sm:$0xff]
        %v3759 = vld [vmem:[#allocation5 + $0x168] sm:$0xff]
        %v3760 = vld [vmem:[#allocation5 + $0x170] sm:$0xff]
        %v3761 = vld [vmem:[#allocation5 + $0x178] sm:$0xff]
        %v3762 = vld [vmem:[#allocation5 + $0x180] sm:$0xff]
        %v3763 = vld [vmem:[#allocation5 + $0x188] sm:$0xff]
        %v3764 = vld [vmem:[#allocation5 + $0x190] sm:$0xff]
        %v3765 = vld [vmem:[#allocation5 + $0x198] sm:$0xff]
        %v3766 = vld [vmem:[#allocation5 + $0x1a0] sm:$0xff]
        %v3767 = vld [vmem:[#allocation5 + $0x1a8] sm:$0xff]
        %v3768 = vld [vmem:[#allocation5 + $0x1b0] sm:$0xff]
        %v3769 = vld [vmem:[#allocation5 + $0x1b8] sm:$0xff]
        %v3770 = vld [vmem:[#allocation5 + $0x1c0] sm:$0xff]
        %v3771 = vld [vmem:[#allocation5 + $0x1c8] sm:$0xff]
        %v3772 = vld [vmem:[#allocation5 + $0x1d0] sm:$0xff]
        %v3773 = vld [vmem:[#allocation5 + $0x1d8] sm:$0xff]
        %v3774 = vld [vmem:[#allocation5 + $0x1e0] sm:$0xff]
        %v3775 = vld [vmem:[#allocation5 + $0x1e8] sm:$0xff]
        %v3776 = vld [vmem:[#allocation5 + $0x1f0] sm:$0xff]
        %v3777 = vld [vmem:[#allocation5 + $0x1f8] sm:$0xff]
        %v3778 = vpack.c.bf16 %v3716, %v3714
        %v3779 = vpack.c.bf16 %v3717, %v3715
        %v3780 = vpack.c.bf16 %v3720, %v3718
        %v3781 = vpack.c.bf16 %v3721, %v3719
        %v3782 = vpack.c.bf16 %v3724, %v3722
        %v3783 = vpack.c.bf16 %v3725, %v3723
        %v3784 = vpack.c.bf16 %v3728, %v3726
        %v3785 = vpack.c.bf16 %v3729, %v3727
        %v3786 = vpack.c.bf16 %v3732, %v3730
        %v3787 = vpack.c.bf16 %v3733, %v3731
        %v3788 = vpack.c.bf16 %v3736, %v3734
        %v3789 = vpack.c.bf16 %v3737, %v3735
        %v3790 = vpack.c.bf16 %v3740, %v3738
        %v3791 = vpack.c.bf16 %v3741, %v3739
        %v3792 = vpack.c.bf16 %v3744, %v3742
        %v3793 = vpack.c.bf16 %v3745, %v3743
        %v3794 = vpack.c.bf16 %v3748, %v3746
        %v3795 = vpack.c.bf16 %v3749, %v3747
        %v3796 = vpack.c.bf16 %v3752, %v3750
        %v3797 = vpack.c.bf16 %v3753, %v3751
        %v3798 = vpack.c.bf16 %v3756, %v3754
        %v3799 = vpack.c.bf16 %v3757, %v3755
        %v3800 = vpack.c.bf16 %v3760, %v3758
        %v3801 = vpack.c.bf16 %v3761, %v3759
        %v3802 = vpack.c.bf16 %v3764, %v3762
        %v3803 = vpack.c.bf16 %v3765, %v3763
        %v3804 = vpack.c.bf16 %v3768, %v3766
        %v3805 = vpack.c.bf16 %v3769, %v3767
        %v3806 = vpack.c.bf16 %v3772, %v3770
        %v3807 = vpack.c.bf16 %v3773, %v3771
        %v3808 = vpack.c.bf16 %v3776, %v3774
        %v3809 = vpack.c.bf16 %v3777, %v3775
        %v3810 = vld [vmem:[%s3] sm:$0xf]
        %v3811 = vld [vmem:[%s3 + $0x4] sm:$0xf]
        %v3812 = vld [vmem:[%s3 + $0x8] sm:$0xf]
        %v3813 = vld [vmem:[%s3 + $0xc] sm:$0xf]
        %v3814 = vld [vmem:[%s3 + $0x10] sm:$0xf]
        %v3815 = vld [vmem:[%s3 + $0x14] sm:$0xf]
        %v3816 = vld [vmem:[%s3 + $0x18] sm:$0xf]
        %v3817 = vld [vmem:[%s3 + $0x1c] sm:$0xf]
        %v3818 = vld [vmem:[%s3 + $0x20] sm:$0xf]
        %v3819 = vld [vmem:[%s3 + $0x24] sm:$0xf]
        %v3820 = vld [vmem:[%s3 + $0x28] sm:$0xf]
        %v3821 = vld [vmem:[%s3 + $0x2c] sm:$0xf]
        %v3822 = vld [vmem:[%s3 + $0x30] sm:$0xf]
        %v3823 = vld [vmem:[%s3 + $0x34] sm:$0xf]
        %v3824 = vld [vmem:[%s3 + $0x38] sm:$0xf]
        %v3825 = vld [vmem:[%s3 + $0x3c] sm:$0xf]
        %v3826 = vld [vmem:[%s3 + $0x40] sm:$0xf]
        %v3827 = vld [vmem:[%s3 + $0x44] sm:$0xf]
        %v3828 = vld [vmem:[%s4] sm:$0x1]
        %v3830 = vlaneseq
        %v3831 = vshrl.u32 %v3830, 7
        %v3832 = vsub.s32 0, %v3831
        %v3833 = vrot.slane %v3828, %v3832
        %v3853 = vunpack.c.l.b16 %v3810
        %v3854 = vunpack.c.l.b16 %v3811
        %v3855 = vunpack.c.l.b16 %v3812
        %v3856 = vunpack.c.l.b16 %v3813
        %v3857 = vunpack.c.l.b16 %v3814
        %v3858 = vunpack.c.l.b16 %v3815
        %v3859 = vunpack.c.l.b16 %v3816
        %v3860 = vunpack.c.l.b16 %v3817
        %v3861 = vunpack.c.l.b16 %v3818
        %v3862 = vunpack.c.l.b16 %v3819
        %v3863 = vunpack.c.l.b16 %v3820
        %v3864 = vunpack.c.l.b16 %v3821
        %v3865 = vunpack.c.l.b16 %v3822
        %v3866 = vunpack.c.l.b16 %v3823
        %v3867 = vunpack.c.l.b16 %v3824
        %v3868 = vunpack.c.l.b16 %v3825
        %v3869 = vunpack.c.l.b16 %v3826
        %v3870 = vunpack.c.l.b16 %v3827
        %v3871 = vpack.c.b16 %v3854, %v3853
        %v3872 = vpack.c.b16 %v3856, %v3855
        %v3873 = vpack.c.b16 %v3858, %v3857
        %v3874 = vpack.c.b16 %v3860, %v3859
        %v3875 = vpack.c.b16 %v3862, %v3861
        %v3876 = vpack.c.b16 %v3864, %v3863
        %v3877 = vpack.c.b16 %v3866, %v3865
        %v3878 = vpack.c.b16 %v3868, %v3867
        %v3879 = vpack.c.b16 %v3870, %v3869
        %v3890 = vsel %vm334, %v3779, 0
        %v3893 = vsel %vm334, %v3781, 0
        %v3896 = vsel %vm334, %v3783, 0
        %v3899 = vsel %vm334, %v3785, 0
        %v3902 = vsel %vm334, %v3787, 0
        %v3905 = vsel %vm334, %v3789, 0
        %v3908 = vsel %vm334, %v3791, 0
        %v3911 = vsel %vm334, %v3793, 0
        %v3914 = vsel %vm334, %v3795, 0
        %v3917 = vsel %vm334, %v3797, 0
        %v3920 = vsel %vm334, %v3799, 0
        %v3923 = vsel %vm334, %v3801, 0
        %v3926 = vsel %vm334, %v3803, 0
        %v3929 = vsel %vm334, %v3805, 0
        %v3932 = vsel %vm334, %v3807, 0
        %v3935 = vsel %vm334, %v3809, 0
        %3937 = vmatprep.subr.bf16.mxu0 0
        %3938 = vmatpush1.bf16.msra.mxu0 %v3878
        %3939 = vmatprep.subr.bf16.mxu0 0
        %3940 = vmatpush1.bf16.msra.mxu0 %v3877
        %3941 = vmatprep.subr.bf16.mxu0 0
        %3942 = vmatpush1.bf16.msra.mxu0 %v3876
        %3943 = vmatprep.subr.bf16.mxu0 0
        %3944 = vmatpush1.bf16.msra.mxu0 %v3875
        %3945 = vmatprep.subr.bf16.mxu0 0
        %3946 = vmatpush1.bf16.msra.mxu0 %v3874
        %3947 = vmatprep.subr.bf16.mxu0 0
        %3948 = vmatpush1.bf16.msra.mxu0 %v3873
        %3949 = vmatprep.subr.bf16.mxu0 0
        %3950 = vmatpush1.bf16.msra.mxu0 %v3872
        %3951 = vmatprep.subr.bf16.mxu0 0
        %3952 = vmatpush1.bf16.msra.mxu0 %v3871
        %3953 = vmatprep.subr.bf16.mxu0 0
        %3954 = vmatpush2.bf16.msra.mxu0 0
        %3955 = vmatprep.subr.bf16.mxu0 0
        %3956 = vmatpush2.bf16.msra.mxu0 0
        %3957 = vmatprep.subr.bf16.mxu0 0
        %3958 = vmatpush2.bf16.msra.mxu0 0
        %3959 = vmatprep.subr.bf16.mxu0 0
        %3960 = vmatpush2.bf16.msra.mxu0 0
        %3961 = vmatprep.subr.bf16.mxu0 0
        %3962 = vmatpush2.bf16.msra.mxu0 0
        %3963 = vmatprep.subr.bf16.mxu0 0
        %3964 = vmatpush2.bf16.msra.mxu0 0
        %3965 = vmatprep.subr.bf16.mxu0 0
        %3966 = vmatpush2.bf16.msra.mxu0 0
        %3967 = vmatprep.subr.bf16.mxu0 0
        %3968 = vmatpush2.bf16.msra.mxu0 %v3879
        %3969 = vmatprep.mubr.bf16.mxu0 %v3890
        %3970 = vmatmul.mubr.bf16.gmra.mxu0 %v3778
        %v3971 = vpop.f32.mrf.mxu0
        %v3972 = vadd.f32 %v3833, %v3971
        %v3973 = vpop.f32.mrf.mxu0
        %v3974 = vpop.f32.mrf.mxu0
        %v3975 = vadd.f32 %v3833, %v3974
        %v3976 = vpop.f32.mrf.mxu0
        %3977 = vmatprep.mubr.bf16.mxu0 %v3893
        %3978 = vmatmul.mubr.bf16.gmra.mxu0 %v3780
        %v3979 = vpop.f32.mrf.mxu0
        %v3980 = vadd.f32 %v3833, %v3979
        %v3981 = vpop.f32.mrf.mxu0
        %v3982 = vpop.f32.mrf.mxu0
        %v3983 = vadd.f32 %v3833, %v3982
        %v3984 = vpop.f32.mrf.mxu0
        %3985 = vmatprep.mubr.bf16.mxu0 %v3896
        %3986 = vmatmul.mubr.bf16.gmra.mxu0 %v3782
        %v3987 = vpop.f32.mrf.mxu0
        %v3988 = vadd.f32 %v3833, %v3987
        %v3989 = vpop.f32.mrf.mxu0
        %v3990 = vpop.f32.mrf.mxu0
        %v3991 = vadd.f32 %v3833, %v3990
        %v3992 = vpop.f32.mrf.mxu0
        %3993 = vmatprep.mubr.bf16.mxu0 %v3899
        %3994 = vmatmul.mubr.bf16.gmra.mxu0 %v3784
        %v3995 = vpop.f32.mrf.mxu0
        %v3996 = vadd.f32 %v3833, %v3995
        %v3997 = vpop.f32.mrf.mxu0
        %v3998 = vpop.f32.mrf.mxu0
        %v3999 = vadd.f32 %v3833, %v3998
        %v4000 = vpop.f32.mrf.mxu0
        %4001 = vmatprep.mubr.bf16.mxu0 %v3902
        %4002 = vmatmul.mubr.bf16.gmra.mxu0 %v3786
        %v4003 = vpop.f32.mrf.mxu0
        %v4004 = vadd.f32 %v3833, %v4003
        %v4005 = vpop.f32.mrf.mxu0
        %v4006 = vpop.f32.mrf.mxu0
        %v4007 = vadd.f32 %v3833, %v4006
        %v4008 = vpop.f32.mrf.mxu0
        %4009 = vmatprep.mubr.bf16.mxu0 %v3905
        %4010 = vmatmul.mubr.bf16.gmra.mxu0 %v3788
        %v4011 = vpop.f32.mrf.mxu0
        %v4012 = vadd.f32 %v3833, %v4011
        %v4013 = vpop.f32.mrf.mxu0
        %v4014 = vpop.f32.mrf.mxu0
        %v4015 = vadd.f32 %v3833, %v4014
        %v4016 = vpop.f32.mrf.mxu0
        %4017 = vmatprep.mubr.bf16.mxu0 %v3908
        %4018 = vmatmul.mubr.bf16.gmra.mxu0 %v3790
        %v4019 = vpop.f32.mrf.mxu0
        %v4020 = vadd.f32 %v3833, %v4019
        %v4021 = vpop.f32.mrf.mxu0
        %v4022 = vpop.f32.mrf.mxu0
        %v4023 = vadd.f32 %v3833, %v4022
        %v4024 = vpop.f32.mrf.mxu0
        %4025 = vmatprep.mubr.bf16.mxu0 %v3911
        %4026 = vmatmul.mubr.bf16.gmra.mxu0 %v3792
        %v4027 = vpop.f32.mrf.mxu0
        %v4028 = vadd.f32 %v3833, %v4027
        %v4029 = vpop.f32.mrf.mxu0
        %v4030 = vpop.f32.mrf.mxu0
        %v4031 = vadd.f32 %v3833, %v4030
        %v4032 = vpop.f32.mrf.mxu0
        %4033 = vmatprep.mubr.bf16.mxu0 %v3914
        %4034 = vmatmul.mubr.bf16.gmra.mxu0 %v3794
        %v4035 = vpop.f32.mrf.mxu0
        %v4036 = vadd.f32 %v3833, %v4035
        %v4037 = vpop.f32.mrf.mxu0
        %v4038 = vpop.f32.mrf.mxu0
        %v4039 = vadd.f32 %v3833, %v4038
        %v4040 = vpop.f32.mrf.mxu0
        %4041 = vmatprep.mubr.bf16.mxu0 %v3917
        %4042 = vmatmul.mubr.bf16.gmra.mxu0 %v3796
        %v4043 = vpop.f32.mrf.mxu0
        %v4044 = vadd.f32 %v3833, %v4043
        %v4045 = vpop.f32.mrf.mxu0
        %v4046 = vpop.f32.mrf.mxu0
        %v4047 = vadd.f32 %v3833, %v4046
        %v4048 = vpop.f32.mrf.mxu0
        %4049 = vmatprep.mubr.bf16.mxu0 %v3920
        %4050 = vmatmul.mubr.bf16.gmra.mxu0 %v3798
        %v4051 = vpop.f32.mrf.mxu0
        %v4052 = vadd.f32 %v3833, %v4051
        %v4053 = vpop.f32.mrf.mxu0
        %v4054 = vpop.f32.mrf.mxu0
        %v4055 = vadd.f32 %v3833, %v4054
        %v4056 = vpop.f32.mrf.mxu0
        %4057 = vmatprep.mubr.bf16.mxu0 %v3923
        %4058 = vmatmul.mubr.bf16.gmra.mxu0 %v3800
        %v4059 = vpop.f32.mrf.mxu0
        %v4060 = vadd.f32 %v3833, %v4059
        %v4061 = vpop.f32.mrf.mxu0
        %v4062 = vpop.f32.mrf.mxu0
        %v4063 = vadd.f32 %v3833, %v4062
        %v4064 = vpop.f32.mrf.mxu0
        %4065 = vmatprep.mubr.bf16.mxu0 %v3926
        %4066 = vmatmul.mubr.bf16.gmra.mxu0 %v3802
        %v4067 = vpop.f32.mrf.mxu0
        %v4068 = vadd.f32 %v3833, %v4067
        %v4069 = vpop.f32.mrf.mxu0
        %v4070 = vpop.f32.mrf.mxu0
        %v4071 = vadd.f32 %v3833, %v4070
        %v4072 = vpop.f32.mrf.mxu0
        %4073 = vmatprep.mubr.bf16.mxu0 %v3929
        %4074 = vmatmul.mubr.bf16.gmra.mxu0 %v3804
        %v4075 = vpop.f32.mrf.mxu0
        %v4076 = vadd.f32 %v3833, %v4075
        %v4077 = vpop.f32.mrf.mxu0
        %v4078 = vpop.f32.mrf.mxu0
        %v4079 = vadd.f32 %v3833, %v4078
        %v4080 = vpop.f32.mrf.mxu0
        %4081 = vmatprep.mubr.bf16.mxu0 %v3932
        %4082 = vmatmul.mubr.bf16.gmra.mxu0 %v3806
        %v4083 = vpop.f32.mrf.mxu0
        %v4084 = vadd.f32 %v3833, %v4083
        %v4085 = vpop.f32.mrf.mxu0
        %v4086 = vpop.f32.mrf.mxu0
        %v4087 = vadd.f32 %v3833, %v4086
        %v4088 = vpop.f32.mrf.mxu0
        %4089 = vmatprep.mubr.bf16.mxu0 %v3935
        %4090 = vmatmul.mubr.bf16.gmra.mxu0 %v3808
        %v4091 = vpop.f32.mrf.mxu0
        %v4092 = vadd.f32 %v3833, %v4091
        %v4093 = vpop.f32.mrf.mxu0
        %v4094 = vpop.f32.mrf.mxu0
        %v4095 = vadd.f32 %v3833, %v4094
        %v4096 = vpop.f32.mrf.mxu0
        %4097 = vdwg.mxu0
        %v4098 = vpack.c.bf16 %v423, %v422
        %v4099 = vpack.c.bf16 %v425, %v424
        %v4100 = vpack.c.bf16 %v427, %v426
        %v4101 = vpack.c.bf16 %v429, %v428
        %v4102 = vpack.c.bf16 %v431, %v430
        %v4103 = vpack.c.bf16 %v433, %v432
        %v4104 = vpack.c.bf16 %v435, %v434
        %v4105 = vpack.c.bf16 %v437, %v436
        %v4106 = vpack.c.bf16 %v439, %v438
        %v4107 = vpack.c.bf16 %v441, %v440
        %v4108 = vpack.c.bf16 %v443, %v442
        %v4109 = vpack.c.bf16 %v445, %v444
        %v4110 = vpack.c.bf16 %v447, %v446
        %v4111 = vpack.c.bf16 %v449, %v448
        %v4112 = vpack.c.bf16 %v451, %v450
        %v4113 = vpack.c.bf16 %v453, %v452
        %v4114 = vld [vmem:[%s5] sm:$0xf]
        %v4115 = vld [vmem:[%s6] sm:$0x1]
        %v4117 = vlaneseq
        %v4118 = vshrl.u32 %v4117, 7
        %v4119 = vsub.s32 0, %v4118
        %v4120 = vrot.slane %v4115, %v4119
        %v4123 = vsel %vm278, %v4098, 0
        %v4126 = vsel %vm278, %v4099, 0
        %v4129 = vsel %vm278, %v4100, 0
        %v4132 = vsel %vm278, %v4101, 0
        %v4135 = vsel %vm278, %v4102, 0
        %v4138 = vsel %vm278, %v4103, 0
        %v4141 = vsel %vm278, %v4104, 0
        %v4144 = vsel %vm278, %v4105, 0
        %v4147 = vsel %vm278, %v4106, 0
        %v4150 = vsel %vm278, %v4107, 0
        %v4153 = vsel %vm278, %v4108, 0
        %v4156 = vsel %vm278, %v4109, 0
        %v4159 = vsel %vm278, %v4110, 0
        %v4162 = vsel %vm278, %v4111, 0
        %v4165 = vsel %vm278, %v4112, 0
        %v4168 = vsel %vm278, %v4113, 0
        %v4171 = vsel %vm2195, %v4114, 0
        %4173 = vmatprep.subr.bf16.mxu0 0
        %4174 = vmatpush1.bf16.msra.mxu0 0
        %4175 = vmatprep.subr.bf16.mxu0 0
        %4176 = vmatpush1.bf16.msra.mxu0 0
        %4177 = vmatprep.subr.bf16.mxu0 0
        %4178 = vmatpush1.bf16.msra.mxu0 0
        %4179 = vmatprep.subr.bf16.mxu0 0
        %4180 = vmatpush1.bf16.msra.mxu0 0
        %4181 = vmatprep.subr.bf16.mxu0 0
        %4182 = vmatpush1.bf16.msra.mxu0 0
        %4183 = vmatprep.subr.bf16.mxu0 0
        %4184 = vmatpush1.bf16.msra.mxu0 0
        %4185 = vmatprep.subr.bf16.mxu0 0
        %4186 = vmatpush1.bf16.msra.mxu0 0
        %4187 = vmatprep.subr.bf16.mxu0 0
        %4188 = vmatpush1.bf16.msra.mxu0 %v4171
        %4189 = vmatprep.subr.bf16.mxu0 0
        %4190 = vmatpush2.bf16.msra.mxu0 0
        %4191 = vmatprep.subr.bf16.mxu0 0
        %4192 = vmatpush2.bf16.msra.mxu0 0
        %4193 = vmatprep.subr.bf16.mxu0 0
        %4194 = vmatpush2.bf16.msra.mxu0 0
        %4195 = vmatprep.subr.bf16.mxu0 0
        %4196 = vmatpush2.bf16.msra.mxu0 0
        %4197 = vmatprep.subr.bf16.mxu0 0
        %4198 = vmatpush2.bf16.msra.mxu0 0
        %4199 = vmatprep.subr.bf16.mxu0 0
        %4200 = vmatpush2.bf16.msra.mxu0 0
        %4201 = vmatprep.subr.bf16.mxu0 0
        %4202 = vmatpush2.bf16.msra.mxu0 0
        %4203 = vmatprep.subr.bf16.mxu0 0
        %4204 = vmatpush2.bf16.msra.mxu0 0
        %4205 = vmatprep.mubr.bf16.mxu0 0
        %4206 = vmatmul.mubr.bf16.gmra.mxu0 %v4123
        %v4207 = vpop.f32.mrf.mxu0
        %v4208 = vadd.f32 %v4120, %v4207
        %v4209 = vpop.f32.mrf.mxu0
        %v4210 = vpop.f32.mrf.mxu0
        %v4211 = vadd.f32 %v4120, %v4210
        %v4212 = vpop.f32.mrf.mxu0
        %4213 = vmatprep.mubr.bf16.mxu0 0
        %4214 = vmatmul.mubr.bf16.gmra.mxu0 %v4126
        %v4215 = vpop.f32.mrf.mxu0
        %v4216 = vadd.f32 %v4120, %v4215
        %v4217 = vpop.f32.mrf.mxu0
        %v4218 = vpop.f32.mrf.mxu0
        %v4219 = vadd.f32 %v4120, %v4218
        %v4220 = vpop.f32.mrf.mxu0
        %4221 = vmatprep.mubr.bf16.mxu0 0
        %4222 = vmatmul.mubr.bf16.gmra.mxu0 %v4129
        %v4223 = vpop.f32.mrf.mxu0
        %v4224 = vadd.f32 %v4120, %v4223
        %v4225 = vpop.f32.mrf.mxu0
        %v4226 = vpop.f32.mrf.mxu0
        %v4227 = vadd.f32 %v4120, %v4226
        %v4228 = vpop.f32.mrf.mxu0
        %4229 = vmatprep.mubr.bf16.mxu0 0
        %4230 = vmatmul.mubr.bf16.gmra.mxu0 %v4132
        %v4231 = vpop.f32.mrf.mxu0
        %v4232 = vadd.f32 %v4120, %v4231
        %v4233 = vpop.f32.mrf.mxu0
        %v4234 = vpop.f32.mrf.mxu0
        %v4235 = vadd.f32 %v4120, %v4234
        %v4236 = vpop.f32.mrf.mxu0
        %4237 = vmatprep.mubr.bf16.mxu0 0
        %4238 = vmatmul.mubr.bf16.gmra.mxu0 %v4135
        %v4239 = vpop.f32.mrf.mxu0
        %v4240 = vadd.f32 %v4120, %v4239
        %v4241 = vpop.f32.mrf.mxu0
        %v4242 = vpop.f32.mrf.mxu0
        %v4243 = vadd.f32 %v4120, %v4242
        %v4244 = vpop.f32.mrf.mxu0
        %4245 = vmatprep.mubr.bf16.mxu0 0
        %4246 = vmatmul.mubr.bf16.gmra.mxu0 %v4138
        %v4247 = vpop.f32.mrf.mxu0
        %v4248 = vadd.f32 %v4120, %v4247
        %v4249 = vpop.f32.mrf.mxu0
        %v4250 = vpop.f32.mrf.mxu0
        %v4251 = vadd.f32 %v4120, %v4250
        %v4252 = vpop.f32.mrf.mxu0
        %4253 = vmatprep.mubr.bf16.mxu0 0
        %4254 = vmatmul.mubr.bf16.gmra.mxu0 %v4141
        %v4255 = vpop.f32.mrf.mxu0
        %v4256 = vadd.f32 %v4120, %v4255
        %v4257 = vpop.f32.mrf.mxu0
        %v4258 = vpop.f32.mrf.mxu0
        %v4259 = vadd.f32 %v4120, %v4258
        %v4260 = vpop.f32.mrf.mxu0
        %4261 = vmatprep.mubr.bf16.mxu0 0
        %4262 = vmatmul.mubr.bf16.gmra.mxu0 %v4144
        %v4263 = vpop.f32.mrf.mxu0
        %v4264 = vadd.f32 %v4120, %v4263
        %v4265 = vpop.f32.mrf.mxu0
        %v4266 = vpop.f32.mrf.mxu0
        %v4267 = vadd.f32 %v4120, %v4266
        %v4268 = vpop.f32.mrf.mxu0
        %4269 = vmatprep.mubr.bf16.mxu0 0
        %4270 = vmatmul.mubr.bf16.gmra.mxu0 %v4147
        %v4271 = vpop.f32.mrf.mxu0
        %v4272 = vadd.f32 %v4120, %v4271
        %v4273 = vpop.f32.mrf.mxu0
        %v4274 = vpop.f32.mrf.mxu0
        %v4275 = vadd.f32 %v4120, %v4274
        %v4276 = vpop.f32.mrf.mxu0
        %4277 = vmatprep.mubr.bf16.mxu0 0
        %4278 = vmatmul.mubr.bf16.gmra.mxu0 %v4150
        %v4279 = vpop.f32.mrf.mxu0
        %v4280 = vadd.f32 %v4120, %v4279
        %v4281 = vpop.f32.mrf.mxu0
        %v4282 = vpop.f32.mrf.mxu0
        %v4283 = vadd.f32 %v4120, %v4282
        %v4284 = vpop.f32.mrf.mxu0
        %4285 = vmatprep.mubr.bf16.mxu0 0
        %4286 = vmatmul.mubr.bf16.gmra.mxu0 %v4153
        %v4287 = vpop.f32.mrf.mxu0
        %v4288 = vadd.f32 %v4120, %v4287
        %v4289 = vpop.f32.mrf.mxu0
        %v4290 = vpop.f32.mrf.mxu0
        %v4291 = vadd.f32 %v4120, %v4290
        %v4292 = vpop.f32.mrf.mxu0
        %4293 = vmatprep.mubr.bf16.mxu0 0
        %4294 = vmatmul.mubr.bf16.gmra.mxu0 %v4156
        %v4295 = vpop.f32.mrf.mxu0
        %v4296 = vadd.f32 %v4120, %v4295
        %v4297 = vpop.f32.mrf.mxu0
        %v4298 = vpop.f32.mrf.mxu0
        %v4299 = vadd.f32 %v4120, %v4298
        %v4300 = vpop.f32.mrf.mxu0
        %4301 = vmatprep.mubr.bf16.mxu0 0
        %4302 = vmatmul.mubr.bf16.gmra.mxu0 %v4159
        %v4303 = vpop.f32.mrf.mxu0
        %v4304 = vadd.f32 %v4120, %v4303
        %v4305 = vpop.f32.mrf.mxu0
        %v4306 = vpop.f32.mrf.mxu0
        %v4307 = vadd.f32 %v4120, %v4306
        %v4308 = vpop.f32.mrf.mxu0
        %4309 = vmatprep.mubr.bf16.mxu0 0
        %4310 = vmatmul.mubr.bf16.gmra.mxu0 %v4162
        %v4311 = vpop.f32.mrf.mxu0
        %v4312 = vadd.f32 %v4120, %v4311
        %v4313 = vpop.f32.mrf.mxu0
        %v4314 = vpop.f32.mrf.mxu0
        %v4315 = vadd.f32 %v4120, %v4314
        %v4316 = vpop.f32.mrf.mxu0
        %4317 = vmatprep.mubr.bf16.mxu0 0
        %4318 = vmatmul.mubr.bf16.gmra.mxu0 %v4165
        %v4319 = vpop.f32.mrf.mxu0
        %v4320 = vadd.f32 %v4120, %v4319
        %v4321 = vpop.f32.mrf.mxu0
        %v4322 = vpop.f32.mrf.mxu0
        %v4323 = vadd.f32 %v4120, %v4322
        %v4324 = vpop.f32.mrf.mxu0
        %4325 = vmatprep.mubr.bf16.mxu0 0
        %4326 = vmatmul.mubr.bf16.gmra.mxu0 %v4168
        %v4327 = vpop.f32.mrf.mxu0
        %v4328 = vadd.f32 %v4120, %v4327
        %v4329 = vpop.f32.mrf.mxu0
        %v4330 = vpop.f32.mrf.mxu0
        %v4331 = vadd.f32 %v4120, %v4330
        %v4332 = vpop.f32.mrf.mxu0
        %4333 = vdwg.mxu0
        %v4334 = vadd.f32 %v3972, %v4208
        %v4335 = vadd.f32 %v3975, %v4211
        %v4336 = vadd.f32 %v3980, %v4216
        %v4337 = vadd.f32 %v3983, %v4219
        %v4338 = vadd.f32 %v3988, %v4224
        %v4339 = vadd.f32 %v3991, %v4227
        %v4340 = vadd.f32 %v3996, %v4232
        %v4341 = vadd.f32 %v3999, %v4235
        %v4342 = vadd.f32 %v4004, %v4240
        %v4343 = vadd.f32 %v4007, %v4243
        %v4344 = vadd.f32 %v4012, %v4248
        %v4345 = vadd.f32 %v4015, %v4251
        %v4346 = vadd.f32 %v4020, %v4256
        %v4347 = vadd.f32 %v4023, %v4259
        %v4348 = vadd.f32 %v4028, %v4264
        %v4349 = vadd.f32 %v4031, %v4267
        %v4350 = vadd.f32 %v4036, %v4272
        %v4351 = vadd.f32 %v4039, %v4275
        %v4352 = vadd.f32 %v4044, %v4280
        %v4353 = vadd.f32 %v4047, %v4283
        %v4354 = vadd.f32 %v4052, %v4288
        %v4355 = vadd.f32 %v4055, %v4291
        %v4356 = vadd.f32 %v4060, %v4296
        %v4357 = vadd.f32 %v4063, %v4299
        %v4358 = vadd.f32 %v4068, %v4304
        %v4359 = vadd.f32 %v4071, %v4307
        %v4360 = vadd.f32 %v4076, %v4312
        %v4361 = vadd.f32 %v4079, %v4315
        %v4362 = vadd.f32 %v4084, %v4320
        %v4363 = vadd.f32 %v4087, %v4323
        %v4364 = vadd.f32 %v4092, %v4328
        %v4365 = vadd.f32 %v4095, %v4331
        %v4366 = vmax.f32 %v4334, 0.0
        %v4367 = vmax.f32 %v4335, 0.0
        %v4368 = vmax.f32 %v4336, 0.0
        %v4369 = vmax.f32 %v4337, 0.0
        %v4370 = vmax.f32 %v4338, 0.0
        %v4371 = vmax.f32 %v4339, 0.0
        %v4372 = vmax.f32 %v4340, 0.0
        %v4373 = vmax.f32 %v4341, 0.0
        %v4374 = vmax.f32 %v4342, 0.0
        %v4375 = vmax.f32 %v4343, 0.0
        %v4376 = vmax.f32 %v4344, 0.0
        %v4377 = vmax.f32 %v4345, 0.0
        %v4378 = vmax.f32 %v4346, 0.0
        %v4379 = vmax.f32 %v4347, 0.0
        %v4380 = vmax.f32 %v4348, 0.0
        %v4381 = vmax.f32 %v4349, 0.0
        %v4382 = vmax.f32 %v4350, 0.0
        %v4383 = vmax.f32 %v4351, 0.0
        %v4384 = vmax.f32 %v4352, 0.0
        %v4385 = vmax.f32 %v4353, 0.0
        %v4386 = vmax.f32 %v4354, 0.0
        %v4387 = vmax.f32 %v4355, 0.0
        %v4388 = vmax.f32 %v4356, 0.0
        %v4389 = vmax.f32 %v4357, 0.0
        %v4390 = vmax.f32 %v4358, 0.0
        %v4391 = vmax.f32 %v4359, 0.0
        %v4392 = vmax.f32 %v4360, 0.0
        %v4393 = vmax.f32 %v4361, 0.0
        %v4394 = vmax.f32 %v4362, 0.0
        %v4395 = vmax.f32 %v4363, 0.0
        %v4396 = vmax.f32 %v4364, 0.0
        %v4397 = vmax.f32 %v4365, 0.0
        %4398 = vst.msk [vmem:[%s271] sm:$0xff] %vm334, %v4366
        %4399 = vst.msk [vmem:[%s271 + $0x8] sm:$0xff] %vm334, %v4367
        %4400 = vst.msk [vmem:[%s271 + $0x10] sm:$0xff] %vm334, %v4368
        %4401 = vst.msk [vmem:[%s271 + $0x18] sm:$0xff] %vm334, %v4369
        %4402 = vst.msk [vmem:[%s271 + $0x20] sm:$0xff] %vm334, %v4370
        %4403 = vst.msk [vmem:[%s271 + $0x28] sm:$0xff] %vm334, %v4371
        %4404 = vst.msk [vmem:[%s271 + $0x30] sm:$0xff] %vm334, %v4372
        %4405 = vst.msk [vmem:[%s271 + $0x38] sm:$0xff] %vm334, %v4373
        %4406 = vst.msk [vmem:[%s271 + $0x40] sm:$0xff] %vm334, %v4374
        %4407 = vst.msk [vmem:[%s271 + $0x48] sm:$0xff] %vm334, %v4375
        %4408 = vst.msk [vmem:[%s271 + $0x50] sm:$0xff] %vm334, %v4376
        %4409 = vst.msk [vmem:[%s271 + $0x58] sm:$0xff] %vm334, %v4377
        %4410 = vst.msk [vmem:[%s271 + $0x60] sm:$0xff] %vm334, %v4378
        %4411 = vst.msk [vmem:[%s271 + $0x68] sm:$0xff] %vm334, %v4379
        %4412 = vst.msk [vmem:[%s271 + $0x70] sm:$0xff] %vm334, %v4380
        %4413 = vst.msk [vmem:[%s271 + $0x78] sm:$0xff] %vm334, %v4381
        %4414 = vst.msk [vmem:[%s271 + $0x80] sm:$0xff] %vm334, %v4382
        %4415 = vst.msk [vmem:[%s271 + $0x88] sm:$0xff] %vm334, %v4383
        %4416 = vst.msk [vmem:[%s271 + $0x90] sm:$0xff] %vm334, %v4384
        %4417 = vst.msk [vmem:[%s271 + $0x98] sm:$0xff] %vm334, %v4385
        %4418 = vst.msk [vmem:[%s271 + $0xa0] sm:$0xff] %vm334, %v4386
        %4419 = vst.msk [vmem:[%s271 + $0xa8] sm:$0xff] %vm334, %v4387
        %4420 = vst.msk [vmem:[%s271 + $0xb0] sm:$0xff] %vm334, %v4388
        %4421 = vst.msk [vmem:[%s271 + $0xb8] sm:$0xff] %vm334, %v4389
        %4422 = vst.msk [vmem:[%s271 + $0xc0] sm:$0xff] %vm334, %v4390
        %4423 = vst.msk [vmem:[%s271 + $0xc8] sm:$0xff] %vm334, %v4391
        %4424 = vst.msk [vmem:[%s271 + $0xd0] sm:$0xff] %vm334, %v4392
        %4425 = vst.msk [vmem:[%s271 + $0xd8] sm:$0xff] %vm334, %v4393
        %4426 = vst.msk [vmem:[%s271 + $0xe0] sm:$0xff] %vm334, %v4394
        %4427 = vst.msk [vmem:[%s271 + $0xe8] sm:$0xff] %vm334, %v4395
        %4428 = vst.msk [vmem:[%s271 + $0xf0] sm:$0xff] %vm334, %v4396
        %4429 = vst.msk [vmem:[%s271 + $0xf8] sm:$0xff] %vm334, %v4397
        %s4430 = sand.u32 %s181, 1
        %s4431 = scalar_lea.sflag [#allocation7], %s4430
        %s4432 = sand.u32 %s181, 1
        %s4433 = smul.addr %s4432, 256
        %s4434 = scalar_lea.vmem [#allocation6], %s4433
        // Predicated region
        $region49: #{tpu_custom_call.1} parent=47 // pred_check
          %p4435 = pneg %p191
        $region50: #{tpu_custom_call.1} parent=47 // pred_check_branch
          %4437 = sbr.rel (%p4435) target = $region52
        $region51: #{tpu_custom_call.1} parent=47 // pred_region
          %s4439 = ssub.s32 4096, 4096
          %4440 = vsyncadd %s4431, %s4439
          %s4441 = smul.addr %s21, 32
          %s4442 = smul.addr %s4441, 128
          %s4443 = scalar_lea.hbm %s7, %s4442
          %s4444 = sshll.u32 %s4434, 4
          %s4445 = int_to_ptr.vmem [resolvable:$true] %s4444
          %4450 = dma.vmem_to_hbm [thread:$0]  %s4445, 4096, %s4443, %s4431, 128, 128, 8
        $region52: #{tpu_custom_call.1} parent=47 // pred_fallthru
          _
      $region48: #{tpu_custom_call.1} parent=5 // pred_fallthru
        _
      %p4451 = scmp.le.s32.totalorder 2, %s16
      // Predicated region
      $region53: #{tpu_custom_call.1} parent=5 // pred_check
        %p4452 = pneg %p4451
      $region54: #{tpu_custom_call.1} parent=5 // pred_check_branch
        %4454 = sbr.rel (%p4452) target = $region56
      $region55: #{tpu_custom_call.1} parent=5 // pred_region
        %s4455 = ssub.s32 %s16, 2
        // Predicated region
        $region57: #{tpu_custom_call.1} parent=55 // pred_check
          %p4456 = pneg %p197
        $region58: #{tpu_custom_call.1} parent=55 // pred_check_branch
          %4458 = sbr.rel (%p4456) target = $region60
        $region59: #{tpu_custom_call.1} parent=55 // pred_region
          %s4459 = sand.u32 %s182, 1
          %s4460 = scalar_lea.sflag [#allocation7], %s4459
          %s4461 = sand.u32 %s182, 1
          %s4462 = smul.addr %s4461, 256
          %s4463 = scalar_lea.vmem [#allocation6], %s4462
          %4464 = dma.done %s4460, 4096
        $region60: #{tpu_custom_call.1} parent=55 // pred_fallthru
          _
      $region56: #{tpu_custom_call.1} parent=5 // pred_fallthru
        _
    $region6: #{tpu_custom_call.1} parent=1 // loop_footer
      %s20 = sadd.s32 1, %s16
    $region7: #{tpu_custom_call.1} parent=1 // loop_footer_branch
      %15 = sbr.rel target = $region3
    $region8: #{tpu_custom_call.1} parent=1 // loop_exit
      _
    %4465 = vsyncpa [#allocation7], 1
    %s4466 = scalar_lea.sflag [#allocation7], 1
    %4467 = vsyncpa %s4466, 1

</llo_original>
